<compile_context>
chip_gen: v7x
topology: tpu7x:2x2x1
jax: 0.10.0
libtpu: 0.0.40
codegen_flags: <defaults>
</compile_context>

<pallas_src>
import jax
import jax.numpy as jnp
from jax.experimental import pallas as pl
from jax.experimental.pallas import tpu as pltpu

BERT_DIM = 768   # fixed by the module (bert_output_dim = 768)
LANE = 128       # TPU lane width


def _round_up(x, m):
    return (x + m - 1) // m * m


def _choose_tile_b(b_pad):
    """Batch tile: a multiple of 128, as large as practical (amortizes the
    ~0.35 us per-grid-step overhead), but keep the grid >= 2 steps when the
    padded batch allows it so both v7x TensorCores get work."""
    if b_pad <= 128:
        return 128
    for tile in (512, 384, 256, 128):
        if b_pad % tile == 0 and b_pad // tile >= 2:
            return tile
    return 128


# ---------------------------------------------------------------------------
# Fused Pallas kernel:
#   bert_out = tanh(pooled @ Wp + bp)                                [TB, 768]
#   h        = relu(bert_out @ W1m + stance * W1s + b1)              [TB, Hp]
#   out      = sigmoid(h @ W2 + b2)                                  [TB, Op]
# All matmuls: bf16 operands, f32 accumulation.  Epilogue stays in f32 except
# tanh (bf16: its output feeds a bf16 matmul immediately, so no precision is
# lost relative to f32-tanh-then-round).
# ---------------------------------------------------------------------------
def _fused_head_kernel(pooled_ref, stance_ref, pw_ref, pb_ref,
                       w1_ref, w1s_ref, b1_ref, w2_ref, b2_ref, out_ref):
    # pooler dense + tanh
    p = jnp.dot(pooled_ref[...], pw_ref[...],
                preferred_element_type=jnp.float32)            # [TB, 768] f32
    bert_out = jnp.tanh((p + pb_ref[...]).astype(jnp.bfloat16))  # bf16 EUP

    # linear1 on concat([bert_out, stance]) via main matmul + rank-1 stance
    h = jnp.dot(bert_out, w1_ref[...],
                preferred_element_type=jnp.float32)            # [TB, Hp] f32
    # stance_ref: [TB, 1] f32, w1s_ref: [1, Hp] f32 -> broadcast rank-1 update
    h = h + stance_ref[...] * w1s_ref[...] + b1_ref[...]
    h = jnp.maximum(h, 0.0)                                    # relu (f32)

    # linear2 + sigmoid
    z = jnp.dot(h.astype(jnp.bfloat16), w2_ref[...],
                preferred_element_type=jnp.float32)            # [TB, Op] f32
    out_ref[...] = jax.nn.sigmoid(z + b2_ref[...])


# ---------------------------------------------------------------------------
# One-time weight preparation (padding to 128-lane multiples + bf16 casting),
# hoisted out of the per-call path.
# ---------------------------------------------------------------------------
def prepare_head_params(head_params, bert_params):
    H = head_params["w1"].shape[1]
    O = head_params["w2"].shape[1]
    h_pad = max(LANE, _round_up(H, LANE))
    o_pad = max(LANE, _round_up(O, LANE))
    w1 = head_params["w1"]
    prepared = {
        "pooler_w": bert_params["pooler_w"].astype(jnp.bfloat16),       # [768, 768]
        "pooler_b": bert_params["pooler_b"].reshape(1, BERT_DIM)
                                            .astype(jnp.float32),        # [1, 768]
        "w1_main": jnp.pad(w1[:BERT_DIM],
                           ((0, 0), (0, h_pad - H))).astype(jnp.bfloat16),
        "w1_stance": jnp.pad(w1[BERT_DIM:BERT_DIM + 1],
                             ((0, 0), (0, h_pad - H))).astype(jnp.float32),
        "b1": jnp.pad(head_params["b1"].reshape(1, H),
                      ((0, 0), (0, h_pad - H))).astype(jnp.float32),
        "w2": jnp.pad(head_params["w2"],
                      ((0, h_pad - H), (0, o_pad - O))).astype(jnp.bfloat16),
        "b2": jnp.pad(head_params["b2"].reshape(1, O),
                      ((0, 0), (0, o_pad - O))).astype(jnp.float32),
        "H": H, "O": O, "h_pad": h_pad, "o_pad": o_pad,
    }
    return prepared


def value_classifier_head(pooled, stance, prepared):
    """Fused pooler + classifier head.

    pooled:   [B, 768] f32 (masked-mean token embeddings, pre-pooler)
    stance:   [B]      f32
    prepared: output of prepare_head_params (padded / bf16 weights)
    returns:  [B, O]   f32 probabilities
    """
    B = pooled.shape[0]
    H, O = prepared["H"], prepared["O"]
    h_pad, o_pad = prepared["h_pad"], prepared["o_pad"]

    b_pad = max(LANE, _round_up(B, LANE))
    tile_b = _choose_tile_b(b_pad)
    b_pad = _round_up(b_pad, tile_b)

    # --- per-call activation prep (zero padding keeps the sliced result exact)
    pooled_p = jnp.pad(pooled.astype(jnp.float32),
                       ((0, b_pad - B), (0, 0))).astype(jnp.bfloat16)
    stance_col = jnp.pad(stance.astype(jnp.float32).reshape(B, 1),
                         ((0, b_pad - B), (0, 0)))              # [b_pad, 1] f32

    grid = (b_pad // tile_b,)
    out = pl.pallas_call(
        _fused_head_kernel,
        out_shape=jax.ShapeDtypeStruct((b_pad, o_pad), jnp.float32),
        grid_spec=pltpu.PrefetchScalarGridSpec(
            num_scalar_prefetch=0,
            grid=grid,
            in_specs=[
                pl.BlockSpec((tile_b, BERT_DIM), lambda i: (i, 0)),   # pooled
                pl.BlockSpec((tile_b, 1), lambda i: (i, 0)),          # stance col
                pl.BlockSpec((BERT_DIM, BERT_DIM), lambda i: (0, 0)), # pooler_w
                pl.BlockSpec((1, BERT_DIM), lambda i: (0, 0)),        # pooler_b
                pl.BlockSpec((BERT_DIM, h_pad), lambda i: (0, 0)),    # W1 main
                pl.BlockSpec((1, h_pad), lambda i: (0, 0)),           # W1 stance
                pl.BlockSpec((1, h_pad), lambda i: (0, 0)),           # b1
                pl.BlockSpec((h_pad, o_pad), lambda i: (0, 0)),       # W2
                pl.BlockSpec((1, o_pad), lambda i: (0, 0)),           # b2
            ],
            out_specs=pl.BlockSpec((tile_b, o_pad), lambda i: (i, 0)),
        ),
        compiler_params=pltpu.CompilerParams(
            dimension_semantics=("parallel",),
            vmem_limit_bytes=32 * 1024 * 1024,
        ),
    )(pooled_p, stance_col,
      prepared["pooler_w"], prepared["pooler_b"],
      prepared["w1_main"], prepared["w1_stance"], prepared["b1"],
      prepared["w2"], prepared["b2"])

    return out[:B, :O]


# ---------------------------------------------------------------------------
# Deterministic synthetic stand-in for the BERT encoder body
# (embedding lookup + masked mean pool; plain-JAX glue, gather-heavy).
# The pooler dense + tanh that produces pooler_output is fused in the kernel.
# ---------------------------------------------------------------------------
def synthetic_bert_pooled_embeddings(premise, attention_mask, bert_params):
    emb = bert_params["embedding"][premise]                    # [B, S, 768]
    mask = attention_mask.astype(jnp.float32)[..., None]       # [B, S, 1]
    pooled = (emb * mask).sum(axis=1) / jnp.maximum(mask.sum(axis=1), 1.0)
    return pooled                                              # [B, 768] f32


def init_params(key, hidden_dim, output_dim, vocab_size):
    ks = jax.random.split(key, 6)
    scale1 = 1.0 / jnp.sqrt(BERT_DIM + 1.0)
    scale2 = 1.0 / jnp.sqrt(float(hidden_dim))
    head = {
        "w1": jax.random.uniform(ks[0], (BERT_DIM + 1, hidden_dim),
                                 jnp.float32, -scale1, scale1),
        "b1": jax.random.uniform(ks[1], (hidden_dim,), jnp.float32,
                                 -scale1, scale1),
        "w2": jax.random.uniform(ks[2], (hidden_dim, output_dim),
                                 jnp.float32, -scale2, scale2),
        "b2": jax.random.uniform(ks[3], (output_dim,), jnp.float32,
                                 -scale2, scale2),
    }
    bert = {
        "embedding": 0.02 * jax.random.normal(ks[4], (vocab_size, BERT_DIM),
                                              jnp.float32),
        "pooler_w": 0.02 * jax.random.normal(ks[5], (BERT_DIM, BERT_DIM),
                                             jnp.float32),
        "pooler_b": jnp.zeros((BERT_DIM,), jnp.float32),
    }
    return head, bert


def value_classifier_forward(premise, stance, attention_mask,
                             prepared_head, bert_params):
    pooled = synthetic_bert_pooled_embeddings(premise, attention_mask,
                                              bert_params)
    return value_classifier_head(pooled, stance, prepared_head)


if __name__ == "__main__":
    key = jax.random.PRNGKey(0)
    B, S = 8, 16             # batch, sequence length
    hidden_dim, output_dim = 32, 4
    vocab_size = 128

    k_param, k_tok, k_stance = jax.random.split(key, 3)
    head_params, bert_params = init_params(k_param, hidden_dim, output_dim,
                                           vocab_size)
    # Pad/cast weights ONCE (hoisted out of the per-call path).
    prepared_head = prepare_head_params(head_params, bert_params)

    premise = jax.random.randint(k_tok, (B, S), 0, vocab_size, jnp.int32)
    attention_mask = jnp.ones((B, S), jnp.int32)
    stance = jax.random.bernoulli(k_stance, 0.5, (B,)).astype(jnp.float32)

    probs = value_classifier_forward(premise, stance, attention_mask,
                                     prepared_head, bert_params)
    probs = jax.block_until_ready(probs)

    # Reference check in plain JAX (pure f32; kernel uses bf16 MXU operands,
    # f32 accumulation and a bf16 tanh, hence the modest tolerance).
    pooled = synthetic_bert_pooled_embeddings(premise, attention_mask,
                                              bert_params)
    bert_out = jnp.tanh(pooled @ bert_params["pooler_w"]
                        + bert_params["pooler_b"])
    combined = jnp.concatenate([bert_out, stance[:, None]], axis=1)
    h_ref = jnp.maximum(combined @ head_params["w1"] + head_params["b1"], 0.0)
    ref = jax.nn.sigmoid(h_ref @ head_params["w2"] + head_params["b2"])

    assert probs.shape == (B, output_dim)
    assert jnp.allclose(probs, ref, atol=1e-2), "mismatch vs reference"

    print("KERNEL_OK")
</pallas_src>

<mosaic_0001>
module attributes {stable_mosaic.version = 11 : i64} {
  func.func @_fused_head_kernel(%arg0: i32, %arg1: memref<128x768xbf16, #tpu.memory_space<vmem>>, %arg2: memref<128x1xf32, #tpu.memory_space<vmem>>, %arg3: memref<768x768xbf16, #tpu.memory_space<vmem>>, %arg4: memref<1x768xf32, #tpu.memory_space<vmem>>, %arg5: memref<768x128xbf16, #tpu.memory_space<vmem>>, %arg6: memref<1x128xf32, #tpu.memory_space<vmem>>, %arg7: memref<1x128xf32, #tpu.memory_space<vmem>>, %arg8: memref<128x128xbf16, #tpu.memory_space<vmem>>, %arg9: memref<1x128xf32, #tpu.memory_space<vmem>>, %arg10: memref<128x128xf32, #tpu.memory_space<vmem>>) attributes {dimension_semantics = [#tpu.dimension_semantics<parallel>], iteration_bounds = array<i64: 1>, scalar_prefetch = 0 : i64, scratch_operands = 0 : i64, tpu.core_type = #tpu.core_type<tc>, window_params = [{transform_indices = @transform_0, window_bounds = array<i64: 128, 768>}, {transform_indices = @transform_1, window_bounds = array<i64: 128, 1>}, {pipeline_mode = #tpu.pipeline_mode<synchronous>, transform_indices = @transform_2, window_bounds = array<i64: 768, 768>}, {pipeline_mode = #tpu.pipeline_mode<synchronous>, transform_indices = @transform_3, window_bounds = array<i64: 1, 768>}, {pipeline_mode = #tpu.pipeline_mode<synchronous>, transform_indices = @transform_4, window_bounds = array<i64: 768, 128>}, {pipeline_mode = #tpu.pipeline_mode<synchronous>, transform_indices = @transform_5, window_bounds = array<i64: 1, 128>}, {pipeline_mode = #tpu.pipeline_mode<synchronous>, transform_indices = @transform_6, window_bounds = array<i64: 1, 128>}, {pipeline_mode = #tpu.pipeline_mode<synchronous>, transform_indices = @transform_7, window_bounds = array<i64: 128, 128>}, {pipeline_mode = #tpu.pipeline_mode<synchronous>, transform_indices = @transform_8, window_bounds = array<i64: 1, 128>}, {transform_indices = @transform_9, window_bounds = array<i64: 128, 128>}]} {
    %c0 = arith.constant 0 : index
    %c0_0 = arith.constant 0 : index
    %0 = vector.load %arg1[%c0, %c0_0] : memref<128x768xbf16, #tpu.memory_space<vmem>>, vector<128x768xbf16>
    %c0_1 = arith.constant 0 : index
    %c0_2 = arith.constant 0 : index
    %1 = vector.load %arg3[%c0_1, %c0_2] : memref<768x768xbf16, #tpu.memory_space<vmem>>, vector<768x768xbf16>
    %cst = arith.constant dense<0.000000e+00> : vector<128x768xf32>
    %2 = tpu.matmul %0, %1, %cst {dimension_numbers = #tpu.dot_dimension_numbers<[1], [0], [0], [1], [0, 0, 1, 1], [], []>} : vector<128x768xbf16>, vector<768x768xbf16>, vector<128x768xf32> -> vector<128x768xf32>
    %c0_3 = arith.constant 0 : index
    %c0_4 = arith.constant 0 : index
    %3 = vector.load %arg4[%c0_3, %c0_4] : memref<1x768xf32, #tpu.memory_space<vmem>>, vector<1x768xf32>
    %4 = vector.broadcast %3 : vector<1x768xf32> to vector<128x768xf32>
    %5 = arith.addf %2, %4 : vector<128x768xf32>
    %6 = arith.truncf %5 : vector<128x768xf32> to vector<128x768xbf16>
    %7 = math.tanh %6 : vector<128x768xbf16>
    %c0_5 = arith.constant 0 : index
    %c0_6 = arith.constant 0 : index
    %8 = vector.load %arg5[%c0_5, %c0_6] : memref<768x128xbf16, #tpu.memory_space<vmem>>, vector<768x128xbf16>
    %cst_7 = arith.constant dense<0.000000e+00> : vector<128x128xf32>
    %9 = tpu.matmul %7, %8, %cst_7 {dimension_numbers = #tpu.dot_dimension_numbers<[1], [0], [0], [1], [0, 0, 1, 1], [], []>} : vector<128x768xbf16>, vector<768x128xbf16>, vector<128x128xf32> -> vector<128x128xf32>
    %c0_8 = arith.constant 0 : index
    %c0_9 = arith.constant 0 : index
    %10 = vector.load %arg2[%c0_8, %c0_9] : memref<128x1xf32, #tpu.memory_space<vmem>>, vector<128x1xf32>
    %c0_10 = arith.constant 0 : index
    %c0_11 = arith.constant 0 : index
    %11 = vector.load %arg6[%c0_10, %c0_11] : memref<1x128xf32, #tpu.memory_space<vmem>>, vector<1x128xf32>
    %12 = vector.broadcast %10 : vector<128x1xf32> to vector<128x128xf32>
    %13 = vector.broadcast %11 : vector<1x128xf32> to vector<128x128xf32>
    %14 = arith.mulf %12, %13 : vector<128x128xf32>
    %15 = arith.addf %9, %14 : vector<128x128xf32>
    %c0_12 = arith.constant 0 : index
    %c0_13 = arith.constant 0 : index
    %16 = vector.load %arg7[%c0_12, %c0_13] : memref<1x128xf32, #tpu.memory_space<vmem>>, vector<1x128xf32>
    %17 = vector.broadcast %16 : vector<1x128xf32> to vector<128x128xf32>
    %18 = arith.addf %15, %17 : vector<128x128xf32>
    %cst_14 = arith.constant 0.000000e+00 : f32
    %19 = vector.broadcast %cst_14 : f32 to vector<128x128xf32>
    %20 = arith.maximumf %18, %19 : vector<128x128xf32>
    %21 = arith.truncf %20 : vector<128x128xf32> to vector<128x128xbf16>
    %c0_15 = arith.constant 0 : index
    %c0_16 = arith.constant 0 : index
    %22 = vector.load %arg8[%c0_15, %c0_16] : memref<128x128xbf16, #tpu.memory_space<vmem>>, vector<128x128xbf16>
    %cst_17 = arith.constant dense<0.000000e+00> : vector<128x128xf32>
    %23 = tpu.matmul %21, %22, %cst_17 {dimension_numbers = #tpu.dot_dimension_numbers<[1], [0], [0], [1], [0, 0, 1, 1], [], []>} : vector<128x128xbf16>, vector<128x128xbf16>, vector<128x128xf32> -> vector<128x128xf32>
    %c0_18 = arith.constant 0 : index
    %c0_19 = arith.constant 0 : index
    %24 = vector.load %arg9[%c0_18, %c0_19] : memref<1x128xf32, #tpu.memory_space<vmem>>, vector<1x128xf32>
    %25 = vector.broadcast %24 : vector<1x128xf32> to vector<128x128xf32>
    %26 = arith.addf %23, %25 : vector<128x128xf32>
    %27 = arith.negf %26 : vector<128x128xf32>
    %28 = math.exp %27 : vector<128x128xf32>
    %cst_20 = arith.constant 1.000000e+00 : f32
    %29 = vector.broadcast %cst_20 : f32 to vector<128x128xf32>
    %30 = arith.addf %29, %28 : vector<128x128xf32>
    %31 = arith.divf %29, %30 : vector<128x128xf32>
    %c0_21 = arith.constant 0 : index
    %c0_22 = arith.constant 0 : index
    %32 = vector.load %arg10[%c0_21, %c0_22] : memref<128x128xf32, #tpu.memory_space<vmem>>, vector<128x128xf32>
    tpu.vector_store %arg10[%c0_21, %c0_22], %31 {strides = array<i32>} : memref<128x128xf32, #tpu.memory_space<vmem>>, vector<128x128xf32>,
    return
  }
  func.func @transform_0(%arg0: i32) -> (i32, i32) {
    %c0_i32 = arith.constant 0 : i32
    %c0_i32_0 = arith.constant 0 : i32
    return %arg0, %c0_i32 : i32, i32
  }
  func.func @transform_1(%arg0: i32) -> (i32, i32) {
    %c0_i32 = arith.constant 0 : i32
    %c0_i32_0 = arith.constant 0 : i32
    return %arg0, %c0_i32 : i32, i32
  }
  func.func @transform_2(%arg0: i32) -> (i32, i32) {
    %c0_i32 = arith.constant 0 : i32
    %c0_i32_0 = arith.constant 0 : i32
    %c0_i32_1 = arith.constant 0 : i32
    return %c0_i32, %c0_i32_0 : i32, i32
  }
  func.func @transform_3(%arg0: i32) -> (i32, i32) {
    %c0_i32 = arith.constant 0 : i32
    %c0_i32_0 = arith.constant 0 : i32
    %c0_i32_1 = arith.constant 0 : i32
    return %c0_i32, %c0_i32_0 : i32, i32
  }
  func.func @transform_4(%arg0: i32) -> (i32, i32) {
    %c0_i32 = arith.constant 0 : i32
    %c0_i32_0 = arith.constant 0 : i32
    %c0_i32_1 = arith.constant 0 : i32
    return %c0_i32, %c0_i32_0 : i32, i32
  }
  func.func @transform_5(%arg0: i32) -> (i32, i32) {
    %c0_i32 = arith.constant 0 : i32
    %c0_i32_0 = arith.constant 0 : i32
    %c0_i32_1 = arith.constant 0 : i32
    return %c0_i32, %c0_i32_0 : i32, i32
  }
  func.func @transform_6(%arg0: i32) -> (i32, i32) {
    %c0_i32 = arith.constant 0 : i32
    %c0_i32_0 = arith.constant 0 : i32
    %c0_i32_1 = arith.constant 0 : i32
    return %c0_i32, %c0_i32_0 : i32, i32
  }
  func.func @transform_7(%arg0: i32) -> (i32, i32) {
    %c0_i32 = arith.constant 0 : i32
    %c0_i32_0 = arith.constant 0 : i32
    %c0_i32_1 = arith.constant 0 : i32
    return %c0_i32, %c0_i32_0 : i32, i32
  }
  func.func @transform_8(%arg0: i32) -> (i32, i32) {
    %c0_i32 = arith.constant 0 : i32
    %c0_i32_0 = arith.constant 0 : i32
    %c0_i32_1 = arith.constant 0 : i32
    return %c0_i32, %c0_i32_0 : i32, i32
  }
  func.func @transform_9(%arg0: i32) -> (i32, i32) {
    %c0_i32 = arith.constant 0 : i32
    %c0_i32_0 = arith.constant 0 : i32
    return %arg0, %c0_i32 : i32, i32
  }
}

</mosaic_0001>

<llo_original>
// kernel: tpu_custom_call.1
$region0: #{tpu_custom_call.1}
  #allocation0 [shape = 'u32[]', space=smem, size = 0x4, offset = 0x4, fixed_abs, tag = 'smem constant byte address 0x4 - core index']
  #allocation1 [shape = 'u32[144,128]{1,0:T(1,128)}', space=vmem, size = 0x12000, scoped, tag = 'internal scratch']
  %s0 = inlined_call_operand.hbm [shape: bf16[128,768], index: 0, kind: input, shape index: {}]
  %s1 = inlined_call_operand.vmem [shape: f32[128,1], index: 1, kind: input, shape index: {}]
  %s2 = inlined_call_operand.hbm [shape: bf16[768,768], index: 2, kind: input, shape index: {}]
  %s3 = inlined_call_operand.hbm [shape: f32[1,768], index: 3, kind: input, shape index: {}]
  %s4 = inlined_call_operand.hbm [shape: bf16[768,128], index: 4, kind: input, shape index: {}]
  %s5 = inlined_call_operand.hbm [shape: f32[1,128], index: 5, kind: input, shape index: {}]
  %s6 = inlined_call_operand.hbm [shape: f32[1,128], index: 6, kind: input, shape index: {}]
  %s7 = inlined_call_operand.hbm [shape: bf16[128,128], index: 7, kind: input, shape index: {}]
  %s8 = inlined_call_operand.hbm [shape: f32[1,128], index: 8, kind: input, shape index: {}]
  %s9 = inlined_call_operand.hbm [shape: f32[128,128], index: 9, kind: output, shape index: {}]
  %s10 = sld [smem:[#allocation0]]
  $region78: #{tpu_custom_call.1} parent=0
    _
  %s12 = ssub.s32 1, %s10
  %s13 = scalar_select 0, %s12, %s10
  $region1: #{tpu_custom_call.1} parent=0
    #allocation2 [shape = 'u8[196608]{0}', space=vmem, size = 0x30000, scoped, tag = 'input window, operand 0, single buffered']
    #allocation3 [shape = 's32[1]{0}', space=sflag, size = 0x4, scoped, tag = 'scoped memory for tpu_custom_call.1']
    #allocation4 [shape = 's32[1]{0}', space=sflag, size = 0x4, scoped, tag = 'scoped memory for tpu_custom_call.1']
    #allocation5 [shape = 'u8[1179648]{0}', space=vmem, size = 0x120000, scoped, tag = 'input window, operand 2, single buffered']
    #allocation6 [shape = 's32[1]{0}', space=sflag, size = 0x4, scoped, tag = 'scoped memory for tpu_custom_call.1']
    #allocation7 [shape = 'u8[3072]{0}', space=vmem, size = 0xc00, scoped, tag = 'input window, operand 3, single buffered']
    #allocation8 [shape = 'u8[196608]{0}', space=vmem, size = 0x30000, scoped, tag = 'input window, operand 4, single buffered']
    #allocation9 [shape = 's32[1]{0}', space=sflag, size = 0x4, scoped, tag = 'scoped memory for tpu_custom_call.1']
    #allocation10 [shape = 'u8[512]{0}', space=vmem, size = 0x400, scoped, tag = 'input window, operand 5, single buffered']
    #allocation11 [shape = 'u8[512]{0}', space=vmem, size = 0x400, scoped, tag = 'input window, operand 6, single buffered']
    #allocation12 [shape = 's32[1]{0}', space=sflag, size = 0x4, scoped, tag = 'scoped memory for tpu_custom_call.1']
    #allocation13 [shape = 'u8[32768]{0}', space=vmem, size = 0x8000, scoped, tag = 'input window, operand 7, single buffered']
    #allocation14 [shape = 'u8[512]{0}', space=vmem, size = 0x400, scoped, tag = 'input window, operand 8, single buffered']
    #allocation15 [shape = 's32[1]{0}', space=sflag, size = 0x4, scoped, tag = 'scoped memory for tpu_custom_call.1']
    #allocation16 [shape = 'u8[65536]{0}', space=vmem, size = 0x10000, scoped, tag = 'output window, operand 0, single buffered']
    %14 = vsyncpa [#allocation3], 0
    %15 = vsyncpa [#allocation6], 0
    %16 = vsyncpa [#allocation9], 0
    %17 = vsyncpa [#allocation12], 0
    %18 = vsyncpa [#allocation15], 0
    %19 = vsyncpa [#allocation4], 0
    // Predicated region
    $region2: #{tpu_custom_call.1} parent=1 // pred_check
      _
    $region3: #{tpu_custom_call.1} parent=1 // pred_check_branch
      %21 = sbr.rel (0) target = $region5
    $region4: #{tpu_custom_call.1} parent=1 // pred_region
      %s23 = ssub.s32 6144, 6144
      %24 = vsyncadd [#allocation3], %s23
      %s25 = sshll.u32 [#allocation2], 4
      %s26 = int_to_ptr.vmem [resolvable:$true] %s25
      %31 = dma.hbm_to_vmem [thread:$0]  %s0, 6144, %s26, [#allocation3], 384, 384, 24
    $region5: #{tpu_custom_call.1} parent=1 // pred_fallthru
      _
    // Predicated region
    $region6: #{tpu_custom_call.1} parent=1 // pred_check
      _
    $region7: #{tpu_custom_call.1} parent=1 // pred_check_branch
      %33 = sbr.rel (0) target = $region9
    $region8: #{tpu_custom_call.1} parent=1 // pred_region
      _
    $region9: #{tpu_custom_call.1} parent=1 // pred_fallthru
      _
    // Predicated region
    $region10: #{tpu_custom_call.1} parent=1 // pred_check
      _
    $region11: #{tpu_custom_call.1} parent=1 // pred_check_branch
      %35 = sbr.rel (0) target = $region13
    $region12: #{tpu_custom_call.1} parent=1 // pred_region
      %s37 = ssub.s32 36864, 36864
      %38 = vsyncadd [#allocation6], %s37
      %s39 = sshll.u32 [#allocation5], 4
      %s40 = int_to_ptr.vmem [resolvable:$true] %s39
      %45 = dma.hbm_to_vmem [thread:$0]  %s2, 36864, %s40, [#allocation6], 384, 384, 24
    $region13: #{tpu_custom_call.1} parent=1 // pred_fallthru
      _
    // Predicated region
    $region14: #{tpu_custom_call.1} parent=1 // pred_check
      _
    $region15: #{tpu_custom_call.1} parent=1 // pred_check_branch
      %47 = sbr.rel (0) target = $region17
    $region16: #{tpu_custom_call.1} parent=1 // pred_region
      %s49 = ssub.s32 96, 96
      %50 = vsyncadd [#allocation6], %s49
      %s52 = sshll.u32 [#allocation7], 4
      %s53 = int_to_ptr.vmem [resolvable:$true] %s52
      %55 = dma.hbm_to_vmem [thread:$0]  %s3, 96, %s53, [#allocation6]
    $region17: #{tpu_custom_call.1} parent=1 // pred_fallthru
      _
    // Predicated region
    $region18: #{tpu_custom_call.1} parent=1 // pred_check
      _
    $region19: #{tpu_custom_call.1} parent=1 // pred_check_branch
      %57 = sbr.rel (0) target = $region21
    $region20: #{tpu_custom_call.1} parent=1 // pred_region
      %s59 = ssub.s32 6144, 6144
      %60 = vsyncadd [#allocation9], %s59
      %s61 = sshll.u32 [#allocation8], 4
      %s62 = int_to_ptr.vmem [resolvable:$true] %s61
      %67 = dma.hbm_to_vmem [thread:$0]  %s4, 6144, %s62, [#allocation9], 64, 64, 4
    $region21: #{tpu_custom_call.1} parent=1 // pred_fallthru
      _
    // Predicated region
    $region22: #{tpu_custom_call.1} parent=1 // pred_check
      _
    $region23: #{tpu_custom_call.1} parent=1 // pred_check_branch
      %69 = sbr.rel (0) target = $region25
    $region24: #{tpu_custom_call.1} parent=1 // pred_region
      %s71 = ssub.s32 16, 16
      %72 = vsyncadd [#allocation9], %s71
      %s74 = sshll.u32 [#allocation10], 4
      %s75 = int_to_ptr.vmem [resolvable:$true] %s74
      %77 = dma.hbm_to_vmem [thread:$0]  %s5, 16, %s75, [#allocation9]
    $region25: #{tpu_custom_call.1} parent=1 // pred_fallthru
      _
    // Predicated region
    $region26: #{tpu_custom_call.1} parent=1 // pred_check
      _
    $region27: #{tpu_custom_call.1} parent=1 // pred_check_branch
      %79 = sbr.rel (0) target = $region29
    $region28: #{tpu_custom_call.1} parent=1 // pred_region
      %s81 = ssub.s32 16, 16
      %82 = vsyncadd [#allocation12], %s81
      %s84 = sshll.u32 [#allocation11], 4
      %s85 = int_to_ptr.vmem [resolvable:$true] %s84
      %87 = dma.hbm_to_vmem [thread:$0]  %s6, 16, %s85, [#allocation12]
    $region29: #{tpu_custom_call.1} parent=1 // pred_fallthru
      _
    // Predicated region
    $region30: #{tpu_custom_call.1} parent=1 // pred_check
      _
    $region31: #{tpu_custom_call.1} parent=1 // pred_check_branch
      %89 = sbr.rel (0) target = $region33
    $region32: #{tpu_custom_call.1} parent=1 // pred_region
      %s91 = ssub.s32 1024, 1024
      %92 = vsyncadd [#allocation12], %s91
      %s93 = sshll.u32 [#allocation13], 4
      %s94 = int_to_ptr.vmem [resolvable:$true] %s93
      %99 = dma.hbm_to_vmem [thread:$0]  %s7, 1024, %s94, [#allocation12], 64, 64, 4
    $region33: #{tpu_custom_call.1} parent=1 // pred_fallthru
      _
    // Predicated region
    $region34: #{tpu_custom_call.1} parent=1 // pred_check
      _
    $region35: #{tpu_custom_call.1} parent=1 // pred_check_branch
      %101 = sbr.rel (0) target = $region37
    $region36: #{tpu_custom_call.1} parent=1 // pred_region
      %s103 = ssub.s32 16, 16
      %104 = vsyncadd [#allocation15], %s103
      %s106 = sshll.u32 [#allocation14], 4
      %s107 = int_to_ptr.vmem [resolvable:$true] %s106
      %109 = dma.hbm_to_vmem [thread:$0]  %s8, 16, %s107, [#allocation15]
    $region37: #{tpu_custom_call.1} parent=1 // pred_fallthru
      _
    // Predicated region
    $region38: #{tpu_custom_call.1} parent=1 // pred_check
      _
    $region39: #{tpu_custom_call.1} parent=1 // pred_check_branch
      %111 = sbr.rel (0) target = $region41
    $region40: #{tpu_custom_call.1} parent=1 // pred_region
      %112 = dma.done [#allocation3], 6144
    $region41: #{tpu_custom_call.1} parent=1 // pred_fallthru
      _
    // Predicated region
    $region42: #{tpu_custom_call.1} parent=1 // pred_check
      _
    $region43: #{tpu_custom_call.1} parent=1 // pred_check_branch
      %114 = sbr.rel (0) target = $region45
    $region44: #{tpu_custom_call.1} parent=1 // pred_region
      %115 = dma.done [#allocation6], 36864
    $region45: #{tpu_custom_call.1} parent=1 // pred_fallthru
      _
    // Predicated region
    $region46: #{tpu_custom_call.1} parent=1 // pred_check
      _
    $region47: #{tpu_custom_call.1} parent=1 // pred_check_branch
      %117 = sbr.rel (0) target = $region49
    $region48: #{tpu_custom_call.1} parent=1 // pred_region
      %118 = dma.done [#allocation6], 96
    $region49: #{tpu_custom_call.1} parent=1 // pred_fallthru
      _
    // Predicated region
    $region50: #{tpu_custom_call.1} parent=1 // pred_check
      _
    $region51: #{tpu_custom_call.1} parent=1 // pred_check_branch
      %120 = sbr.rel (0) target = $region53
    $region52: #{tpu_custom_call.1} parent=1 // pred_region
      %121 = dma.done [#allocation9], 6144
    $region53: #{tpu_custom_call.1} parent=1 // pred_fallthru
      _
    // Predicated region
    $region54: #{tpu_custom_call.1} parent=1 // pred_check
      _
    $region55: #{tpu_custom_call.1} parent=1 // pred_check_branch
      %123 = sbr.rel (0) target = $region57
    $region56: #{tpu_custom_call.1} parent=1 // pred_region
      %124 = dma.done [#allocation9], 16
    $region57: #{tpu_custom_call.1} parent=1 // pred_fallthru
      _
    // Predicated region
    $region58: #{tpu_custom_call.1} parent=1 // pred_check
      _
    $region59: #{tpu_custom_call.1} parent=1 // pred_check_branch
      %126 = sbr.rel (0) target = $region61
    $region60: #{tpu_custom_call.1} parent=1 // pred_region
      %127 = dma.done [#allocation12], 16
    $region61: #{tpu_custom_call.1} parent=1 // pred_fallthru
      _
    // Predicated region
    $region62: #{tpu_custom_call.1} parent=1 // pred_check
      _
    $region63: #{tpu_custom_call.1} parent=1 // pred_check_branch
      %129 = sbr.rel (0) target = $region65
    $region64: #{tpu_custom_call.1} parent=1 // pred_region
      %130 = dma.done [#allocation12], 1024
    $region65: #{tpu_custom_call.1} parent=1 // pred_fallthru
      _
    // Predicated region
    $region66: #{tpu_custom_call.1} parent=1 // pred_check
      _
    $region67: #{tpu_custom_call.1} parent=1 // pred_check_branch
      %132 = sbr.rel (0) target = $region69
    $region68: #{tpu_custom_call.1} parent=1 // pred_region
      %133 = dma.done [#allocation15], 16
    $region69: #{tpu_custom_call.1} parent=1 // pred_fallthru
      _
    %v135 = vld [vmem:[#allocation2] sm:$0xff]
    %v136 = vld [vmem:[#allocation2 + $0x8] sm:$0xff]
    %v137 = vld [vmem:[#allocation2 + $0x10] sm:$0xff]
    %v138 = vld [vmem:[#allocation2 + $0x18] sm:$0xff]
    %v139 = vld [vmem:[#allocation2 + $0x20] sm:$0xff]
    %v140 = vld [vmem:[#allocation2 + $0x28] sm:$0xff]
    %v141 = vld [vmem:[#allocation2 + $0x30] sm:$0xff]
    %v142 = vld [vmem:[#allocation2 + $0x38] sm:$0xff]
    %v143 = vld [vmem:[#allocation2 + $0x40] sm:$0xff]
    %v144 = vld [vmem:[#allocation2 + $0x48] sm:$0xff]
    %v145 = vld [vmem:[#allocation2 + $0x50] sm:$0xff]
    %v146 = vld [vmem:[#allocation2 + $0x58] sm:$0xff]
    %v147 = vld [vmem:[#allocation2 + $0x60] sm:$0xff]
    %v148 = vld [vmem:[#allocation2 + $0x68] sm:$0xff]
    %v149 = vld [vmem:[#allocation2 + $0x70] sm:$0xff]
    %v150 = vld [vmem:[#allocation2 + $0x78] sm:$0xff]
    %v151 = vld [vmem:[#allocation2 + $0x80] sm:$0xff]
    %v152 = vld [vmem:[#allocation2 + $0x88] sm:$0xff]
    %v153 = vld [vmem:[#allocation2 + $0x90] sm:$0xff]
    %v154 = vld [vmem:[#allocation2 + $0x98] sm:$0xff]
    %v155 = vld [vmem:[#allocation2 + $0xa0] sm:$0xff]
    %v156 = vld [vmem:[#allocation2 + $0xa8] sm:$0xff]
    %v157 = vld [vmem:[#allocation2 + $0xb0] sm:$0xff]
    %v158 = vld [vmem:[#allocation2 + $0xb8] sm:$0xff]
    %v159 = vld [vmem:[#allocation2 + $0xc0] sm:$0xff]
    %v160 = vld [vmem:[#allocation2 + $0xc8] sm:$0xff]
    %v161 = vld [vmem:[#allocation2 + $0xd0] sm:$0xff]
    %v162 = vld [vmem:[#allocation2 + $0xd8] sm:$0xff]
    %v163 = vld [vmem:[#allocation2 + $0xe0] sm:$0xff]
    %v164 = vld [vmem:[#allocation2 + $0xe8] sm:$0xff]
    %v165 = vld [vmem:[#allocation2 + $0xf0] sm:$0xff]
    %v166 = vld [vmem:[#allocation2 + $0xf8] sm:$0xff]
    %v167 = vld [vmem:[#allocation2 + $0x100] sm:$0xff]
    %v168 = vld [vmem:[#allocation2 + $0x108] sm:$0xff]
    %v169 = vld [vmem:[#allocation2 + $0x110] sm:$0xff]
    %v170 = vld [vmem:[#allocation2 + $0x118] sm:$0xff]
    %v171 = vld [vmem:[#allocation2 + $0x120] sm:$0xff]
    %v172 = vld [vmem:[#allocation2 + $0x128] sm:$0xff]
    %v173 = vld [vmem:[#allocation2 + $0x130] sm:$0xff]
    %v174 = vld [vmem:[#allocation2 + $0x138] sm:$0xff]
    %v175 = vld [vmem:[#allocation2 + $0x140] sm:$0xff]
    %v176 = vld [vmem:[#allocation2 + $0x148] sm:$0xff]
    %v177 = vld [vmem:[#allocation2 + $0x150] sm:$0xff]
    %v178 = vld [vmem:[#allocation2 + $0x158] sm:$0xff]
    %v179 = vld [vmem:[#allocation2 + $0x160] sm:$0xff]
    %v180 = vld [vmem:[#allocation2 + $0x168] sm:$0xff]
    %v181 = vld [vmem:[#allocation2 + $0x170] sm:$0xff]
    %v182 = vld [vmem:[#allocation2 + $0x178] sm:$0xff]
    %v183 = vld [vmem:[#allocation5] sm:$0xff]
    %v184 = vld [vmem:[#allocation5 + $0x8] sm:$0xff]
    %v185 = vld [vmem:[#allocation5 + $0x10] sm:$0xff]
    %v186 = vld [vmem:[#allocation5 + $0x18] sm:$0xff]
    %v187 = vld [vmem:[#allocation5 + $0x20] sm:$0xff]
    %v188 = vld [vmem:[#allocation5 + $0x28] sm:$0xff]
    %v189 = vld [vmem:[#allocation5 + $0x30] sm:$0xff]
    %v190 = vld [vmem:[#allocation5 + $0x38] sm:$0xff]
    %v191 = vld [vmem:[#allocation5 + $0x40] sm:$0xff]
    %v192 = vld [vmem:[#allocation5 + $0x48] sm:$0xff]
    %v193 = vld [vmem:[#allocation5 + $0x50] sm:$0xff]
    %v194 = vld [vmem:[#allocation5 + $0x58] sm:$0xff]
    %v195 = vld [vmem:[#allocation5 + $0x60] sm:$0xff]
    %v196 = vld [vmem:[#allocation5 + $0x68] sm:$0xff]
    %v197 = vld [vmem:[#allocation5 + $0x70] sm:$0xff]
    %v198 = vld [vmem:[#allocation5 + $0x78] sm:$0xff]
    %v199 = vld [vmem:[#allocation5 + $0x80] sm:$0xff]
    %v200 = vld [vmem:[#allocation5 + $0x88] sm:$0xff]
    %v201 = vld [vmem:[#allocation5 + $0x90] sm:$0xff]
    %v202 = vld [vmem:[#allocation5 + $0x98] sm:$0xff]
    %v203 = vld [vmem:[#allocation5 + $0xa0] sm:$0xff]
    %v204 = vld [vmem:[#allocation5 + $0xa8] sm:$0xff]
    %v205 = vld [vmem:[#allocation5 + $0xb0] sm:$0xff]
    %v206 = vld [vmem:[#allocation5 + $0xb8] sm:$0xff]
    %v207 = vld [vmem:[#allocation5 + $0xc0] sm:$0xff]
    %v208 = vld [vmem:[#allocation5 + $0xc8] sm:$0xff]
    %v209 = vld [vmem:[#allocation5 + $0xd0] sm:$0xff]
    %v210 = vld [vmem:[#allocation5 + $0xd8] sm:$0xff]
    %v211 = vld [vmem:[#allocation5 + $0xe0] sm:$0xff]
    %v212 = vld [vmem:[#allocation5 + $0xe8] sm:$0xff]
    %v213 = vld [vmem:[#allocation5 + $0xf0] sm:$0xff]
    %v214 = vld [vmem:[#allocation5 + $0xf8] sm:$0xff]
    %v215 = vld [vmem:[#allocation5 + $0x100] sm:$0xff]
    %v216 = vld [vmem:[#allocation5 + $0x108] sm:$0xff]
    %v217 = vld [vmem:[#allocation5 + $0x110] sm:$0xff]
    %v218 = vld [vmem:[#allocation5 + $0x118] sm:$0xff]
    %v219 = vld [vmem:[#allocation5 + $0x120] sm:$0xff]
    %v220 = vld [vmem:[#allocation5 + $0x128] sm:$0xff]
    %v221 = vld [vmem:[#allocation5 + $0x130] sm:$0xff]
    %v222 = vld [vmem:[#allocation5 + $0x138] sm:$0xff]
    %v223 = vld [vmem:[#allocation5 + $0x140] sm:$0xff]
    %v224 = vld [vmem:[#allocation5 + $0x148] sm:$0xff]
    %v225 = vld [vmem:[#allocation5 + $0x150] sm:$0xff]
    %v226 = vld [vmem:[#allocation5 + $0x158] sm:$0xff]
    %v227 = vld [vmem:[#allocation5 + $0x160] sm:$0xff]
    %v228 = vld [vmem:[#allocation5 + $0x168] sm:$0xff]
    %v229 = vld [vmem:[#allocation5 + $0x170] sm:$0xff]
    %v230 = vld [vmem:[#allocation5 + $0x178] sm:$0xff]
    %v231 = vld [vmem:[#allocation5 + $0x180] sm:$0xff]
    %v232 = vld [vmem:[#allocation5 + $0x188] sm:$0xff]
    %v233 = vld [vmem:[#allocation5 + $0x190] sm:$0xff]
    %v234 = vld [vmem:[#allocation5 + $0x198] sm:$0xff]
    %v235 = vld [vmem:[#allocation5 + $0x1a0] sm:$0xff]
    %v236 = vld [vmem:[#allocation5 + $0x1a8] sm:$0xff]
    %v237 = vld [vmem:[#allocation5 + $0x1b0] sm:$0xff]
    %v238 = vld [vmem:[#allocation5 + $0x1b8] sm:$0xff]
    %v239 = vld [vmem:[#allocation5 + $0x1c0] sm:$0xff]
    %v240 = vld [vmem:[#allocation5 + $0x1c8] sm:$0xff]
    %v241 = vld [vmem:[#allocation5 + $0x1d0] sm:$0xff]
    %v242 = vld [vmem:[#allocation5 + $0x1d8] sm:$0xff]
    %v243 = vld [vmem:[#allocation5 + $0x1e0] sm:$0xff]
    %v244 = vld [vmem:[#allocation5 + $0x1e8] sm:$0xff]
    %v245 = vld [vmem:[#allocation5 + $0x1f0] sm:$0xff]
    %v246 = vld [vmem:[#allocation5 + $0x1f8] sm:$0xff]
    %v247 = vld [vmem:[#allocation5 + $0x200] sm:$0xff]
    %v248 = vld [vmem:[#allocation5 + $0x208] sm:$0xff]
    %v249 = vld [vmem:[#allocation5 + $0x210] sm:$0xff]
    %v250 = vld [vmem:[#allocation5 + $0x218] sm:$0xff]
    %v251 = vld [vmem:[#allocation5 + $0x220] sm:$0xff]
    %v252 = vld [vmem:[#allocation5 + $0x228] sm:$0xff]
    %v253 = vld [vmem:[#allocation5 + $0x230] sm:$0xff]
    %v254 = vld [vmem:[#allocation5 + $0x238] sm:$0xff]
    %v255 = vld [vmem:[#allocation5 + $0x240] sm:$0xff]
    %v256 = vld [vmem:[#allocation5 + $0x248] sm:$0xff]
    %v257 = vld [vmem:[#allocation5 + $0x250] sm:$0xff]
    %v258 = vld [vmem:[#allocation5 + $0x258] sm:$0xff]
    %v259 = vld [vmem:[#allocation5 + $0x260] sm:$0xff]
    %v260 = vld [vmem:[#allocation5 + $0x268] sm:$0xff]
    %v261 = vld [vmem:[#allocation5 + $0x270] sm:$0xff]
    %v262 = vld [vmem:[#allocation5 + $0x278] sm:$0xff]
    %v263 = vld [vmem:[#allocation5 + $0x280] sm:$0xff]
    %v264 = vld [vmem:[#allocation5 + $0x288] sm:$0xff]
    %v265 = vld [vmem:[#allocation5 + $0x290] sm:$0xff]
    %v266 = vld [vmem:[#allocation5 + $0x298] sm:$0xff]
    %v267 = vld [vmem:[#allocation5 + $0x2a0] sm:$0xff]
    %v268 = vld [vmem:[#allocation5 + $0x2a8] sm:$0xff]
    %v269 = vld [vmem:[#allocation5 + $0x2b0] sm:$0xff]
    %v270 = vld [vmem:[#allocation5 + $0x2b8] sm:$0xff]
    %v271 = vld [vmem:[#allocation5 + $0x2c0] sm:$0xff]
    %v272 = vld [vmem:[#allocation5 + $0x2c8] sm:$0xff]
    %v273 = vld [vmem:[#allocation5 + $0x2d0] sm:$0xff]
    %v274 = vld [vmem:[#allocation5 + $0x2d8] sm:$0xff]
    %v275 = vld [vmem:[#allocation5 + $0x2e0] sm:$0xff]
    %v276 = vld [vmem:[#allocation5 + $0x2e8] sm:$0xff]
    %v277 = vld [vmem:[#allocation5 + $0x2f0] sm:$0xff]
    %v278 = vld [vmem:[#allocation5 + $0x2f8] sm:$0xff]
    %v279 = vld [vmem:[#allocation5 + $0x300] sm:$0xff]
    %v280 = vld [vmem:[#allocation5 + $0x308] sm:$0xff]
    %v281 = vld [vmem:[#allocation5 + $0x310] sm:$0xff]
    %v282 = vld [vmem:[#allocation5 + $0x318] sm:$0xff]
    %v283 = vld [vmem:[#allocation5 + $0x320] sm:$0xff]
    %v284 = vld [vmem:[#allocation5 + $0x328] sm:$0xff]
    %v285 = vld [vmem:[#allocation5 + $0x330] sm:$0xff]
    %v286 = vld [vmem:[#allocation5 + $0x338] sm:$0xff]
    %v287 = vld [vmem:[#allocation5 + $0x340] sm:$0xff]
    %v288 = vld [vmem:[#allocation5 + $0x348] sm:$0xff]
    %v289 = vld [vmem:[#allocation5 + $0x350] sm:$0xff]
    %v290 = vld [vmem:[#allocation5 + $0x358] sm:$0xff]
    %v291 = vld [vmem:[#allocation5 + $0x360] sm:$0xff]
    %v292 = vld [vmem:[#allocation5 + $0x368] sm:$0xff]
    %v293 = vld [vmem:[#allocation5 + $0x370] sm:$0xff]
    %v294 = vld [vmem:[#allocation5 + $0x378] sm:$0xff]
    %v295 = vld [vmem:[#allocation5 + $0x380] sm:$0xff]
    %v296 = vld [vmem:[#allocation5 + $0x388] sm:$0xff]
    %v297 = vld [vmem:[#allocation5 + $0x390] sm:$0xff]
    %v298 = vld [vmem:[#allocation5 + $0x398] sm:$0xff]
    %v299 = vld [vmem:[#allocation5 + $0x3a0] sm:$0xff]
    %v300 = vld [vmem:[#allocation5 + $0x3a8] sm:$0xff]
    %v301 = vld [vmem:[#allocation5 + $0x3b0] sm:$0xff]
    %v302 = vld [vmem:[#allocation5 + $0x3b8] sm:$0xff]
    %v303 = vld [vmem:[#allocation5 + $0x3c0] sm:$0xff]
    %v304 = vld [vmem:[#allocation5 + $0x3c8] sm:$0xff]
    %v305 = vld [vmem:[#allocation5 + $0x3d0] sm:$0xff]
    %v306 = vld [vmem:[#allocation5 + $0x3d8] sm:$0xff]
    %v307 = vld [vmem:[#allocation5 + $0x3e0] sm:$0xff]
    %v308 = vld [vmem:[#allocation5 + $0x3e8] sm:$0xff]
    %v309 = vld [vmem:[#allocation5 + $0x3f0] sm:$0xff]
    %v310 = vld [vmem:[#allocation5 + $0x3f8] sm:$0xff]
    %v311 = vld [vmem:[#allocation5 + $0x400] sm:$0xff]
    %v312 = vld [vmem:[#allocation5 + $0x408] sm:$0xff]
    %v313 = vld [vmem:[#allocation5 + $0x410] sm:$0xff]
    %v314 = vld [vmem:[#allocation5 + $0x418] sm:$0xff]
    %v315 = vld [vmem:[#allocation5 + $0x420] sm:$0xff]
    %v316 = vld [vmem:[#allocation5 + $0x428] sm:$0xff]
    %v317 = vld [vmem:[#allocation5 + $0x430] sm:$0xff]
    %v318 = vld [vmem:[#allocation5 + $0x438] sm:$0xff]
    %v319 = vld [vmem:[#allocation5 + $0x440] sm:$0xff]
    %v320 = vld [vmem:[#allocation5 + $0x448] sm:$0xff]
    %v321 = vld [vmem:[#allocation5 + $0x450] sm:$0xff]
    %v322 = vld [vmem:[#allocation5 + $0x458] sm:$0xff]
    %v323 = vld [vmem:[#allocation5 + $0x460] sm:$0xff]
    %v324 = vld [vmem:[#allocation5 + $0x468] sm:$0xff]
    %v325 = vld [vmem:[#allocation5 + $0x470] sm:$0xff]
    %v326 = vld [vmem:[#allocation5 + $0x478] sm:$0xff]
    %v327 = vld [vmem:[#allocation5 + $0x480] sm:$0xff]
    %v328 = vld [vmem:[#allocation5 + $0x488] sm:$0xff]
    %v329 = vld [vmem:[#allocation5 + $0x490] sm:$0xff]
    %v330 = vld [vmem:[#allocation5 + $0x498] sm:$0xff]
    %v331 = vld [vmem:[#allocation5 + $0x4a0] sm:$0xff]
    %v332 = vld [vmem:[#allocation5 + $0x4a8] sm:$0xff]
    %v333 = vld [vmem:[#allocation5 + $0x4b0] sm:$0xff]
    %v334 = vld [vmem:[#allocation5 + $0x4b8] sm:$0xff]
    %v335 = vld [vmem:[#allocation5 + $0x4c0] sm:$0xff]
    %v336 = vld [vmem:[#allocation5 + $0x4c8] sm:$0xff]
    %v337 = vld [vmem:[#allocation5 + $0x4d0] sm:$0xff]
    %v338 = vld [vmem:[#allocation5 + $0x4d8] sm:$0xff]
    %v339 = vld [vmem:[#allocation5 + $0x4e0] sm:$0xff]
    %v340 = vld [vmem:[#allocation5 + $0x4e8] sm:$0xff]
    %v341 = vld [vmem:[#allocation5 + $0x4f0] sm:$0xff]
    %v342 = vld [vmem:[#allocation5 + $0x4f8] sm:$0xff]
    %v343 = vld [vmem:[#allocation5 + $0x500] sm:$0xff]
    %v344 = vld [vmem:[#allocation5 + $0x508] sm:$0xff]
    %v345 = vld [vmem:[#allocation5 + $0x510] sm:$0xff]
    %v346 = vld [vmem:[#allocation5 + $0x518] sm:$0xff]
    %v347 = vld [vmem:[#allocation5 + $0x520] sm:$0xff]
    %v348 = vld [vmem:[#allocation5 + $0x528] sm:$0xff]
    %v349 = vld [vmem:[#allocation5 + $0x530] sm:$0xff]
    %v350 = vld [vmem:[#allocation5 + $0x538] sm:$0xff]
    %v351 = vld [vmem:[#allocation5 + $0x540] sm:$0xff]
    %v352 = vld [vmem:[#allocation5 + $0x548] sm:$0xff]
    %v353 = vld [vmem:[#allocation5 + $0x550] sm:$0xff]
    %v354 = vld [vmem:[#allocation5 + $0x558] sm:$0xff]
    %v355 = vld [vmem:[#allocation5 + $0x560] sm:$0xff]
    %v356 = vld [vmem:[#allocation5 + $0x568] sm:$0xff]
    %v357 = vld [vmem:[#allocation5 + $0x570] sm:$0xff]
    %v358 = vld [vmem:[#allocation5 + $0x578] sm:$0xff]
    %v359 = vld [vmem:[#allocation5 + $0x580] sm:$0xff]
    %v360 = vld [vmem:[#allocation5 + $0x588] sm:$0xff]
    %v361 = vld [vmem:[#allocation5 + $0x590] sm:$0xff]
    %v362 = vld [vmem:[#allocation5 + $0x598] sm:$0xff]
    %v363 = vld [vmem:[#allocation5 + $0x5a0] sm:$0xff]
    %v364 = vld [vmem:[#allocation5 + $0x5a8] sm:$0xff]
    %v365 = vld [vmem:[#allocation5 + $0x5b0] sm:$0xff]
    %v366 = vld [vmem:[#allocation5 + $0x5b8] sm:$0xff]
    %v367 = vld [vmem:[#allocation5 + $0x5c0] sm:$0xff]
    %v368 = vld [vmem:[#allocation5 + $0x5c8] sm:$0xff]
    %v369 = vld [vmem:[#allocation5 + $0x5d0] sm:$0xff]
    %v370 = vld [vmem:[#allocation5 + $0x5d8] sm:$0xff]
    %v371 = vld [vmem:[#allocation5 + $0x5e0] sm:$0xff]
    %v372 = vld [vmem:[#allocation5 + $0x5e8] sm:$0xff]
    %v373 = vld [vmem:[#allocation5 + $0x5f0] sm:$0xff]
    %v374 = vld [vmem:[#allocation5 + $0x5f8] sm:$0xff]
    %v375 = vld [vmem:[#allocation5 + $0x600] sm:$0xff]
    %v376 = vld [vmem:[#allocation5 + $0x608] sm:$0xff]
    %v377 = vld [vmem:[#allocation5 + $0x610] sm:$0xff]
    %v378 = vld [vmem:[#allocation5 + $0x618] sm:$0xff]
    %v379 = vld [vmem:[#allocation5 + $0x620] sm:$0xff]
    %v380 = vld [vmem:[#allocation5 + $0x628] sm:$0xff]
    %v381 = vld [vmem:[#allocation5 + $0x630] sm:$0xff]
    %v382 = vld [vmem:[#allocation5 + $0x638] sm:$0xff]
    %v383 = vld [vmem:[#allocation5 + $0x640] sm:$0xff]
    %v384 = vld [vmem:[#allocation5 + $0x648] sm:$0xff]
    %v385 = vld [vmem:[#allocation5 + $0x650] sm:$0xff]
    %v386 = vld [vmem:[#allocation5 + $0x658] sm:$0xff]
    %v387 = vld [vmem:[#allocation5 + $0x660] sm:$0xff]
    %v388 = vld [vmem:[#allocation5 + $0x668] sm:$0xff]
    %v389 = vld [vmem:[#allocation5 + $0x670] sm:$0xff]
    %v390 = vld [vmem:[#allocation5 + $0x678] sm:$0xff]
    %v391 = vld [vmem:[#allocation5 + $0x680] sm:$0xff]
    %v392 = vld [vmem:[#allocation5 + $0x688] sm:$0xff]
    %v393 = vld [vmem:[#allocation5 + $0x690] sm:$0xff]
    %v394 = vld [vmem:[#allocation5 + $0x698] sm:$0xff]
    %v395 = vld [vmem:[#allocation5 + $0x6a0] sm:$0xff]
    %v396 = vld [vmem:[#allocation5 + $0x6a8] sm:$0xff]
    %v397 = vld [vmem:[#allocation5 + $0x6b0] sm:$0xff]
    %v398 = vld [vmem:[#allocation5 + $0x6b8] sm:$0xff]
    %v399 = vld [vmem:[#allocation5 + $0x6c0] sm:$0xff]
    %v400 = vld [vmem:[#allocation5 + $0x6c8] sm:$0xff]
    %v401 = vld [vmem:[#allocation5 + $0x6d0] sm:$0xff]
    %v402 = vld [vmem:[#allocation5 + $0x6d8] sm:$0xff]
    %v403 = vld [vmem:[#allocation5 + $0x6e0] sm:$0xff]
    %v404 = vld [vmem:[#allocation5 + $0x6e8] sm:$0xff]
    %v405 = vld [vmem:[#allocation5 + $0x6f0] sm:$0xff]
    %v406 = vld [vmem:[#allocation5 + $0x6f8] sm:$0xff]
    %v407 = vld [vmem:[#allocation5 + $0x700] sm:$0xff]
    %v408 = vld [vmem:[#allocation5 + $0x708] sm:$0xff]
    %v409 = vld [vmem:[#allocation5 + $0x710] sm:$0xff]
    %v410 = vld [vmem:[#allocation5 + $0x718] sm:$0xff]
    %v411 = vld [vmem:[#allocation5 + $0x720] sm:$0xff]
    %v412 = vld [vmem:[#allocation5 + $0x728] sm:$0xff]
    %v413 = vld [vmem:[#allocation5 + $0x730] sm:$0xff]
    %v414 = vld [vmem:[#allocation5 + $0x738] sm:$0xff]
    %v415 = vld [vmem:[#allocation5 + $0x740] sm:$0xff]
    %v416 = vld [vmem:[#allocation5 + $0x748] sm:$0xff]
    %v417 = vld [vmem:[#allocation5 + $0x750] sm:$0xff]
    %v418 = vld [vmem:[#allocation5 + $0x758] sm:$0xff]
    %v419 = vld [vmem:[#allocation5 + $0x760] sm:$0xff]
    %v420 = vld [vmem:[#allocation5 + $0x768] sm:$0xff]
    %v421 = vld [vmem:[#allocation5 + $0x770] sm:$0xff]
    %v422 = vld [vmem:[#allocation5 + $0x778] sm:$0xff]
    %v423 = vld [vmem:[#allocation5 + $0x780] sm:$0xff]
    %v424 = vld [vmem:[#allocation5 + $0x788] sm:$0xff]
    %v425 = vld [vmem:[#allocation5 + $0x790] sm:$0xff]
    %v426 = vld [vmem:[#allocation5 + $0x798] sm:$0xff]
    %v427 = vld [vmem:[#allocation5 + $0x7a0] sm:$0xff]
    %v428 = vld [vmem:[#allocation5 + $0x7a8] sm:$0xff]
    %v429 = vld [vmem:[#allocation5 + $0x7b0] sm:$0xff]
    %v430 = vld [vmem:[#allocation5 + $0x7b8] sm:$0xff]
    %v431 = vld [vmem:[#allocation5 + $0x7c0] sm:$0xff]
    %v432 = vld [vmem:[#allocation5 + $0x7c8] sm:$0xff]
    %v433 = vld [vmem:[#allocation5 + $0x7d0] sm:$0xff]
    %v434 = vld [vmem:[#allocation5 + $0x7d8] sm:$0xff]
    %v435 = vld [vmem:[#allocation5 + $0x7e0] sm:$0xff]
    %v436 = vld [vmem:[#allocation5 + $0x7e8] sm:$0xff]
    %v437 = vld [vmem:[#allocation5 + $0x7f0] sm:$0xff]
    %v438 = vld [vmem:[#allocation5 + $0x7f8] sm:$0xff]
    %v439 = vld [vmem:[#allocation5 + $0x800] sm:$0xff]
    %v440 = vld [vmem:[#allocation5 + $0x808] sm:$0xff]
    %v441 = vld [vmem:[#allocation5 + $0x810] sm:$0xff]
    %v442 = vld [vmem:[#allocation5 + $0x818] sm:$0xff]
    %v443 = vld [vmem:[#allocation5 + $0x820] sm:$0xff]
    %v444 = vld [vmem:[#allocation5 + $0x828] sm:$0xff]
    %v445 = vld [vmem:[#allocation5 + $0x830] sm:$0xff]
    %v446 = vld [vmem:[#allocation5 + $0x838] sm:$0xff]
    %v447 = vld [vmem:[#allocation5 + $0x840] sm:$0xff]
    %v448 = vld [vmem:[#allocation5 + $0x848] sm:$0xff]
    %v449 = vld [vmem:[#allocation5 + $0x850] sm:$0xff]
    %v450 = vld [vmem:[#allocation5 + $0x858] sm:$0xff]
    %v451 = vld [vmem:[#allocation5 + $0x860] sm:$0xff]
    %v452 = vld [vmem:[#allocation5 + $0x868] sm:$0xff]
    %v453 = vld [vmem:[#allocation5 + $0x870] sm:$0xff]
    %v454 = vld [vmem:[#allocation5 + $0x878] sm:$0xff]
    %v455 = vld [vmem:[#allocation5 + $0x880] sm:$0xff]
    %v456 = vld [vmem:[#allocation5 + $0x888] sm:$0xff]
    %v457 = vld [vmem:[#allocation5 + $0x890] sm:$0xff]
    %v458 = vld [vmem:[#allocation5 + $0x898] sm:$0xff]
    %v459 = vld [vmem:[#allocation5 + $0x8a0] sm:$0xff]
    %v460 = vld [vmem:[#allocation5 + $0x8a8] sm:$0xff]
    %v461 = vld [vmem:[#allocation5 + $0x8b0] sm:$0xff]
    %v462 = vld [vmem:[#allocation5 + $0x8b8] sm:$0xff]
    %v463 = vld [vmem:[#allocation5 + $0x8c0] sm:$0xff]
    %v464 = vld [vmem:[#allocation5 + $0x8c8] sm:$0xff]
    %v465 = vld [vmem:[#allocation5 + $0x8d0] sm:$0xff]
    %v466 = vld [vmem:[#allocation5 + $0x8d8] sm:$0xff]
    %v467 = vld [vmem:[#allocation5 + $0x8e0] sm:$0xff]
    %v468 = vld [vmem:[#allocation5 + $0x8e8] sm:$0xff]
    %v469 = vld [vmem:[#allocation5 + $0x8f0] sm:$0xff]
    %v470 = vld [vmem:[#allocation5 + $0x8f8] sm:$0xff]
    %v471 = vld [vmem:[#allocation7] sm:$0x3f]
    %v473 = vlaneseq
    %v474 = vshrl.u32 %v473, 7
    %v475 = vsub.s32 0, %v474
    %v476 = vrot.slane %v471, %v475
    %v477 = vlaneseq
    %v478 = vshrl.u32 %v477, 7
    %v479 = vsub.s32 1, %v478
    %v480 = vrot.slane %v471, %v479
    %v481 = vlaneseq
    %v482 = vshrl.u32 %v481, 7
    %v483 = vsub.s32 2, %v482
    %v484 = vrot.slane %v471, %v483
    %v485 = vlaneseq
    %v486 = vshrl.u32 %v485, 7
    %v487 = vsub.s32 3, %v486
    %v488 = vrot.slane %v471, %v487
    %v489 = vlaneseq
    %v490 = vshrl.u32 %v489, 7
    %v491 = vsub.s32 4, %v490
    %v492 = vrot.slane %v471, %v491
    %v493 = vlaneseq
    %v494 = vshrl.u32 %v493, 7
    %v495 = vsub.s32 5, %v494
    %v496 = vrot.slane %v471, %v495
    %v551 = vunpack.c.l.b16 %v135
    %v552 = vunpack.c.h.b16 %v135
    %v553 = vunpack.c.l.b16 %v136
    %v554 = vunpack.c.h.b16 %v136
    %v555 = vunpack.c.l.b16 %v137
    %v556 = vunpack.c.h.b16 %v137
    %v557 = vunpack.c.l.b16 %v138
    %v558 = vunpack.c.h.b16 %v138
    %v559 = vunpack.c.l.b16 %v139
    %v560 = vunpack.c.h.b16 %v139
    %v561 = vunpack.c.l.b16 %v140
    %v562 = vunpack.c.h.b16 %v140
    %v563 = vunpack.c.l.b16 %v141
    %v564 = vunpack.c.h.b16 %v141
    %v565 = vunpack.c.l.b16 %v142
    %v566 = vunpack.c.h.b16 %v142
    %v567 = vunpack.c.l.b16 %v143
    %v568 = vunpack.c.h.b16 %v143
    %v569 = vunpack.c.l.b16 %v144
    %v570 = vunpack.c.h.b16 %v144
    %v571 = vunpack.c.l.b16 %v145
    %v572 = vunpack.c.h.b16 %v145
    %v573 = vunpack.c.l.b16 %v146
    %v574 = vunpack.c.h.b16 %v146
    %v575 = vunpack.c.l.b16 %v147
    %v576 = vunpack.c.h.b16 %v147
    %v577 = vunpack.c.l.b16 %v148
    %v578 = vunpack.c.h.b16 %v148
    %v579 = vunpack.c.l.b16 %v149
    %v580 = vunpack.c.h.b16 %v149
    %v581 = vunpack.c.l.b16 %v150
    %v582 = vunpack.c.h.b16 %v150
    %v583 = vunpack.c.l.b16 %v151
    %v584 = vunpack.c.h.b16 %v151
    %v585 = vunpack.c.l.b16 %v152
    %v586 = vunpack.c.h.b16 %v152
    %v587 = vunpack.c.l.b16 %v153
    %v588 = vunpack.c.h.b16 %v153
    %v589 = vunpack.c.l.b16 %v154
    %v590 = vunpack.c.h.b16 %v154
    %v591 = vunpack.c.l.b16 %v155
    %v592 = vunpack.c.h.b16 %v155
    %v593 = vunpack.c.l.b16 %v156
    %v594 = vunpack.c.h.b16 %v156
    %v595 = vunpack.c.l.b16 %v157
    %v596 = vunpack.c.h.b16 %v157
    %v597 = vunpack.c.l.b16 %v158
    %v598 = vunpack.c.h.b16 %v158
    %v599 = vunpack.c.l.b16 %v159
    %v600 = vunpack.c.h.b16 %v159
    %v601 = vunpack.c.l.b16 %v160
    %v602 = vunpack.c.h.b16 %v160
    %v603 = vunpack.c.l.b16 %v161
    %v604 = vunpack.c.h.b16 %v161
    %v605 = vunpack.c.l.b16 %v162
    %v606 = vunpack.c.h.b16 %v162
    %v607 = vunpack.c.l.b16 %v163
    %v608 = vunpack.c.h.b16 %v163
    %v609 = vunpack.c.l.b16 %v164
    %v610 = vunpack.c.h.b16 %v164
    %v611 = vunpack.c.l.b16 %v165
    %v612 = vunpack.c.h.b16 %v165
    %v613 = vunpack.c.l.b16 %v166
    %v614 = vunpack.c.h.b16 %v166
    %v615 = vunpack.c.l.b16 %v167
    %v616 = vunpack.c.h.b16 %v167
    %v617 = vunpack.c.l.b16 %v168
    %v618 = vunpack.c.h.b16 %v168
    %v619 = vunpack.c.l.b16 %v169
    %v620 = vunpack.c.h.b16 %v169
    %v621 = vunpack.c.l.b16 %v170
    %v622 = vunpack.c.h.b16 %v170
    %v623 = vunpack.c.l.b16 %v171
    %v624 = vunpack.c.h.b16 %v171
    %v625 = vunpack.c.l.b16 %v172
    %v626 = vunpack.c.h.b16 %v172
    %v627 = vunpack.c.l.b16 %v173
    %v628 = vunpack.c.h.b16 %v173
    %v629 = vunpack.c.l.b16 %v174
    %v630 = vunpack.c.h.b16 %v174
    %v631 = vunpack.c.l.b16 %v175
    %v632 = vunpack.c.h.b16 %v175
    %v633 = vunpack.c.l.b16 %v176
    %v634 = vunpack.c.h.b16 %v176
    %v635 = vunpack.c.l.b16 %v177
    %v636 = vunpack.c.h.b16 %v177
    %v637 = vunpack.c.l.b16 %v178
    %v638 = vunpack.c.h.b16 %v178
    %v639 = vunpack.c.l.b16 %v179
    %v640 = vunpack.c.h.b16 %v179
    %v641 = vunpack.c.l.b16 %v180
    %v642 = vunpack.c.h.b16 %v180
    %v643 = vunpack.c.l.b16 %v181
    %v644 = vunpack.c.h.b16 %v181
    %v645 = vunpack.c.l.b16 %v182
    %v646 = vunpack.c.h.b16 %v182
    %v647 = vpack.c.b16 %v557, %v551
    %v648 = vpack.c.b16 %v558, %v552
    %v649 = vpack.c.b16 %v559, %v553
    %v650 = vpack.c.b16 %v560, %v554
    %v651 = vpack.c.b16 %v561, %v555
    %v652 = vpack.c.b16 %v562, %v556
    %v653 = vpack.c.b16 %v569, %v563
    %v654 = vpack.c.b16 %v570, %v564
    %v655 = vpack.c.b16 %v571, %v565
    %v656 = vpack.c.b16 %v572, %v566
    %v657 = vpack.c.b16 %v573, %v567
    %v658 = vpack.c.b16 %v574, %v568
    %v659 = vpack.c.b16 %v581, %v575
    %v660 = vpack.c.b16 %v582, %v576
    %v661 = vpack.c.b16 %v583, %v577
    %v662 = vpack.c.b16 %v584, %v578
    %v663 = vpack.c.b16 %v585, %v579
    %v664 = vpack.c.b16 %v586, %v580
    %v665 = vpack.c.b16 %v593, %v587
    %v666 = vpack.c.b16 %v594, %v588
    %v667 = vpack.c.b16 %v595, %v589
    %v668 = vpack.c.b16 %v596, %v590
    %v669 = vpack.c.b16 %v597, %v591
    %v670 = vpack.c.b16 %v598, %v592
    %v671 = vpack.c.b16 %v605, %v599
    %v672 = vpack.c.b16 %v606, %v600
    %v673 = vpack.c.b16 %v607, %v601
    %v674 = vpack.c.b16 %v608, %v602
    %v675 = vpack.c.b16 %v609, %v603
    %v676 = vpack.c.b16 %v610, %v604
    %v677 = vpack.c.b16 %v617, %v611
    %v678 = vpack.c.b16 %v618, %v612
    %v679 = vpack.c.b16 %v619, %v613
    %v680 = vpack.c.b16 %v620, %v614
    %v681 = vpack.c.b16 %v621, %v615
    %v682 = vpack.c.b16 %v622, %v616
    %v683 = vpack.c.b16 %v629, %v623
    %v684 = vpack.c.b16 %v630, %v624
    %v685 = vpack.c.b16 %v631, %v625
    %v686 = vpack.c.b16 %v632, %v626
    %v687 = vpack.c.b16 %v633, %v627
    %v688 = vpack.c.b16 %v634, %v628
    %v689 = vpack.c.b16 %v641, %v635
    %v690 = vpack.c.b16 %v642, %v636
    %v691 = vpack.c.b16 %v643, %v637
    %v692 = vpack.c.b16 %v644, %v638
    %v693 = vpack.c.b16 %v645, %v639
    %v694 = vpack.c.b16 %v646, %v640
    %v1031 = vunpack.c.l.b16 %v183
    %v1032 = vunpack.c.h.b16 %v183
    %v1033 = vunpack.c.l.b16 %v184
    %v1034 = vunpack.c.h.b16 %v184
    %v1035 = vunpack.c.l.b16 %v185
    %v1036 = vunpack.c.h.b16 %v185
    %v1037 = vunpack.c.l.b16 %v186
    %v1038 = vunpack.c.h.b16 %v186
    %v1039 = vunpack.c.l.b16 %v187
    %v1040 = vunpack.c.h.b16 %v187
    %v1041 = vunpack.c.l.b16 %v188
    %v1042 = vunpack.c.h.b16 %v188
    %v1043 = vunpack.c.l.b16 %v189
    %v1044 = vunpack.c.h.b16 %v189
    %v1045 = vunpack.c.l.b16 %v190
    %v1046 = vunpack.c.h.b16 %v190
    %v1047 = vunpack.c.l.b16 %v191
    %v1048 = vunpack.c.h.b16 %v191
    %v1049 = vunpack.c.l.b16 %v192
    %v1050 = vunpack.c.h.b16 %v192
    %v1051 = vunpack.c.l.b16 %v193
    %v1052 = vunpack.c.h.b16 %v193
    %v1053 = vunpack.c.l.b16 %v194
    %v1054 = vunpack.c.h.b16 %v194
    %v1055 = vunpack.c.l.b16 %v195
    %v1056 = vunpack.c.h.b16 %v195
    %v1057 = vunpack.c.l.b16 %v196
    %v1058 = vunpack.c.h.b16 %v196
    %v1059 = vunpack.c.l.b16 %v197
    %v1060 = vunpack.c.h.b16 %v197
    %v1061 = vunpack.c.l.b16 %v198
    %v1062 = vunpack.c.h.b16 %v198
    %v1063 = vunpack.c.l.b16 %v199
    %v1064 = vunpack.c.h.b16 %v199
    %v1065 = vunpack.c.l.b16 %v200
    %v1066 = vunpack.c.h.b16 %v200
    %v1067 = vunpack.c.l.b16 %v201
    %v1068 = vunpack.c.h.b16 %v201
    %v1069 = vunpack.c.l.b16 %v202
    %v1070 = vunpack.c.h.b16 %v202
    %v1071 = vunpack.c.l.b16 %v203
    %v1072 = vunpack.c.h.b16 %v203
    %v1073 = vunpack.c.l.b16 %v204
    %v1074 = vunpack.c.h.b16 %v204
    %v1075 = vunpack.c.l.b16 %v205
    %v1076 = vunpack.c.h.b16 %v205
    %v1077 = vunpack.c.l.b16 %v206
    %v1078 = vunpack.c.h.b16 %v206
    %v1079 = vunpack.c.l.b16 %v207
    %v1080 = vunpack.c.h.b16 %v207
    %v1081 = vunpack.c.l.b16 %v208
    %v1082 = vunpack.c.h.b16 %v208
    %v1083 = vunpack.c.l.b16 %v209
    %v1084 = vunpack.c.h.b16 %v209
    %v1085 = vunpack.c.l.b16 %v210
    %v1086 = vunpack.c.h.b16 %v210
    %v1087 = vunpack.c.l.b16 %v211
    %v1088 = vunpack.c.h.b16 %v211
    %v1089 = vunpack.c.l.b16 %v212
    %v1090 = vunpack.c.h.b16 %v212
    %v1091 = vunpack.c.l.b16 %v213
    %v1092 = vunpack.c.h.b16 %v213
    %v1093 = vunpack.c.l.b16 %v214
    %v1094 = vunpack.c.h.b16 %v214
    %v1095 = vunpack.c.l.b16 %v215
    %v1096 = vunpack.c.h.b16 %v215
    %v1097 = vunpack.c.l.b16 %v216
    %v1098 = vunpack.c.h.b16 %v216
    %v1099 = vunpack.c.l.b16 %v217
    %v1100 = vunpack.c.h.b16 %v217
    %v1101 = vunpack.c.l.b16 %v218
    %v1102 = vunpack.c.h.b16 %v218
    %v1103 = vunpack.c.l.b16 %v219
    %v1104 = vunpack.c.h.b16 %v219
    %v1105 = vunpack.c.l.b16 %v220
    %v1106 = vunpack.c.h.b16 %v220
    %v1107 = vunpack.c.l.b16 %v221
    %v1108 = vunpack.c.h.b16 %v221
    %v1109 = vunpack.c.l.b16 %v222
    %v1110 = vunpack.c.h.b16 %v222
    %v1111 = vunpack.c.l.b16 %v223
    %v1112 = vunpack.c.h.b16 %v223
    %v1113 = vunpack.c.l.b16 %v224
    %v1114 = vunpack.c.h.b16 %v224
    %v1115 = vunpack.c.l.b16 %v225
    %v1116 = vunpack.c.h.b16 %v225
    %v1117 = vunpack.c.l.b16 %v226
    %v1118 = vunpack.c.h.b16 %v226
    %v1119 = vunpack.c.l.b16 %v227
    %v1120 = vunpack.c.h.b16 %v227
    %v1121 = vunpack.c.l.b16 %v228
    %v1122 = vunpack.c.h.b16 %v228
    %v1123 = vunpack.c.l.b16 %v229
    %v1124 = vunpack.c.h.b16 %v229
    %v1125 = vunpack.c.l.b16 %v230
    %v1126 = vunpack.c.h.b16 %v230
    %v1127 = vunpack.c.l.b16 %v231
    %v1128 = vunpack.c.h.b16 %v231
    %v1129 = vunpack.c.l.b16 %v232
    %v1130 = vunpack.c.h.b16 %v232
    %v1131 = vunpack.c.l.b16 %v233
    %v1132 = vunpack.c.h.b16 %v233
    %v1133 = vunpack.c.l.b16 %v234
    %v1134 = vunpack.c.h.b16 %v234
    %v1135 = vunpack.c.l.b16 %v235
    %v1136 = vunpack.c.h.b16 %v235
    %v1137 = vunpack.c.l.b16 %v236
    %v1138 = vunpack.c.h.b16 %v236
    %v1139 = vunpack.c.l.b16 %v237
    %v1140 = vunpack.c.h.b16 %v237
    %v1141 = vunpack.c.l.b16 %v238
    %v1142 = vunpack.c.h.b16 %v238
    %v1143 = vunpack.c.l.b16 %v239
    %v1144 = vunpack.c.h.b16 %v239
    %v1145 = vunpack.c.l.b16 %v240
    %v1146 = vunpack.c.h.b16 %v240
    %v1147 = vunpack.c.l.b16 %v241
    %v1148 = vunpack.c.h.b16 %v241
    %v1149 = vunpack.c.l.b16 %v242
    %v1150 = vunpack.c.h.b16 %v242
    %v1151 = vunpack.c.l.b16 %v243
    %v1152 = vunpack.c.h.b16 %v243
    %v1153 = vunpack.c.l.b16 %v244
    %v1154 = vunpack.c.h.b16 %v244
    %v1155 = vunpack.c.l.b16 %v245
    %v1156 = vunpack.c.h.b16 %v245
    %v1157 = vunpack.c.l.b16 %v246
    %v1158 = vunpack.c.h.b16 %v246
    %v1159 = vunpack.c.l.b16 %v247
    %v1160 = vunpack.c.h.b16 %v247
    %v1161 = vunpack.c.l.b16 %v248
    %v1162 = vunpack.c.h.b16 %v248
    %v1163 = vunpack.c.l.b16 %v249
    %v1164 = vunpack.c.h.b16 %v249
    %v1165 = vunpack.c.l.b16 %v250
    %v1166 = vunpack.c.h.b16 %v250
    %v1167 = vunpack.c.l.b16 %v251
    %v1168 = vunpack.c.h.b16 %v251
    %v1169 = vunpack.c.l.b16 %v252
    %v1170 = vunpack.c.h.b16 %v252
    %v1171 = vunpack.c.l.b16 %v253
    %v1172 = vunpack.c.h.b16 %v253
    %v1173 = vunpack.c.l.b16 %v254
    %v1174 = vunpack.c.h.b16 %v254
    %v1175 = vunpack.c.l.b16 %v255
    %v1176 = vunpack.c.h.b16 %v255
    %v1177 = vunpack.c.l.b16 %v256
    %v1178 = vunpack.c.h.b16 %v256
    %v1179 = vunpack.c.l.b16 %v257
    %v1180 = vunpack.c.h.b16 %v257
    %v1181 = vunpack.c.l.b16 %v258
    %v1182 = vunpack.c.h.b16 %v258
    %v1183 = vunpack.c.l.b16 %v259
    %v1184 = vunpack.c.h.b16 %v259
    %v1185 = vunpack.c.l.b16 %v260
    %v1186 = vunpack.c.h.b16 %v260
    %v1187 = vunpack.c.l.b16 %v261
    %v1188 = vunpack.c.h.b16 %v261
    %v1189 = vunpack.c.l.b16 %v262
    %v1190 = vunpack.c.h.b16 %v262
    %v1191 = vunpack.c.l.b16 %v263
    %v1192 = vunpack.c.h.b16 %v263
    %v1193 = vunpack.c.l.b16 %v264
    %v1194 = vunpack.c.h.b16 %v264
    %v1195 = vunpack.c.l.b16 %v265
    %v1196 = vunpack.c.h.b16 %v265
    %v1197 = vunpack.c.l.b16 %v266
    %v1198 = vunpack.c.h.b16 %v266
    %v1199 = vunpack.c.l.b16 %v267
    %v1200 = vunpack.c.h.b16 %v267
    %v1201 = vunpack.c.l.b16 %v268
    %v1202 = vunpack.c.h.b16 %v268
    %v1203 = vunpack.c.l.b16 %v269
    %v1204 = vunpack.c.h.b16 %v269
    %v1205 = vunpack.c.l.b16 %v270
    %v1206 = vunpack.c.h.b16 %v270
    %v1207 = vunpack.c.l.b16 %v271
    %v1208 = vunpack.c.h.b16 %v271
    %v1209 = vunpack.c.l.b16 %v272
    %v1210 = vunpack.c.h.b16 %v272
    %v1211 = vunpack.c.l.b16 %v273
    %v1212 = vunpack.c.h.b16 %v273
    %v1213 = vunpack.c.l.b16 %v274
    %v1214 = vunpack.c.h.b16 %v274
    %v1215 = vunpack.c.l.b16 %v275
    %v1216 = vunpack.c.h.b16 %v275
    %v1217 = vunpack.c.l.b16 %v276
    %v1218 = vunpack.c.h.b16 %v276
    %v1219 = vunpack.c.l.b16 %v277
    %v1220 = vunpack.c.h.b16 %v277
    %v1221 = vunpack.c.l.b16 %v278
    %v1222 = vunpack.c.h.b16 %v278
    %v1223 = vunpack.c.l.b16 %v279
    %v1224 = vunpack.c.h.b16 %v279
    %v1225 = vunpack.c.l.b16 %v280
    %v1226 = vunpack.c.h.b16 %v280
    %v1227 = vunpack.c.l.b16 %v281
    %v1228 = vunpack.c.h.b16 %v281
    %v1229 = vunpack.c.l.b16 %v282
    %v1230 = vunpack.c.h.b16 %v282
    %v1231 = vunpack.c.l.b16 %v283
    %v1232 = vunpack.c.h.b16 %v283
    %v1233 = vunpack.c.l.b16 %v284
    %v1234 = vunpack.c.h.b16 %v284
    %v1235 = vunpack.c.l.b16 %v285
    %v1236 = vunpack.c.h.b16 %v285
    %v1237 = vunpack.c.l.b16 %v286
    %v1238 = vunpack.c.h.b16 %v286
    %v1239 = vunpack.c.l.b16 %v287
    %v1240 = vunpack.c.h.b16 %v287
    %v1241 = vunpack.c.l.b16 %v288
    %v1242 = vunpack.c.h.b16 %v288
    %v1243 = vunpack.c.l.b16 %v289
    %v1244 = vunpack.c.h.b16 %v289
    %v1245 = vunpack.c.l.b16 %v290
    %v1246 = vunpack.c.h.b16 %v290
    %v1247 = vunpack.c.l.b16 %v291
    %v1248 = vunpack.c.h.b16 %v291
    %v1249 = vunpack.c.l.b16 %v292
    %v1250 = vunpack.c.h.b16 %v292
    %v1251 = vunpack.c.l.b16 %v293
    %v1252 = vunpack.c.h.b16 %v293
    %v1253 = vunpack.c.l.b16 %v294
    %v1254 = vunpack.c.h.b16 %v294
    %v1255 = vunpack.c.l.b16 %v295
    %v1256 = vunpack.c.h.b16 %v295
    %v1257 = vunpack.c.l.b16 %v296
    %v1258 = vunpack.c.h.b16 %v296
    %v1259 = vunpack.c.l.b16 %v297
    %v1260 = vunpack.c.h.b16 %v297
    %v1261 = vunpack.c.l.b16 %v298
    %v1262 = vunpack.c.h.b16 %v298
    %v1263 = vunpack.c.l.b16 %v299
    %v1264 = vunpack.c.h.b16 %v299
    %v1265 = vunpack.c.l.b16 %v300
    %v1266 = vunpack.c.h.b16 %v300
    %v1267 = vunpack.c.l.b16 %v301
    %v1268 = vunpack.c.h.b16 %v301
    %v1269 = vunpack.c.l.b16 %v302
    %v1270 = vunpack.c.h.b16 %v302
    %v1271 = vunpack.c.l.b16 %v303
    %v1272 = vunpack.c.h.b16 %v303
    %v1273 = vunpack.c.l.b16 %v304
    %v1274 = vunpack.c.h.b16 %v304
    %v1275 = vunpack.c.l.b16 %v305
    %v1276 = vunpack.c.h.b16 %v305
    %v1277 = vunpack.c.l.b16 %v306
    %v1278 = vunpack.c.h.b16 %v306
    %v1279 = vunpack.c.l.b16 %v307
    %v1280 = vunpack.c.h.b16 %v307
    %v1281 = vunpack.c.l.b16 %v308
    %v1282 = vunpack.c.h.b16 %v308
    %v1283 = vunpack.c.l.b16 %v309
    %v1284 = vunpack.c.h.b16 %v309
    %v1285 = vunpack.c.l.b16 %v310
    %v1286 = vunpack.c.h.b16 %v310
    %v1287 = vunpack.c.l.b16 %v311
    %v1288 = vunpack.c.h.b16 %v311
    %v1289 = vunpack.c.l.b16 %v312
    %v1290 = vunpack.c.h.b16 %v312
    %v1291 = vunpack.c.l.b16 %v313
    %v1292 = vunpack.c.h.b16 %v313
    %v1293 = vunpack.c.l.b16 %v314
    %v1294 = vunpack.c.h.b16 %v314
    %v1295 = vunpack.c.l.b16 %v315
    %v1296 = vunpack.c.h.b16 %v315
    %v1297 = vunpack.c.l.b16 %v316
    %v1298 = vunpack.c.h.b16 %v316
    %v1299 = vunpack.c.l.b16 %v317
    %v1300 = vunpack.c.h.b16 %v317
    %v1301 = vunpack.c.l.b16 %v318
    %v1302 = vunpack.c.h.b16 %v318
    %v1303 = vunpack.c.l.b16 %v319
    %v1304 = vunpack.c.h.b16 %v319
    %v1305 = vunpack.c.l.b16 %v320
    %v1306 = vunpack.c.h.b16 %v320
    %v1307 = vunpack.c.l.b16 %v321
    %v1308 = vunpack.c.h.b16 %v321
    %v1309 = vunpack.c.l.b16 %v322
    %v1310 = vunpack.c.h.b16 %v322
    %v1311 = vunpack.c.l.b16 %v323
    %v1312 = vunpack.c.h.b16 %v323
    %v1313 = vunpack.c.l.b16 %v324
    %v1314 = vunpack.c.h.b16 %v324
    %v1315 = vunpack.c.l.b16 %v325
    %v1316 = vunpack.c.h.b16 %v325
    %v1317 = vunpack.c.l.b16 %v326
    %v1318 = vunpack.c.h.b16 %v326
    %v1319 = vunpack.c.l.b16 %v327
    %v1320 = vunpack.c.h.b16 %v327
    %v1321 = vunpack.c.l.b16 %v328
    %v1322 = vunpack.c.h.b16 %v328
    %v1323 = vunpack.c.l.b16 %v329
    %v1324 = vunpack.c.h.b16 %v329
    %v1325 = vunpack.c.l.b16 %v330
    %v1326 = vunpack.c.h.b16 %v330
    %v1327 = vunpack.c.l.b16 %v331
    %v1328 = vunpack.c.h.b16 %v331
    %v1329 = vunpack.c.l.b16 %v332
    %v1330 = vunpack.c.h.b16 %v332
    %v1331 = vunpack.c.l.b16 %v333
    %v1332 = vunpack.c.h.b16 %v333
    %v1333 = vunpack.c.l.b16 %v334
    %v1334 = vunpack.c.h.b16 %v334
    %v1335 = vunpack.c.l.b16 %v335
    %v1336 = vunpack.c.h.b16 %v335
    %v1337 = vunpack.c.l.b16 %v336
    %v1338 = vunpack.c.h.b16 %v336
    %v1339 = vunpack.c.l.b16 %v337
    %v1340 = vunpack.c.h.b16 %v337
    %v1341 = vunpack.c.l.b16 %v338
    %v1342 = vunpack.c.h.b16 %v338
    %v1343 = vunpack.c.l.b16 %v339
    %v1344 = vunpack.c.h.b16 %v339
    %v1345 = vunpack.c.l.b16 %v340
    %v1346 = vunpack.c.h.b16 %v340
    %v1347 = vunpack.c.l.b16 %v341
    %v1348 = vunpack.c.h.b16 %v341
    %v1349 = vunpack.c.l.b16 %v342
    %v1350 = vunpack.c.h.b16 %v342
    %v1351 = vunpack.c.l.b16 %v343
    %v1352 = vunpack.c.h.b16 %v343
    %v1353 = vunpack.c.l.b16 %v344
    %v1354 = vunpack.c.h.b16 %v344
    %v1355 = vunpack.c.l.b16 %v345
    %v1356 = vunpack.c.h.b16 %v345
    %v1357 = vunpack.c.l.b16 %v346
    %v1358 = vunpack.c.h.b16 %v346
    %v1359 = vunpack.c.l.b16 %v347
    %v1360 = vunpack.c.h.b16 %v347
    %v1361 = vunpack.c.l.b16 %v348
    %v1362 = vunpack.c.h.b16 %v348
    %v1363 = vunpack.c.l.b16 %v349
    %v1364 = vunpack.c.h.b16 %v349
    %v1365 = vunpack.c.l.b16 %v350
    %v1366 = vunpack.c.h.b16 %v350
    %v1367 = vunpack.c.l.b16 %v351
    %v1368 = vunpack.c.h.b16 %v351
    %v1369 = vunpack.c.l.b16 %v352
    %v1370 = vunpack.c.h.b16 %v352
    %v1371 = vunpack.c.l.b16 %v353
    %v1372 = vunpack.c.h.b16 %v353
    %v1373 = vunpack.c.l.b16 %v354
    %v1374 = vunpack.c.h.b16 %v354
    %v1375 = vunpack.c.l.b16 %v355
    %v1376 = vunpack.c.h.b16 %v355
    %v1377 = vunpack.c.l.b16 %v356
    %v1378 = vunpack.c.h.b16 %v356
    %v1379 = vunpack.c.l.b16 %v357
    %v1380 = vunpack.c.h.b16 %v357
    %v1381 = vunpack.c.l.b16 %v358
    %v1382 = vunpack.c.h.b16 %v358
    %v1383 = vunpack.c.l.b16 %v359
    %v1384 = vunpack.c.h.b16 %v359
    %v1385 = vunpack.c.l.b16 %v360
    %v1386 = vunpack.c.h.b16 %v360
    %v1387 = vunpack.c.l.b16 %v361
    %v1388 = vunpack.c.h.b16 %v361
    %v1389 = vunpack.c.l.b16 %v362
    %v1390 = vunpack.c.h.b16 %v362
    %v1391 = vunpack.c.l.b16 %v363
    %v1392 = vunpack.c.h.b16 %v363
    %v1393 = vunpack.c.l.b16 %v364
    %v1394 = vunpack.c.h.b16 %v364
    %v1395 = vunpack.c.l.b16 %v365
    %v1396 = vunpack.c.h.b16 %v365
    %v1397 = vunpack.c.l.b16 %v366
    %v1398 = vunpack.c.h.b16 %v366
    %v1399 = vunpack.c.l.b16 %v367
    %v1400 = vunpack.c.h.b16 %v367
    %v1401 = vunpack.c.l.b16 %v368
    %v1402 = vunpack.c.h.b16 %v368
    %v1403 = vunpack.c.l.b16 %v369
    %v1404 = vunpack.c.h.b16 %v369
    %v1405 = vunpack.c.l.b16 %v370
    %v1406 = vunpack.c.h.b16 %v370
    %v1407 = vunpack.c.l.b16 %v371
    %v1408 = vunpack.c.h.b16 %v371
    %v1409 = vunpack.c.l.b16 %v372
    %v1410 = vunpack.c.h.b16 %v372
    %v1411 = vunpack.c.l.b16 %v373
    %v1412 = vunpack.c.h.b16 %v373
    %v1413 = vunpack.c.l.b16 %v374
    %v1414 = vunpack.c.h.b16 %v374
    %v1415 = vunpack.c.l.b16 %v375
    %v1416 = vunpack.c.h.b16 %v375
    %v1417 = vunpack.c.l.b16 %v376
    %v1418 = vunpack.c.h.b16 %v376
    %v1419 = vunpack.c.l.b16 %v377
    %v1420 = vunpack.c.h.b16 %v377
    %v1421 = vunpack.c.l.b16 %v378
    %v1422 = vunpack.c.h.b16 %v378
    %v1423 = vunpack.c.l.b16 %v379
    %v1424 = vunpack.c.h.b16 %v379
    %v1425 = vunpack.c.l.b16 %v380
    %v1426 = vunpack.c.h.b16 %v380
    %v1427 = vunpack.c.l.b16 %v381
    %v1428 = vunpack.c.h.b16 %v381
    %v1429 = vunpack.c.l.b16 %v382
    %v1430 = vunpack.c.h.b16 %v382
    %v1431 = vunpack.c.l.b16 %v383
    %v1432 = vunpack.c.h.b16 %v383
    %v1433 = vunpack.c.l.b16 %v384
    %v1434 = vunpack.c.h.b16 %v384
    %v1435 = vunpack.c.l.b16 %v385
    %v1436 = vunpack.c.h.b16 %v385
    %v1437 = vunpack.c.l.b16 %v386
    %v1438 = vunpack.c.h.b16 %v386
    %v1439 = vunpack.c.l.b16 %v387
    %v1440 = vunpack.c.h.b16 %v387
    %v1441 = vunpack.c.l.b16 %v388
    %v1442 = vunpack.c.h.b16 %v388
    %v1443 = vunpack.c.l.b16 %v389
    %v1444 = vunpack.c.h.b16 %v389
    %v1445 = vunpack.c.l.b16 %v390
    %v1446 = vunpack.c.h.b16 %v390
    %v1447 = vunpack.c.l.b16 %v391
    %v1448 = vunpack.c.h.b16 %v391
    %v1449 = vunpack.c.l.b16 %v392
    %v1450 = vunpack.c.h.b16 %v392
    %v1451 = vunpack.c.l.b16 %v393
    %v1452 = vunpack.c.h.b16 %v393
    %v1453 = vunpack.c.l.b16 %v394
    %v1454 = vunpack.c.h.b16 %v394
    %v1455 = vunpack.c.l.b16 %v395
    %v1456 = vunpack.c.h.b16 %v395
    %v1457 = vunpack.c.l.b16 %v396
    %v1458 = vunpack.c.h.b16 %v396
    %v1459 = vunpack.c.l.b16 %v397
    %v1460 = vunpack.c.h.b16 %v397
    %v1461 = vunpack.c.l.b16 %v398
    %v1462 = vunpack.c.h.b16 %v398
    %v1463 = vunpack.c.l.b16 %v399
    %v1464 = vunpack.c.h.b16 %v399
    %v1465 = vunpack.c.l.b16 %v400
    %v1466 = vunpack.c.h.b16 %v400
    %v1467 = vunpack.c.l.b16 %v401
    %v1468 = vunpack.c.h.b16 %v401
    %v1469 = vunpack.c.l.b16 %v402
    %v1470 = vunpack.c.h.b16 %v402
    %v1471 = vunpack.c.l.b16 %v403
    %v1472 = vunpack.c.h.b16 %v403
    %v1473 = vunpack.c.l.b16 %v404
    %v1474 = vunpack.c.h.b16 %v404
    %v1475 = vunpack.c.l.b16 %v405
    %v1476 = vunpack.c.h.b16 %v405
    %v1477 = vunpack.c.l.b16 %v406
    %v1478 = vunpack.c.h.b16 %v406
    %v1479 = vunpack.c.l.b16 %v407
    %v1480 = vunpack.c.h.b16 %v407
    %v1481 = vunpack.c.l.b16 %v408
    %v1482 = vunpack.c.h.b16 %v408
    %v1483 = vunpack.c.l.b16 %v409
    %v1484 = vunpack.c.h.b16 %v409
    %v1485 = vunpack.c.l.b16 %v410
    %v1486 = vunpack.c.h.b16 %v410
    %v1487 = vunpack.c.l.b16 %v411
    %v1488 = vunpack.c.h.b16 %v411
    %v1489 = vunpack.c.l.b16 %v412
    %v1490 = vunpack.c.h.b16 %v412
    %v1491 = vunpack.c.l.b16 %v413
    %v1492 = vunpack.c.h.b16 %v413
    %v1493 = vunpack.c.l.b16 %v414
    %v1494 = vunpack.c.h.b16 %v414
    %v1495 = vunpack.c.l.b16 %v415
    %v1496 = vunpack.c.h.b16 %v415
    %v1497 = vunpack.c.l.b16 %v416
    %v1498 = vunpack.c.h.b16 %v416
    %v1499 = vunpack.c.l.b16 %v417
    %v1500 = vunpack.c.h.b16 %v417
    %v1501 = vunpack.c.l.b16 %v418
    %v1502 = vunpack.c.h.b16 %v418
    %v1503 = vunpack.c.l.b16 %v419
    %v1504 = vunpack.c.h.b16 %v419
    %v1505 = vunpack.c.l.b16 %v420
    %v1506 = vunpack.c.h.b16 %v420
    %v1507 = vunpack.c.l.b16 %v421
    %v1508 = vunpack.c.h.b16 %v421
    %v1509 = vunpack.c.l.b16 %v422
    %v1510 = vunpack.c.h.b16 %v422
    %v1511 = vunpack.c.l.b16 %v423
    %v1512 = vunpack.c.h.b16 %v423
    %v1513 = vunpack.c.l.b16 %v424
    %v1514 = vunpack.c.h.b16 %v424
    %v1515 = vunpack.c.l.b16 %v425
    %v1516 = vunpack.c.h.b16 %v425
    %v1517 = vunpack.c.l.b16 %v426
    %v1518 = vunpack.c.h.b16 %v426
    %v1519 = vunpack.c.l.b16 %v427
    %v1520 = vunpack.c.h.b16 %v427
    %v1521 = vunpack.c.l.b16 %v428
    %v1522 = vunpack.c.h.b16 %v428
    %v1523 = vunpack.c.l.b16 %v429
    %v1524 = vunpack.c.h.b16 %v429
    %v1525 = vunpack.c.l.b16 %v430
    %v1526 = vunpack.c.h.b16 %v430
    %v1527 = vunpack.c.l.b16 %v431
    %v1528 = vunpack.c.h.b16 %v431
    %v1529 = vunpack.c.l.b16 %v432
    %v1530 = vunpack.c.h.b16 %v432
    %v1531 = vunpack.c.l.b16 %v433
    %v1532 = vunpack.c.h.b16 %v433
    %v1533 = vunpack.c.l.b16 %v434
    %v1534 = vunpack.c.h.b16 %v434
    %v1535 = vunpack.c.l.b16 %v435
    %v1536 = vunpack.c.h.b16 %v435
    %v1537 = vunpack.c.l.b16 %v436
    %v1538 = vunpack.c.h.b16 %v436
    %v1539 = vunpack.c.l.b16 %v437
    %v1540 = vunpack.c.h.b16 %v437
    %v1541 = vunpack.c.l.b16 %v438
    %v1542 = vunpack.c.h.b16 %v438
    %v1543 = vunpack.c.l.b16 %v439
    %v1544 = vunpack.c.h.b16 %v439
    %v1545 = vunpack.c.l.b16 %v440
    %v1546 = vunpack.c.h.b16 %v440
    %v1547 = vunpack.c.l.b16 %v441
    %v1548 = vunpack.c.h.b16 %v441
    %v1549 = vunpack.c.l.b16 %v442
    %v1550 = vunpack.c.h.b16 %v442
    %v1551 = vunpack.c.l.b16 %v443
    %v1552 = vunpack.c.h.b16 %v443
    %v1553 = vunpack.c.l.b16 %v444
    %v1554 = vunpack.c.h.b16 %v444
    %v1555 = vunpack.c.l.b16 %v445
    %v1556 = vunpack.c.h.b16 %v445
    %v1557 = vunpack.c.l.b16 %v446
    %v1558 = vunpack.c.h.b16 %v446
    %v1559 = vunpack.c.l.b16 %v447
    %v1560 = vunpack.c.h.b16 %v447
    %v1561 = vunpack.c.l.b16 %v448
    %v1562 = vunpack.c.h.b16 %v448
    %v1563 = vunpack.c.l.b16 %v449
    %v1564 = vunpack.c.h.b16 %v449
    %v1565 = vunpack.c.l.b16 %v450
    %v1566 = vunpack.c.h.b16 %v450
    %v1567 = vunpack.c.l.b16 %v451
    %v1568 = vunpack.c.h.b16 %v451
    %v1569 = vunpack.c.l.b16 %v452
    %v1570 = vunpack.c.h.b16 %v452
    %v1571 = vunpack.c.l.b16 %v453
    %v1572 = vunpack.c.h.b16 %v453
    %v1573 = vunpack.c.l.b16 %v454
    %v1574 = vunpack.c.h.b16 %v454
    %v1575 = vunpack.c.l.b16 %v455
    %v1576 = vunpack.c.h.b16 %v455
    %v1577 = vunpack.c.l.b16 %v456
    %v1578 = vunpack.c.h.b16 %v456
    %v1579 = vunpack.c.l.b16 %v457
    %v1580 = vunpack.c.h.b16 %v457
    %v1581 = vunpack.c.l.b16 %v458
    %v1582 = vunpack.c.h.b16 %v458
    %v1583 = vunpack.c.l.b16 %v459
    %v1584 = vunpack.c.h.b16 %v459
    %v1585 = vunpack.c.l.b16 %v460
    %v1586 = vunpack.c.h.b16 %v460
    %v1587 = vunpack.c.l.b16 %v461
    %v1588 = vunpack.c.h.b16 %v461
    %v1589 = vunpack.c.l.b16 %v462
    %v1590 = vunpack.c.h.b16 %v462
    %v1591 = vunpack.c.l.b16 %v463
    %v1592 = vunpack.c.h.b16 %v463
    %v1593 = vunpack.c.l.b16 %v464
    %v1594 = vunpack.c.h.b16 %v464
    %v1595 = vunpack.c.l.b16 %v465
    %v1596 = vunpack.c.h.b16 %v465
    %v1597 = vunpack.c.l.b16 %v466
    %v1598 = vunpack.c.h.b16 %v466
    %v1599 = vunpack.c.l.b16 %v467
    %v1600 = vunpack.c.h.b16 %v467
    %v1601 = vunpack.c.l.b16 %v468
    %v1602 = vunpack.c.h.b16 %v468
    %v1603 = vunpack.c.l.b16 %v469
    %v1604 = vunpack.c.h.b16 %v469
    %v1605 = vunpack.c.l.b16 %v470
    %v1606 = vunpack.c.h.b16 %v470
    %v1607 = vpack.c.b16 %v1037, %v1031
    %v1608 = vpack.c.b16 %v1038, %v1032
    %v1609 = vpack.c.b16 %v1039, %v1033
    %v1610 = vpack.c.b16 %v1040, %v1034
    %v1611 = vpack.c.b16 %v1041, %v1035
    %v1612 = vpack.c.b16 %v1042, %v1036
    %v1613 = vpack.c.b16 %v1049, %v1043
    %v1614 = vpack.c.b16 %v1050, %v1044
    %v1615 = vpack.c.b16 %v1051, %v1045
    %v1616 = vpack.c.b16 %v1052, %v1046
    %v1617 = vpack.c.b16 %v1053, %v1047
    %v1618 = vpack.c.b16 %v1054, %v1048
    %v1619 = vpack.c.b16 %v1061, %v1055
    %v1620 = vpack.c.b16 %v1062, %v1056
    %v1621 = vpack.c.b16 %v1063, %v1057
    %v1622 = vpack.c.b16 %v1064, %v1058
    %v1623 = vpack.c.b16 %v1065, %v1059
    %v1624 = vpack.c.b16 %v1066, %v1060
    %v1625 = vpack.c.b16 %v1073, %v1067
    %v1626 = vpack.c.b16 %v1074, %v1068
    %v1627 = vpack.c.b16 %v1075, %v1069
    %v1628 = vpack.c.b16 %v1076, %v1070
    %v1629 = vpack.c.b16 %v1077, %v1071
    %v1630 = vpack.c.b16 %v1078, %v1072
    %v1631 = vpack.c.b16 %v1085, %v1079
    %v1632 = vpack.c.b16 %v1086, %v1080
    %v1633 = vpack.c.b16 %v1087, %v1081
    %v1634 = vpack.c.b16 %v1088, %v1082
    %v1635 = vpack.c.b16 %v1089, %v1083
    %v1636 = vpack.c.b16 %v1090, %v1084
    %v1637 = vpack.c.b16 %v1097, %v1091
    %v1638 = vpack.c.b16 %v1098, %v1092
    %v1639 = vpack.c.b16 %v1099, %v1093
    %v1640 = vpack.c.b16 %v1100, %v1094
    %v1641 = vpack.c.b16 %v1101, %v1095
    %v1642 = vpack.c.b16 %v1102, %v1096
    %v1643 = vpack.c.b16 %v1109, %v1103
    %v1644 = vpack.c.b16 %v1110, %v1104
    %v1645 = vpack.c.b16 %v1111, %v1105
    %v1646 = vpack.c.b16 %v1112, %v1106
    %v1647 = vpack.c.b16 %v1113, %v1107
    %v1648 = vpack.c.b16 %v1114, %v1108
    %v1649 = vpack.c.b16 %v1121, %v1115
    %v1650 = vpack.c.b16 %v1122, %v1116
    %v1651 = vpack.c.b16 %v1123, %v1117
    %v1652 = vpack.c.b16 %v1124, %v1118
    %v1653 = vpack.c.b16 %v1125, %v1119
    %v1654 = vpack.c.b16 %v1126, %v1120
    %v1655 = vpack.c.b16 %v1133, %v1127
    %v1656 = vpack.c.b16 %v1134, %v1128
    %v1657 = vpack.c.b16 %v1135, %v1129
    %v1658 = vpack.c.b16 %v1136, %v1130
    %v1659 = vpack.c.b16 %v1137, %v1131
    %v1660 = vpack.c.b16 %v1138, %v1132
    %v1661 = vpack.c.b16 %v1145, %v1139
    %v1662 = vpack.c.b16 %v1146, %v1140
    %v1663 = vpack.c.b16 %v1147, %v1141
    %v1664 = vpack.c.b16 %v1148, %v1142
    %v1665 = vpack.c.b16 %v1149, %v1143
    %v1666 = vpack.c.b16 %v1150, %v1144
    %v1667 = vpack.c.b16 %v1157, %v1151
    %v1668 = vpack.c.b16 %v1158, %v1152
    %v1669 = vpack.c.b16 %v1159, %v1153
    %v1670 = vpack.c.b16 %v1160, %v1154
    %v1671 = vpack.c.b16 %v1161, %v1155
    %v1672 = vpack.c.b16 %v1162, %v1156
    %v1673 = vpack.c.b16 %v1169, %v1163
    %v1674 = vpack.c.b16 %v1170, %v1164
    %v1675 = vpack.c.b16 %v1171, %v1165
    %v1676 = vpack.c.b16 %v1172, %v1166
    %v1677 = vpack.c.b16 %v1173, %v1167
    %v1678 = vpack.c.b16 %v1174, %v1168
    %v1679 = vpack.c.b16 %v1181, %v1175
    %v1680 = vpack.c.b16 %v1182, %v1176
    %v1681 = vpack.c.b16 %v1183, %v1177
    %v1682 = vpack.c.b16 %v1184, %v1178
    %v1683 = vpack.c.b16 %v1185, %v1179
    %v1684 = vpack.c.b16 %v1186, %v1180
    %v1685 = vpack.c.b16 %v1193, %v1187
    %v1686 = vpack.c.b16 %v1194, %v1188
    %v1687 = vpack.c.b16 %v1195, %v1189
    %v1688 = vpack.c.b16 %v1196, %v1190
    %v1689 = vpack.c.b16 %v1197, %v1191
    %v1690 = vpack.c.b16 %v1198, %v1192
    %v1691 = vpack.c.b16 %v1205, %v1199
    %v1692 = vpack.c.b16 %v1206, %v1200
    %v1693 = vpack.c.b16 %v1207, %v1201
    %v1694 = vpack.c.b16 %v1208, %v1202
    %v1695 = vpack.c.b16 %v1209, %v1203
    %v1696 = vpack.c.b16 %v1210, %v1204
    %v1697 = vpack.c.b16 %v1217, %v1211
    %v1698 = vpack.c.b16 %v1218, %v1212
    %v1699 = vpack.c.b16 %v1219, %v1213
    %v1700 = vpack.c.b16 %v1220, %v1214
    %v1701 = vpack.c.b16 %v1221, %v1215
    %v1702 = vpack.c.b16 %v1222, %v1216
    %v1703 = vpack.c.b16 %v1229, %v1223
    %v1704 = vpack.c.b16 %v1230, %v1224
    %v1705 = vpack.c.b16 %v1231, %v1225
    %v1706 = vpack.c.b16 %v1232, %v1226
    %v1707 = vpack.c.b16 %v1233, %v1227
    %v1708 = vpack.c.b16 %v1234, %v1228
    %v1709 = vpack.c.b16 %v1241, %v1235
    %v1710 = vpack.c.b16 %v1242, %v1236
    %v1711 = vpack.c.b16 %v1243, %v1237
    %v1712 = vpack.c.b16 %v1244, %v1238
    %v1713 = vpack.c.b16 %v1245, %v1239
    %v1714 = vpack.c.b16 %v1246, %v1240
    %v1715 = vpack.c.b16 %v1253, %v1247
    %v1716 = vpack.c.b16 %v1254, %v1248
    %v1717 = vpack.c.b16 %v1255, %v1249
    %v1718 = vpack.c.b16 %v1256, %v1250
    %v1719 = vpack.c.b16 %v1257, %v1251
    %v1720 = vpack.c.b16 %v1258, %v1252
    %v1721 = vpack.c.b16 %v1265, %v1259
    %v1722 = vpack.c.b16 %v1266, %v1260
    %v1723 = vpack.c.b16 %v1267, %v1261
    %v1724 = vpack.c.b16 %v1268, %v1262
    %v1725 = vpack.c.b16 %v1269, %v1263
    %v1726 = vpack.c.b16 %v1270, %v1264
    %v1727 = vpack.c.b16 %v1277, %v1271
    %v1728 = vpack.c.b16 %v1278, %v1272
    %v1729 = vpack.c.b16 %v1279, %v1273
    %v1730 = vpack.c.b16 %v1280, %v1274
    %v1731 = vpack.c.b16 %v1281, %v1275
    %v1732 = vpack.c.b16 %v1282, %v1276
    %v1733 = vpack.c.b16 %v1289, %v1283
    %v1734 = vpack.c.b16 %v1290, %v1284
    %v1735 = vpack.c.b16 %v1291, %v1285
    %v1736 = vpack.c.b16 %v1292, %v1286
    %v1737 = vpack.c.b16 %v1293, %v1287
    %v1738 = vpack.c.b16 %v1294, %v1288
    %v1739 = vpack.c.b16 %v1301, %v1295
    %v1740 = vpack.c.b16 %v1302, %v1296
    %v1741 = vpack.c.b16 %v1303, %v1297
    %v1742 = vpack.c.b16 %v1304, %v1298
    %v1743 = vpack.c.b16 %v1305, %v1299
    %v1744 = vpack.c.b16 %v1306, %v1300
    %v1745 = vpack.c.b16 %v1313, %v1307
    %v1746 = vpack.c.b16 %v1314, %v1308
    %v1747 = vpack.c.b16 %v1315, %v1309
    %v1748 = vpack.c.b16 %v1316, %v1310
    %v1749 = vpack.c.b16 %v1317, %v1311
    %v1750 = vpack.c.b16 %v1318, %v1312
    %v1751 = vpack.c.b16 %v1325, %v1319
    %v1752 = vpack.c.b16 %v1326, %v1320
    %v1753 = vpack.c.b16 %v1327, %v1321
    %v1754 = vpack.c.b16 %v1328, %v1322
    %v1755 = vpack.c.b16 %v1329, %v1323
    %v1756 = vpack.c.b16 %v1330, %v1324
    %v1757 = vpack.c.b16 %v1337, %v1331
    %v1758 = vpack.c.b16 %v1338, %v1332
    %v1759 = vpack.c.b16 %v1339, %v1333
    %v1760 = vpack.c.b16 %v1340, %v1334
    %v1761 = vpack.c.b16 %v1341, %v1335
    %v1762 = vpack.c.b16 %v1342, %v1336
    %v1763 = vpack.c.b16 %v1349, %v1343
    %v1764 = vpack.c.b16 %v1350, %v1344
    %v1765 = vpack.c.b16 %v1351, %v1345
    %v1766 = vpack.c.b16 %v1352, %v1346
    %v1767 = vpack.c.b16 %v1353, %v1347
    %v1768 = vpack.c.b16 %v1354, %v1348
    %v1769 = vpack.c.b16 %v1361, %v1355
    %v1770 = vpack.c.b16 %v1362, %v1356
    %v1771 = vpack.c.b16 %v1363, %v1357
    %v1772 = vpack.c.b16 %v1364, %v1358
    %v1773 = vpack.c.b16 %v1365, %v1359
    %v1774 = vpack.c.b16 %v1366, %v1360
    %v1775 = vpack.c.b16 %v1373, %v1367
    %v1776 = vpack.c.b16 %v1374, %v1368
    %v1777 = vpack.c.b16 %v1375, %v1369
    %v1778 = vpack.c.b16 %v1376, %v1370
    %v1779 = vpack.c.b16 %v1377, %v1371
    %v1780 = vpack.c.b16 %v1378, %v1372
    %v1781 = vpack.c.b16 %v1385, %v1379
    %v1782 = vpack.c.b16 %v1386, %v1380
    %v1783 = vpack.c.b16 %v1387, %v1381
    %v1784 = vpack.c.b16 %v1388, %v1382
    %v1785 = vpack.c.b16 %v1389, %v1383
    %v1786 = vpack.c.b16 %v1390, %v1384
    %v1787 = vpack.c.b16 %v1397, %v1391
    %v1788 = vpack.c.b16 %v1398, %v1392
    %v1789 = vpack.c.b16 %v1399, %v1393
    %v1790 = vpack.c.b16 %v1400, %v1394
    %v1791 = vpack.c.b16 %v1401, %v1395
    %v1792 = vpack.c.b16 %v1402, %v1396
    %v1793 = vpack.c.b16 %v1409, %v1403
    %v1794 = vpack.c.b16 %v1410, %v1404
    %v1795 = vpack.c.b16 %v1411, %v1405
    %v1796 = vpack.c.b16 %v1412, %v1406
    %v1797 = vpack.c.b16 %v1413, %v1407
    %v1798 = vpack.c.b16 %v1414, %v1408
    %v1799 = vpack.c.b16 %v1421, %v1415
    %v1800 = vpack.c.b16 %v1422, %v1416
    %v1801 = vpack.c.b16 %v1423, %v1417
    %v1802 = vpack.c.b16 %v1424, %v1418
    %v1803 = vpack.c.b16 %v1425, %v1419
    %v1804 = vpack.c.b16 %v1426, %v1420
    %v1805 = vpack.c.b16 %v1433, %v1427
    %v1806 = vpack.c.b16 %v1434, %v1428
    %v1807 = vpack.c.b16 %v1435, %v1429
    %v1808 = vpack.c.b16 %v1436, %v1430
    %v1809 = vpack.c.b16 %v1437, %v1431
    %v1810 = vpack.c.b16 %v1438, %v1432
    %v1811 = vpack.c.b16 %v1445, %v1439
    %v1812 = vpack.c.b16 %v1446, %v1440
    %v1813 = vpack.c.b16 %v1447, %v1441
    %v1814 = vpack.c.b16 %v1448, %v1442
    %v1815 = vpack.c.b16 %v1449, %v1443
    %v1816 = vpack.c.b16 %v1450, %v1444
    %v1817 = vpack.c.b16 %v1457, %v1451
    %v1818 = vpack.c.b16 %v1458, %v1452
    %v1819 = vpack.c.b16 %v1459, %v1453
    %v1820 = vpack.c.b16 %v1460, %v1454
    %v1821 = vpack.c.b16 %v1461, %v1455
    %v1822 = vpack.c.b16 %v1462, %v1456
    %v1823 = vpack.c.b16 %v1469, %v1463
    %v1824 = vpack.c.b16 %v1470, %v1464
    %v1825 = vpack.c.b16 %v1471, %v1465
    %v1826 = vpack.c.b16 %v1472, %v1466
    %v1827 = vpack.c.b16 %v1473, %v1467
    %v1828 = vpack.c.b16 %v1474, %v1468
    %v1829 = vpack.c.b16 %v1481, %v1475
    %v1830 = vpack.c.b16 %v1482, %v1476
    %v1831 = vpack.c.b16 %v1483, %v1477
    %v1832 = vpack.c.b16 %v1484, %v1478
    %v1833 = vpack.c.b16 %v1485, %v1479
    %v1834 = vpack.c.b16 %v1486, %v1480
    %v1835 = vpack.c.b16 %v1493, %v1487
    %v1836 = vpack.c.b16 %v1494, %v1488
    %v1837 = vpack.c.b16 %v1495, %v1489
    %v1838 = vpack.c.b16 %v1496, %v1490
    %v1839 = vpack.c.b16 %v1497, %v1491
    %v1840 = vpack.c.b16 %v1498, %v1492
    %v1841 = vpack.c.b16 %v1505, %v1499
    %v1842 = vpack.c.b16 %v1506, %v1500
    %v1843 = vpack.c.b16 %v1507, %v1501
    %v1844 = vpack.c.b16 %v1508, %v1502
    %v1845 = vpack.c.b16 %v1509, %v1503
    %v1846 = vpack.c.b16 %v1510, %v1504
    %v1847 = vpack.c.b16 %v1517, %v1511
    %v1848 = vpack.c.b16 %v1518, %v1512
    %v1849 = vpack.c.b16 %v1519, %v1513
    %v1850 = vpack.c.b16 %v1520, %v1514
    %v1851 = vpack.c.b16 %v1521, %v1515
    %v1852 = vpack.c.b16 %v1522, %v1516
    %v1853 = vpack.c.b16 %v1529, %v1523
    %v1854 = vpack.c.b16 %v1530, %v1524
    %v1855 = vpack.c.b16 %v1531, %v1525
    %v1856 = vpack.c.b16 %v1532, %v1526
    %v1857 = vpack.c.b16 %v1533, %v1527
    %v1858 = vpack.c.b16 %v1534, %v1528
    %v1859 = vpack.c.b16 %v1541, %v1535
    %v1860 = vpack.c.b16 %v1542, %v1536
    %v1861 = vpack.c.b16 %v1543, %v1537
    %v1862 = vpack.c.b16 %v1544, %v1538
    %v1863 = vpack.c.b16 %v1545, %v1539
    %v1864 = vpack.c.b16 %v1546, %v1540
    %v1865 = vpack.c.b16 %v1553, %v1547
    %v1866 = vpack.c.b16 %v1554, %v1548
    %v1867 = vpack.c.b16 %v1555, %v1549
    %v1868 = vpack.c.b16 %v1556, %v1550
    %v1869 = vpack.c.b16 %v1557, %v1551
    %v1870 = vpack.c.b16 %v1558, %v1552
    %v1871 = vpack.c.b16 %v1565, %v1559
    %v1872 = vpack.c.b16 %v1566, %v1560
    %v1873 = vpack.c.b16 %v1567, %v1561
    %v1874 = vpack.c.b16 %v1568, %v1562
    %v1875 = vpack.c.b16 %v1569, %v1563
    %v1876 = vpack.c.b16 %v1570, %v1564
    %v1877 = vpack.c.b16 %v1577, %v1571
    %v1878 = vpack.c.b16 %v1578, %v1572
    %v1879 = vpack.c.b16 %v1579, %v1573
    %v1880 = vpack.c.b16 %v1580, %v1574
    %v1881 = vpack.c.b16 %v1581, %v1575
    %v1882 = vpack.c.b16 %v1582, %v1576
    %v1883 = vpack.c.b16 %v1589, %v1583
    %v1884 = vpack.c.b16 %v1590, %v1584
    %v1885 = vpack.c.b16 %v1591, %v1585
    %v1886 = vpack.c.b16 %v1592, %v1586
    %v1887 = vpack.c.b16 %v1593, %v1587
    %v1888 = vpack.c.b16 %v1594, %v1588
    %v1889 = vpack.c.b16 %v1601, %v1595
    %v1890 = vpack.c.b16 %v1602, %v1596
    %v1891 = vpack.c.b16 %v1603, %v1597
    %v1892 = vpack.c.b16 %v1604, %v1598
    %v1893 = vpack.c.b16 %v1605, %v1599
    %v1894 = vpack.c.b16 %v1606, %v1600
    %2183 = vmatprep.subr.bf16.mxu0 %v1608
    %2184 = vmatpush1.bf16.msra.mxu0 %v1607
    %2185 = vmatprep.subr.bf16.mxu0 %v1614
    %2186 = vmatpush1.bf16.msra.mxu0 %v1613
    %2187 = vmatprep.subr.bf16.mxu0 %v1620
    %2188 = vmatpush1.bf16.msra.mxu0 %v1619
    %2189 = vmatprep.subr.bf16.mxu0 %v1626
    %2190 = vmatpush1.bf16.msra.mxu0 %v1625
    %2191 = vmatprep.subr.bf16.mxu0 %v1632
    %2192 = vmatpush1.bf16.msra.mxu0 %v1631
    %2193 = vmatprep.subr.bf16.mxu0 %v1638
    %2194 = vmatpush1.bf16.msra.mxu0 %v1637
    %2195 = vmatprep.subr.bf16.mxu0 %v1644
    %2196 = vmatpush1.bf16.msra.mxu0 %v1643
    %2197 = vmatprep.subr.bf16.mxu0 %v1650
    %2198 = vmatpush1.bf16.msra.mxu0 %v1649
    %2199 = vmatprep.subr.bf16.mxu0 %v1656
    %2200 = vmatpush1.bf16.msra.mxu0 %v1655
    %2201 = vmatprep.subr.bf16.mxu0 %v1662
    %2202 = vmatpush1.bf16.msra.mxu0 %v1661
    %2203 = vmatprep.subr.bf16.mxu0 %v1668
    %2204 = vmatpush1.bf16.msra.mxu0 %v1667
    %2205 = vmatprep.subr.bf16.mxu0 %v1674
    %2206 = vmatpush1.bf16.msra.mxu0 %v1673
    %2207 = vmatprep.subr.bf16.mxu0 %v1680
    %2208 = vmatpush1.bf16.msra.mxu0 %v1679
    %2209 = vmatprep.subr.bf16.mxu0 %v1686
    %2210 = vmatpush1.bf16.msra.mxu0 %v1685
    %2211 = vmatprep.subr.bf16.mxu0 %v1692
    %2212 = vmatpush1.bf16.msra.mxu0 %v1691
    %2213 = vmatprep.subr.bf16.mxu0 %v1698
    %2214 = vmatpush1.bf16.msra.mxu0 %v1697
    %2215 = vmatprep.mubr.bf16.mxu0 %v648
    %2216 = vmatmul.mubr.bf16.gmra.mrb[0].mxu0 %v647
    %v2217 = vpop.f32.mrb[0].mxu0
    %v2218 = vadd.f32 %v476, %v2217
    %v2219 = vpop.f32.mrb[0].mxu0
    %v2220 = vadd.f32 %v480, %v2219
    %v2221 = vpop.f32.mrb[0].mxu0
    %v2222 = vadd.f32 %v476, %v2221
    %v2223 = vpop.f32.mrb[0].mxu0
    %v2224 = vadd.f32 %v480, %v2223
    %2225 = vmatprep.mubr.bf16.mxu0 %v654
    %2226 = vmatmul.mubr.bf16.gmra.mrb[0].mxu0 %v653
    %v2227 = vpop.f32.mrb[0].mxu0
    %v2228 = vadd.f32 %v476, %v2227
    %v2229 = vpop.f32.mrb[0].mxu0
    %v2230 = vadd.f32 %v480, %v2229
    %v2231 = vpop.f32.mrb[0].mxu0
    %v2232 = vadd.f32 %v476, %v2231
    %v2233 = vpop.f32.mrb[0].mxu0
    %v2234 = vadd.f32 %v480, %v2233
    %2235 = vmatprep.mubr.bf16.mxu0 %v660
    %2236 = vmatmul.mubr.bf16.gmra.mrb[0].mxu0 %v659
    %v2237 = vpop.f32.mrb[0].mxu0
    %v2238 = vadd.f32 %v476, %v2237
    %v2239 = vpop.f32.mrb[0].mxu0
    %v2240 = vadd.f32 %v480, %v2239
    %v2241 = vpop.f32.mrb[0].mxu0
    %v2242 = vadd.f32 %v476, %v2241
    %v2243 = vpop.f32.mrb[0].mxu0
    %v2244 = vadd.f32 %v480, %v2243
    %2245 = vmatprep.mubr.bf16.mxu0 %v666
    %2246 = vmatmul.mubr.bf16.gmra.mrb[0].mxu0 %v665
    %v2247 = vpop.f32.mrb[0].mxu0
    %v2248 = vadd.f32 %v476, %v2247
    %v2249 = vpop.f32.mrb[0].mxu0
    %v2250 = vadd.f32 %v480, %v2249
    %v2251 = vpop.f32.mrb[0].mxu0
    %v2252 = vadd.f32 %v476, %v2251
    %v2253 = vpop.f32.mrb[0].mxu0
    %v2254 = vadd.f32 %v480, %v2253
    %2255 = vmatprep.mubr.bf16.mxu0 %v672
    %2256 = vmatmul.mubr.bf16.gmra.mrb[0].mxu0 %v671
    %v2257 = vpop.f32.mrb[0].mxu0
    %v2258 = vadd.f32 %v476, %v2257
    %v2259 = vpop.f32.mrb[0].mxu0
    %v2260 = vadd.f32 %v480, %v2259
    %v2261 = vpop.f32.mrb[0].mxu0
    %v2262 = vadd.f32 %v476, %v2261
    %v2263 = vpop.f32.mrb[0].mxu0
    %v2264 = vadd.f32 %v480, %v2263
    %2265 = vmatprep.mubr.bf16.mxu0 %v678
    %2266 = vmatmul.mubr.bf16.gmra.mrb[0].mxu0 %v677
    %v2267 = vpop.f32.mrb[0].mxu0
    %v2268 = vadd.f32 %v476, %v2267
    %v2269 = vpop.f32.mrb[0].mxu0
    %v2270 = vadd.f32 %v480, %v2269
    %v2271 = vpop.f32.mrb[0].mxu0
    %v2272 = vadd.f32 %v476, %v2271
    %v2273 = vpop.f32.mrb[0].mxu0
    %v2274 = vadd.f32 %v480, %v2273
    %2275 = vmatprep.mubr.bf16.mxu0 %v684
    %2276 = vmatmul.mubr.bf16.gmra.mrb[0].mxu0 %v683
    %v2277 = vpop.f32.mrb[0].mxu0
    %v2278 = vadd.f32 %v476, %v2277
    %v2279 = vpop.f32.mrb[0].mxu0
    %v2280 = vadd.f32 %v480, %v2279
    %v2281 = vpop.f32.mrb[0].mxu0
    %v2282 = vadd.f32 %v476, %v2281
    %v2283 = vpop.f32.mrb[0].mxu0
    %v2284 = vadd.f32 %v480, %v2283
    %2285 = vmatprep.mubr.bf16.mxu0 %v690
    %2286 = vmatmul.mubr.bf16.gmra.mrb[0].mxu0 %v689
    %v2287 = vpop.f32.mrb[0].mxu0
    %v2288 = vadd.f32 %v476, %v2287
    %v2289 = vpop.f32.mrb[0].mxu0
    %v2290 = vadd.f32 %v480, %v2289
    %v2291 = vpop.f32.mrb[0].mxu0
    %v2292 = vadd.f32 %v476, %v2291
    %v2293 = vpop.f32.mrb[0].mxu0
    %v2294 = vadd.f32 %v480, %v2293
    %2295 = vdwg.mxu0
    %2296 = vmatprep.subr.bf16.mxu0 %v1704
    %2297 = vmatpush1.bf16.msra.mxu0 %v1703
    %2298 = vmatprep.subr.bf16.mxu0 %v1710
    %2299 = vmatpush1.bf16.msra.mxu0 %v1709
    %2300 = vmatprep.subr.bf16.mxu0 %v1716
    %2301 = vmatpush1.bf16.msra.mxu0 %v1715
    %2302 = vmatprep.subr.bf16.mxu0 %v1722
    %2303 = vmatpush1.bf16.msra.mxu0 %v1721
    %2304 = vmatprep.subr.bf16.mxu0 %v1728
    %2305 = vmatpush1.bf16.msra.mxu0 %v1727
    %2306 = vmatprep.subr.bf16.mxu0 %v1734
    %2307 = vmatpush1.bf16.msra.mxu0 %v1733
    %2308 = vmatprep.subr.bf16.mxu0 %v1740
    %2309 = vmatpush1.bf16.msra.mxu0 %v1739
    %2310 = vmatprep.subr.bf16.mxu0 %v1746
    %2311 = vmatpush1.bf16.msra.mxu0 %v1745
    %2312 = vmatprep.subr.bf16.mxu0 %v1752
    %2313 = vmatpush1.bf16.msra.mxu0 %v1751
    %2314 = vmatprep.subr.bf16.mxu0 %v1758
    %2315 = vmatpush1.bf16.msra.mxu0 %v1757
    %2316 = vmatprep.subr.bf16.mxu0 %v1764
    %2317 = vmatpush1.bf16.msra.mxu0 %v1763
    %2318 = vmatprep.subr.bf16.mxu0 %v1770
    %2319 = vmatpush1.bf16.msra.mxu0 %v1769
    %2320 = vmatprep.subr.bf16.mxu0 %v1776
    %2321 = vmatpush1.bf16.msra.mxu0 %v1775
    %2322 = vmatprep.subr.bf16.mxu0 %v1782
    %2323 = vmatpush1.bf16.msra.mxu0 %v1781
    %2324 = vmatprep.subr.bf16.mxu0 %v1788
    %2325 = vmatpush1.bf16.msra.mxu0 %v1787
    %2326 = vmatprep.subr.bf16.mxu0 %v1794
    %2327 = vmatpush1.bf16.msra.mxu0 %v1793
    %2328 = vmatprep.mubr.bf16.mxu0 %v650
    %2329 = vmatmul.mubr.bf16.gmra.mrb[0].mxu0 %v649
    %v2330 = vpop.f32.mrb[0].mxu0
    %v2331 = vadd.f32 %v2218, %v2330
    %v2332 = vpop.f32.mrb[0].mxu0
    %v2333 = vadd.f32 %v2220, %v2332
    %v2334 = vpop.f32.mrb[0].mxu0
    %v2335 = vadd.f32 %v2222, %v2334
    %v2336 = vpop.f32.mrb[0].mxu0
    %v2337 = vadd.f32 %v2224, %v2336
    %2338 = vmatprep.mubr.bf16.mxu0 %v656
    %2339 = vmatmul.mubr.bf16.gmra.mrb[0].mxu0 %v655
    %v2340 = vpop.f32.mrb[0].mxu0
    %v2341 = vadd.f32 %v2228, %v2340
    %v2342 = vpop.f32.mrb[0].mxu0
    %v2343 = vadd.f32 %v2230, %v2342
    %v2344 = vpop.f32.mrb[0].mxu0
    %v2345 = vadd.f32 %v2232, %v2344
    %v2346 = vpop.f32.mrb[0].mxu0
    %v2347 = vadd.f32 %v2234, %v2346
    %2348 = vmatprep.mubr.bf16.mxu0 %v662
    %2349 = vmatmul.mubr.bf16.gmra.mrb[0].mxu0 %v661
    %v2350 = vpop.f32.mrb[0].mxu0
    %v2351 = vadd.f32 %v2238, %v2350
    %v2352 = vpop.f32.mrb[0].mxu0
    %v2353 = vadd.f32 %v2240, %v2352
    %v2354 = vpop.f32.mrb[0].mxu0
    %v2355 = vadd.f32 %v2242, %v2354
    %v2356 = vpop.f32.mrb[0].mxu0
    %v2357 = vadd.f32 %v2244, %v2356
    %2358 = vmatprep.mubr.bf16.mxu0 %v668
    %2359 = vmatmul.mubr.bf16.gmra.mrb[0].mxu0 %v667
    %v2360 = vpop.f32.mrb[0].mxu0
    %v2361 = vadd.f32 %v2248, %v2360
    %v2362 = vpop.f32.mrb[0].mxu0
    %v2363 = vadd.f32 %v2250, %v2362
    %v2364 = vpop.f32.mrb[0].mxu0
    %v2365 = vadd.f32 %v2252, %v2364
    %v2366 = vpop.f32.mrb[0].mxu0
    %v2367 = vadd.f32 %v2254, %v2366
    %2368 = vmatprep.mubr.bf16.mxu0 %v674
    %2369 = vmatmul.mubr.bf16.gmra.mrb[0].mxu0 %v673
    %v2370 = vpop.f32.mrb[0].mxu0
    %v2371 = vadd.f32 %v2258, %v2370
    %v2372 = vpop.f32.mrb[0].mxu0
    %v2373 = vadd.f32 %v2260, %v2372
    %v2374 = vpop.f32.mrb[0].mxu0
    %v2375 = vadd.f32 %v2262, %v2374
    %v2376 = vpop.f32.mrb[0].mxu0
    %v2377 = vadd.f32 %v2264, %v2376
    %2378 = vmatprep.mubr.bf16.mxu0 %v680
    %2379 = vmatmul.mubr.bf16.gmra.mrb[0].mxu0 %v679
    %v2380 = vpop.f32.mrb[0].mxu0
    %v2381 = vadd.f32 %v2268, %v2380
    %v2382 = vpop.f32.mrb[0].mxu0
    %v2383 = vadd.f32 %v2270, %v2382
    %v2384 = vpop.f32.mrb[0].mxu0
    %v2385 = vadd.f32 %v2272, %v2384
    %v2386 = vpop.f32.mrb[0].mxu0
    %v2387 = vadd.f32 %v2274, %v2386
    %2388 = vmatprep.mubr.bf16.mxu0 %v686
    %2389 = vmatmul.mubr.bf16.gmra.mrb[0].mxu0 %v685
    %v2390 = vpop.f32.mrb[0].mxu0
    %v2391 = vadd.f32 %v2278, %v2390
    %v2392 = vpop.f32.mrb[0].mxu0
    %v2393 = vadd.f32 %v2280, %v2392
    %v2394 = vpop.f32.mrb[0].mxu0
    %v2395 = vadd.f32 %v2282, %v2394
    %v2396 = vpop.f32.mrb[0].mxu0
    %v2397 = vadd.f32 %v2284, %v2396
    %2398 = vmatprep.mubr.bf16.mxu0 %v692
    %2399 = vmatmul.mubr.bf16.gmra.mrb[0].mxu0 %v691
    %v2400 = vpop.f32.mrb[0].mxu0
    %v2401 = vadd.f32 %v2288, %v2400
    %v2402 = vpop.f32.mrb[0].mxu0
    %v2403 = vadd.f32 %v2290, %v2402
    %v2404 = vpop.f32.mrb[0].mxu0
    %v2405 = vadd.f32 %v2292, %v2404
    %v2406 = vpop.f32.mrb[0].mxu0
    %v2407 = vadd.f32 %v2294, %v2406
    %2408 = vdwg.mxu0
    %2409 = vmatprep.subr.bf16.mxu0 %v1800
    %2410 = vmatpush1.bf16.msra.mxu0 %v1799
    %2411 = vmatprep.subr.bf16.mxu0 %v1806
    %2412 = vmatpush1.bf16.msra.mxu0 %v1805
    %2413 = vmatprep.subr.bf16.mxu0 %v1812
    %2414 = vmatpush1.bf16.msra.mxu0 %v1811
    %2415 = vmatprep.subr.bf16.mxu0 %v1818
    %2416 = vmatpush1.bf16.msra.mxu0 %v1817
    %2417 = vmatprep.subr.bf16.mxu0 %v1824
    %2418 = vmatpush1.bf16.msra.mxu0 %v1823
    %2419 = vmatprep.subr.bf16.mxu0 %v1830
    %2420 = vmatpush1.bf16.msra.mxu0 %v1829
    %2421 = vmatprep.subr.bf16.mxu0 %v1836
    %2422 = vmatpush1.bf16.msra.mxu0 %v1835
    %2423 = vmatprep.subr.bf16.mxu0 %v1842
    %2424 = vmatpush1.bf16.msra.mxu0 %v1841
    %2425 = vmatprep.subr.bf16.mxu0 %v1848
    %2426 = vmatpush1.bf16.msra.mxu0 %v1847
    %2427 = vmatprep.subr.bf16.mxu0 %v1854
    %2428 = vmatpush1.bf16.msra.mxu0 %v1853
    %2429 = vmatprep.subr.bf16.mxu0 %v1860
    %2430 = vmatpush1.bf16.msra.mxu0 %v1859
    %2431 = vmatprep.subr.bf16.mxu0 %v1866
    %2432 = vmatpush1.bf16.msra.mxu0 %v1865
    %2433 = vmatprep.subr.bf16.mxu0 %v1872
    %2434 = vmatpush1.bf16.msra.mxu0 %v1871
    %2435 = vmatprep.subr.bf16.mxu0 %v1878
    %2436 = vmatpush1.bf16.msra.mxu0 %v1877
    %2437 = vmatprep.subr.bf16.mxu0 %v1884
    %2438 = vmatpush1.bf16.msra.mxu0 %v1883
    %2439 = vmatprep.subr.bf16.mxu0 %v1890
    %2440 = vmatpush1.bf16.msra.mxu0 %v1889
    %2441 = vmatprep.mubr.bf16.mxu0 %v652
    %2442 = vmatmul.mubr.bf16.gmra.mrb[0].mxu0 %v651
    %v2443 = vpop.f32.mrb[0].mxu0
    %v2444 = vadd.f32 %v2331, %v2443
    %v2445 = vpop.f32.mrb[0].mxu0
    %v2446 = vadd.f32 %v2333, %v2445
    %v2447 = vpop.f32.mrb[0].mxu0
    %v2448 = vadd.f32 %v2335, %v2447
    %v2449 = vpop.f32.mrb[0].mxu0
    %v2450 = vadd.f32 %v2337, %v2449
    %2451 = vmatprep.mubr.bf16.mxu0 %v658
    %2452 = vmatmul.mubr.bf16.gmra.mrb[0].mxu0 %v657
    %v2453 = vpop.f32.mrb[0].mxu0
    %v2454 = vadd.f32 %v2341, %v2453
    %v2455 = vpop.f32.mrb[0].mxu0
    %v2456 = vadd.f32 %v2343, %v2455
    %v2457 = vpop.f32.mrb[0].mxu0
    %v2458 = vadd.f32 %v2345, %v2457
    %v2459 = vpop.f32.mrb[0].mxu0
    %v2460 = vadd.f32 %v2347, %v2459
    %2461 = vmatprep.mubr.bf16.mxu0 %v664
    %2462 = vmatmul.mubr.bf16.gmra.mrb[0].mxu0 %v663
    %v2463 = vpop.f32.mrb[0].mxu0
    %v2464 = vadd.f32 %v2351, %v2463
    %v2465 = vpop.f32.mrb[0].mxu0
    %v2466 = vadd.f32 %v2353, %v2465
    %v2467 = vpop.f32.mrb[0].mxu0
    %v2468 = vadd.f32 %v2355, %v2467
    %v2469 = vpop.f32.mrb[0].mxu0
    %v2470 = vadd.f32 %v2357, %v2469
    %2471 = vmatprep.mubr.bf16.mxu0 %v670
    %2472 = vmatmul.mubr.bf16.gmra.mrb[0].mxu0 %v669
    %v2473 = vpop.f32.mrb[0].mxu0
    %v2474 = vadd.f32 %v2361, %v2473
    %v2475 = vpop.f32.mrb[0].mxu0
    %v2476 = vadd.f32 %v2363, %v2475
    %v2477 = vpop.f32.mrb[0].mxu0
    %v2478 = vadd.f32 %v2365, %v2477
    %v2479 = vpop.f32.mrb[0].mxu0
    %v2480 = vadd.f32 %v2367, %v2479
    %2481 = vmatprep.mubr.bf16.mxu0 %v676
    %2482 = vmatmul.mubr.bf16.gmra.mrb[0].mxu0 %v675
    %v2483 = vpop.f32.mrb[0].mxu0
    %v2484 = vadd.f32 %v2371, %v2483
    %v2485 = vpop.f32.mrb[0].mxu0
    %v2486 = vadd.f32 %v2373, %v2485
    %v2487 = vpop.f32.mrb[0].mxu0
    %v2488 = vadd.f32 %v2375, %v2487
    %v2489 = vpop.f32.mrb[0].mxu0
    %v2490 = vadd.f32 %v2377, %v2489
    %2491 = vmatprep.mubr.bf16.mxu0 %v682
    %2492 = vmatmul.mubr.bf16.gmra.mrb[0].mxu0 %v681
    %v2493 = vpop.f32.mrb[0].mxu0
    %v2494 = vadd.f32 %v2381, %v2493
    %v2495 = vpop.f32.mrb[0].mxu0
    %v2496 = vadd.f32 %v2383, %v2495
    %v2497 = vpop.f32.mrb[0].mxu0
    %v2498 = vadd.f32 %v2385, %v2497
    %v2499 = vpop.f32.mrb[0].mxu0
    %v2500 = vadd.f32 %v2387, %v2499
    %2501 = vmatprep.mubr.bf16.mxu0 %v688
    %2502 = vmatmul.mubr.bf16.gmra.mrb[0].mxu0 %v687
    %v2503 = vpop.f32.mrb[0].mxu0
    %v2504 = vadd.f32 %v2391, %v2503
    %v2505 = vpop.f32.mrb[0].mxu0
    %v2506 = vadd.f32 %v2393, %v2505
    %v2507 = vpop.f32.mrb[0].mxu0
    %v2508 = vadd.f32 %v2395, %v2507
    %v2509 = vpop.f32.mrb[0].mxu0
    %v2510 = vadd.f32 %v2397, %v2509
    %2511 = vmatprep.mubr.bf16.mxu0 %v694
    %2512 = vmatmul.mubr.bf16.gmra.mrb[0].mxu0 %v693
    %v2513 = vpop.f32.mrb[0].mxu0
    %v2514 = vadd.f32 %v2401, %v2513
    %v2515 = vpop.f32.mrb[0].mxu0
    %v2516 = vadd.f32 %v2403, %v2515
    %v2517 = vpop.f32.mrb[0].mxu0
    %v2518 = vadd.f32 %v2405, %v2517
    %v2519 = vpop.f32.mrb[0].mxu0
    %v2520 = vadd.f32 %v2407, %v2519
    %2521 = vdwg.mxu0
    %2522 = vmatprep.subr.bf16.mxu0 %v1610
    %2523 = vmatpush1.bf16.msra.mxu0 %v1609
    %2524 = vmatprep.subr.bf16.mxu0 %v1616
    %2525 = vmatpush1.bf16.msra.mxu0 %v1615
    %2526 = vmatprep.subr.bf16.mxu0 %v1622
    %2527 = vmatpush1.bf16.msra.mxu0 %v1621
    %2528 = vmatprep.subr.bf16.mxu0 %v1628
    %2529 = vmatpush1.bf16.msra.mxu0 %v1627
    %2530 = vmatprep.subr.bf16.mxu0 %v1634
    %2531 = vmatpush1.bf16.msra.mxu0 %v1633
    %2532 = vmatprep.subr.bf16.mxu0 %v1640
    %2533 = vmatpush1.bf16.msra.mxu0 %v1639
    %2534 = vmatprep.subr.bf16.mxu0 %v1646
    %2535 = vmatpush1.bf16.msra.mxu0 %v1645
    %2536 = vmatprep.subr.bf16.mxu0 %v1652
    %2537 = vmatpush1.bf16.msra.mxu0 %v1651
    %2538 = vmatprep.subr.bf16.mxu0 %v1658
    %2539 = vmatpush1.bf16.msra.mxu0 %v1657
    %2540 = vmatprep.subr.bf16.mxu0 %v1664
    %2541 = vmatpush1.bf16.msra.mxu0 %v1663
    %2542 = vmatprep.subr.bf16.mxu0 %v1670
    %2543 = vmatpush1.bf16.msra.mxu0 %v1669
    %2544 = vmatprep.subr.bf16.mxu0 %v1676
    %2545 = vmatpush1.bf16.msra.mxu0 %v1675
    %2546 = vmatprep.subr.bf16.mxu0 %v1682
    %2547 = vmatpush1.bf16.msra.mxu0 %v1681
    %2548 = vmatprep.subr.bf16.mxu0 %v1688
    %2549 = vmatpush1.bf16.msra.mxu0 %v1687
    %2550 = vmatprep.subr.bf16.mxu0 %v1694
    %2551 = vmatpush1.bf16.msra.mxu0 %v1693
    %2552 = vmatprep.subr.bf16.mxu0 %v1700
    %2553 = vmatpush1.bf16.msra.mxu0 %v1699
    %2554 = vmatprep.mubr.bf16.mxu0 %v648
    %2555 = vmatmul.mubr.bf16.gmra.mrb[0].mxu0 %v647
    %v2556 = vpop.f32.mrb[0].mxu0
    %v2557 = vadd.f32 %v484, %v2556
    %v2558 = vpop.f32.mrb[0].mxu0
    %v2559 = vadd.f32 %v488, %v2558
    %v2560 = vpop.f32.mrb[0].mxu0
    %v2561 = vadd.f32 %v484, %v2560
    %v2562 = vpop.f32.mrb[0].mxu0
    %v2563 = vadd.f32 %v488, %v2562
    %2564 = vmatprep.mubr.bf16.mxu0 %v654
    %2565 = vmatmul.mubr.bf16.gmra.mrb[0].mxu0 %v653
    %v2566 = vpop.f32.mrb[0].mxu0
    %v2567 = vadd.f32 %v484, %v2566
    %v2568 = vpop.f32.mrb[0].mxu0
    %v2569 = vadd.f32 %v488, %v2568
    %v2570 = vpop.f32.mrb[0].mxu0
    %v2571 = vadd.f32 %v484, %v2570
    %v2572 = vpop.f32.mrb[0].mxu0
    %v2573 = vadd.f32 %v488, %v2572
    %2574 = vmatprep.mubr.bf16.mxu0 %v660
    %2575 = vmatmul.mubr.bf16.gmra.mrb[0].mxu0 %v659
    %v2576 = vpop.f32.mrb[0].mxu0
    %v2577 = vadd.f32 %v484, %v2576
    %v2578 = vpop.f32.mrb[0].mxu0
    %v2579 = vadd.f32 %v488, %v2578
    %v2580 = vpop.f32.mrb[0].mxu0
    %v2581 = vadd.f32 %v484, %v2580
    %v2582 = vpop.f32.mrb[0].mxu0
    %v2583 = vadd.f32 %v488, %v2582
    %2584 = vmatprep.mubr.bf16.mxu0 %v666
    %2585 = vmatmul.mubr.bf16.gmra.mrb[0].mxu0 %v665
    %v2586 = vpop.f32.mrb[0].mxu0
    %v2587 = vadd.f32 %v484, %v2586
    %v2588 = vpop.f32.mrb[0].mxu0
    %v2589 = vadd.f32 %v488, %v2588
    %v2590 = vpop.f32.mrb[0].mxu0
    %v2591 = vadd.f32 %v484, %v2590
    %v2592 = vpop.f32.mrb[0].mxu0
    %v2593 = vadd.f32 %v488, %v2592
    %2594 = vmatprep.mubr.bf16.mxu0 %v672
    %2595 = vmatmul.mubr.bf16.gmra.mrb[0].mxu0 %v671
    %v2596 = vpop.f32.mrb[0].mxu0
    %v2597 = vadd.f32 %v484, %v2596
    %v2598 = vpop.f32.mrb[0].mxu0
    %v2599 = vadd.f32 %v488, %v2598
    %v2600 = vpop.f32.mrb[0].mxu0
    %v2601 = vadd.f32 %v484, %v2600
    %v2602 = vpop.f32.mrb[0].mxu0
    %v2603 = vadd.f32 %v488, %v2602
    %2604 = vmatprep.mubr.bf16.mxu0 %v678
    %2605 = vmatmul.mubr.bf16.gmra.mrb[0].mxu0 %v677
    %v2606 = vpop.f32.mrb[0].mxu0
    %v2607 = vadd.f32 %v484, %v2606
    %v2608 = vpop.f32.mrb[0].mxu0
    %v2609 = vadd.f32 %v488, %v2608
    %v2610 = vpop.f32.mrb[0].mxu0
    %v2611 = vadd.f32 %v484, %v2610
    %v2612 = vpop.f32.mrb[0].mxu0
    %v2613 = vadd.f32 %v488, %v2612
    %2614 = vmatprep.mubr.bf16.mxu0 %v684
    %2615 = vmatmul.mubr.bf16.gmra.mrb[0].mxu0 %v683
    %v2616 = vpop.f32.mrb[0].mxu0
    %v2617 = vadd.f32 %v484, %v2616
    %v2618 = vpop.f32.mrb[0].mxu0
    %v2619 = vadd.f32 %v488, %v2618
    %v2620 = vpop.f32.mrb[0].mxu0
    %v2621 = vadd.f32 %v484, %v2620
    %v2622 = vpop.f32.mrb[0].mxu0
    %v2623 = vadd.f32 %v488, %v2622
    %2624 = vmatprep.mubr.bf16.mxu0 %v690
    %2625 = vmatmul.mubr.bf16.gmra.mrb[0].mxu0 %v689
    %v2626 = vpop.f32.mrb[0].mxu0
    %v2627 = vadd.f32 %v484, %v2626
    %v2628 = vpop.f32.mrb[0].mxu0
    %v2629 = vadd.f32 %v488, %v2628
    %v2630 = vpop.f32.mrb[0].mxu0
    %v2631 = vadd.f32 %v484, %v2630
    %v2632 = vpop.f32.mrb[0].mxu0
    %v2633 = vadd.f32 %v488, %v2632
    %2634 = vdwg.mxu0
    %2635 = vmatprep.subr.bf16.mxu0 %v1706
    %2636 = vmatpush1.bf16.msra.mxu0 %v1705
    %2637 = vmatprep.subr.bf16.mxu0 %v1712
    %2638 = vmatpush1.bf16.msra.mxu0 %v1711
    %2639 = vmatprep.subr.bf16.mxu0 %v1718
    %2640 = vmatpush1.bf16.msra.mxu0 %v1717
    %2641 = vmatprep.subr.bf16.mxu0 %v1724
    %2642 = vmatpush1.bf16.msra.mxu0 %v1723
    %2643 = vmatprep.subr.bf16.mxu0 %v1730
    %2644 = vmatpush1.bf16.msra.mxu0 %v1729
    %2645 = vmatprep.subr.bf16.mxu0 %v1736
    %2646 = vmatpush1.bf16.msra.mxu0 %v1735
    %2647 = vmatprep.subr.bf16.mxu0 %v1742
    %2648 = vmatpush1.bf16.msra.mxu0 %v1741
    %2649 = vmatprep.subr.bf16.mxu0 %v1748
    %2650 = vmatpush1.bf16.msra.mxu0 %v1747
    %2651 = vmatprep.subr.bf16.mxu0 %v1754
    %2652 = vmatpush1.bf16.msra.mxu0 %v1753
    %2653 = vmatprep.subr.bf16.mxu0 %v1760
    %2654 = vmatpush1.bf16.msra.mxu0 %v1759
    %2655 = vmatprep.subr.bf16.mxu0 %v1766
    %2656 = vmatpush1.bf16.msra.mxu0 %v1765
    %2657 = vmatprep.subr.bf16.mxu0 %v1772
    %2658 = vmatpush1.bf16.msra.mxu0 %v1771
    %2659 = vmatprep.subr.bf16.mxu0 %v1778
    %2660 = vmatpush1.bf16.msra.mxu0 %v1777
    %2661 = vmatprep.subr.bf16.mxu0 %v1784
    %2662 = vmatpush1.bf16.msra.mxu0 %v1783
    %2663 = vmatprep.subr.bf16.mxu0 %v1790
    %2664 = vmatpush1.bf16.msra.mxu0 %v1789
    %2665 = vmatprep.subr.bf16.mxu0 %v1796
    %2666 = vmatpush1.bf16.msra.mxu0 %v1795
    %2667 = vmatprep.mubr.bf16.mxu0 %v650
    %2668 = vmatmul.mubr.bf16.gmra.mrb[0].mxu0 %v649
    %v2669 = vpop.f32.mrb[0].mxu0
    %v2670 = vadd.f32 %v2557, %v2669
    %v2671 = vpop.f32.mrb[0].mxu0
    %v2672 = vadd.f32 %v2559, %v2671
    %v2673 = vpop.f32.mrb[0].mxu0
    %v2674 = vadd.f32 %v2561, %v2673
    %v2675 = vpop.f32.mrb[0].mxu0
    %v2676 = vadd.f32 %v2563, %v2675
    %2677 = vmatprep.mubr.bf16.mxu0 %v656
    %2678 = vmatmul.mubr.bf16.gmra.mrb[0].mxu0 %v655
    %v2679 = vpop.f32.mrb[0].mxu0
    %v2680 = vadd.f32 %v2567, %v2679
    %v2681 = vpop.f32.mrb[0].mxu0
    %v2682 = vadd.f32 %v2569, %v2681
    %v2683 = vpop.f32.mrb[0].mxu0
    %v2684 = vadd.f32 %v2571, %v2683
    %v2685 = vpop.f32.mrb[0].mxu0
    %v2686 = vadd.f32 %v2573, %v2685
    %2687 = vmatprep.mubr.bf16.mxu0 %v662
    %2688 = vmatmul.mubr.bf16.gmra.mrb[0].mxu0 %v661
    %v2689 = vpop.f32.mrb[0].mxu0
    %v2690 = vadd.f32 %v2577, %v2689
    %v2691 = vpop.f32.mrb[0].mxu0
    %v2692 = vadd.f32 %v2579, %v2691
    %v2693 = vpop.f32.mrb[0].mxu0
    %v2694 = vadd.f32 %v2581, %v2693
    %v2695 = vpop.f32.mrb[0].mxu0
    %v2696 = vadd.f32 %v2583, %v2695
    %2697 = vmatprep.mubr.bf16.mxu0 %v668
    %2698 = vmatmul.mubr.bf16.gmra.mrb[0].mxu0 %v667
    %v2699 = vpop.f32.mrb[0].mxu0
    %v2700 = vadd.f32 %v2587, %v2699
    %v2701 = vpop.f32.mrb[0].mxu0
    %v2702 = vadd.f32 %v2589, %v2701
    %v2703 = vpop.f32.mrb[0].mxu0
    %v2704 = vadd.f32 %v2591, %v2703
    %v2705 = vpop.f32.mrb[0].mxu0
    %v2706 = vadd.f32 %v2593, %v2705
    %2707 = vmatprep.mubr.bf16.mxu0 %v674
    %2708 = vmatmul.mubr.bf16.gmra.mrb[0].mxu0 %v673
    %v2709 = vpop.f32.mrb[0].mxu0
    %v2710 = vadd.f32 %v2597, %v2709
    %v2711 = vpop.f32.mrb[0].mxu0
    %v2712 = vadd.f32 %v2599, %v2711
    %v2713 = vpop.f32.mrb[0].mxu0
    %v2714 = vadd.f32 %v2601, %v2713
    %v2715 = vpop.f32.mrb[0].mxu0
    %v2716 = vadd.f32 %v2603, %v2715
    %2717 = vmatprep.mubr.bf16.mxu0 %v680
    %2718 = vmatmul.mubr.bf16.gmra.mrb[0].mxu0 %v679
    %v2719 = vpop.f32.mrb[0].mxu0
    %v2720 = vadd.f32 %v2607, %v2719
    %v2721 = vpop.f32.mrb[0].mxu0
    %v2722 = vadd.f32 %v2609, %v2721
    %v2723 = vpop.f32.mrb[0].mxu0
    %v2724 = vadd.f32 %v2611, %v2723
    %v2725 = vpop.f32.mrb[0].mxu0
    %v2726 = vadd.f32 %v2613, %v2725
    %2727 = vmatprep.mubr.bf16.mxu0 %v686
    %2728 = vmatmul.mubr.bf16.gmra.mrb[0].mxu0 %v685
    %v2729 = vpop.f32.mrb[0].mxu0
    %v2730 = vadd.f32 %v2617, %v2729
    %v2731 = vpop.f32.mrb[0].mxu0
    %v2732 = vadd.f32 %v2619, %v2731
    %v2733 = vpop.f32.mrb[0].mxu0
    %v2734 = vadd.f32 %v2621, %v2733
    %v2735 = vpop.f32.mrb[0].mxu0
    %v2736 = vadd.f32 %v2623, %v2735
    %2737 = vmatprep.mubr.bf16.mxu0 %v692
    %2738 = vmatmul.mubr.bf16.gmra.mrb[0].mxu0 %v691
    %v2739 = vpop.f32.mrb[0].mxu0
    %v2740 = vadd.f32 %v2627, %v2739
    %v2741 = vpop.f32.mrb[0].mxu0
    %v2742 = vadd.f32 %v2629, %v2741
    %v2743 = vpop.f32.mrb[0].mxu0
    %v2744 = vadd.f32 %v2631, %v2743
    %v2745 = vpop.f32.mrb[0].mxu0
    %v2746 = vadd.f32 %v2633, %v2745
    %2747 = vdwg.mxu0
    %2748 = vmatprep.subr.bf16.mxu0 %v1802
    %2749 = vmatpush1.bf16.msra.mxu0 %v1801
    %2750 = vmatprep.subr.bf16.mxu0 %v1808
    %2751 = vmatpush1.bf16.msra.mxu0 %v1807
    %2752 = vmatprep.subr.bf16.mxu0 %v1814
    %2753 = vmatpush1.bf16.msra.mxu0 %v1813
    %2754 = vmatprep.subr.bf16.mxu0 %v1820
    %2755 = vmatpush1.bf16.msra.mxu0 %v1819
    %2756 = vmatprep.subr.bf16.mxu0 %v1826
    %2757 = vmatpush1.bf16.msra.mxu0 %v1825
    %2758 = vmatprep.subr.bf16.mxu0 %v1832
    %2759 = vmatpush1.bf16.msra.mxu0 %v1831
    %2760 = vmatprep.subr.bf16.mxu0 %v1838
    %2761 = vmatpush1.bf16.msra.mxu0 %v1837
    %2762 = vmatprep.subr.bf16.mxu0 %v1844
    %2763 = vmatpush1.bf16.msra.mxu0 %v1843
    %2764 = vmatprep.subr.bf16.mxu0 %v1850
    %2765 = vmatpush1.bf16.msra.mxu0 %v1849
    %2766 = vmatprep.subr.bf16.mxu0 %v1856
    %2767 = vmatpush1.bf16.msra.mxu0 %v1855
    %2768 = vmatprep.subr.bf16.mxu0 %v1862
    %2769 = vmatpush1.bf16.msra.mxu0 %v1861
    %2770 = vmatprep.subr.bf16.mxu0 %v1868
    %2771 = vmatpush1.bf16.msra.mxu0 %v1867
    %2772 = vmatprep.subr.bf16.mxu0 %v1874
    %2773 = vmatpush1.bf16.msra.mxu0 %v1873
    %2774 = vmatprep.subr.bf16.mxu0 %v1880
    %2775 = vmatpush1.bf16.msra.mxu0 %v1879
    %2776 = vmatprep.subr.bf16.mxu0 %v1886
    %2777 = vmatpush1.bf16.msra.mxu0 %v1885
    %2778 = vmatprep.subr.bf16.mxu0 %v1892
    %2779 = vmatpush1.bf16.msra.mxu0 %v1891
    %2780 = vmatprep.mubr.bf16.mxu0 %v652
    %2781 = vmatmul.mubr.bf16.gmra.mrb[0].mxu0 %v651
    %v2782 = vpop.f32.mrb[0].mxu0
    %v2783 = vadd.f32 %v2670, %v2782
    %v2784 = vpop.f32.mrb[0].mxu0
    %v2785 = vadd.f32 %v2672, %v2784
    %v2786 = vpop.f32.mrb[0].mxu0
    %v2787 = vadd.f32 %v2674, %v2786
    %v2788 = vpop.f32.mrb[0].mxu0
    %v2789 = vadd.f32 %v2676, %v2788
    %2790 = vmatprep.mubr.bf16.mxu0 %v658
    %2791 = vmatmul.mubr.bf16.gmra.mrb[0].mxu0 %v657
    %v2792 = vpop.f32.mrb[0].mxu0
    %v2793 = vadd.f32 %v2680, %v2792
    %v2794 = vpop.f32.mrb[0].mxu0
    %v2795 = vadd.f32 %v2682, %v2794
    %v2796 = vpop.f32.mrb[0].mxu0
    %v2797 = vadd.f32 %v2684, %v2796
    %v2798 = vpop.f32.mrb[0].mxu0
    %v2799 = vadd.f32 %v2686, %v2798
    %2800 = vmatprep.mubr.bf16.mxu0 %v664
    %2801 = vmatmul.mubr.bf16.gmra.mrb[0].mxu0 %v663
    %v2802 = vpop.f32.mrb[0].mxu0
    %v2803 = vadd.f32 %v2690, %v2802
    %v2804 = vpop.f32.mrb[0].mxu0
    %v2805 = vadd.f32 %v2692, %v2804
    %v2806 = vpop.f32.mrb[0].mxu0
    %v2807 = vadd.f32 %v2694, %v2806
    %v2808 = vpop.f32.mrb[0].mxu0
    %v2809 = vadd.f32 %v2696, %v2808
    %2810 = vmatprep.mubr.bf16.mxu0 %v670
    %2811 = vmatmul.mubr.bf16.gmra.mrb[0].mxu0 %v669
    %v2812 = vpop.f32.mrb[0].mxu0
    %v2813 = vadd.f32 %v2700, %v2812
    %v2814 = vpop.f32.mrb[0].mxu0
    %v2815 = vadd.f32 %v2702, %v2814
    %v2816 = vpop.f32.mrb[0].mxu0
    %v2817 = vadd.f32 %v2704, %v2816
    %v2818 = vpop.f32.mrb[0].mxu0
    %v2819 = vadd.f32 %v2706, %v2818
    %2820 = vmatprep.mubr.bf16.mxu0 %v676
    %2821 = vmatmul.mubr.bf16.gmra.mrb[0].mxu0 %v675
    %v2822 = vpop.f32.mrb[0].mxu0
    %v2823 = vadd.f32 %v2710, %v2822
    %v2824 = vpop.f32.mrb[0].mxu0
    %v2825 = vadd.f32 %v2712, %v2824
    %v2826 = vpop.f32.mrb[0].mxu0
    %v2827 = vadd.f32 %v2714, %v2826
    %v2828 = vpop.f32.mrb[0].mxu0
    %v2829 = vadd.f32 %v2716, %v2828
    %2830 = vmatprep.mubr.bf16.mxu0 %v682
    %2831 = vmatmul.mubr.bf16.gmra.mrb[0].mxu0 %v681
    %v2832 = vpop.f32.mrb[0].mxu0
    %v2833 = vadd.f32 %v2720, %v2832
    %v2834 = vpop.f32.mrb[0].mxu0
    %v2835 = vadd.f32 %v2722, %v2834
    %v2836 = vpop.f32.mrb[0].mxu0
    %v2837 = vadd.f32 %v2724, %v2836
    %v2838 = vpop.f32.mrb[0].mxu0
    %v2839 = vadd.f32 %v2726, %v2838
    %2840 = vmatprep.mubr.bf16.mxu0 %v688
    %2841 = vmatmul.mubr.bf16.gmra.mrb[0].mxu0 %v687
    %v2842 = vpop.f32.mrb[0].mxu0
    %v2843 = vadd.f32 %v2730, %v2842
    %v2844 = vpop.f32.mrb[0].mxu0
    %v2845 = vadd.f32 %v2732, %v2844
    %v2846 = vpop.f32.mrb[0].mxu0
    %v2847 = vadd.f32 %v2734, %v2846
    %v2848 = vpop.f32.mrb[0].mxu0
    %v2849 = vadd.f32 %v2736, %v2848
    %2850 = vmatprep.mubr.bf16.mxu0 %v694
    %2851 = vmatmul.mubr.bf16.gmra.mrb[0].mxu0 %v693
    %v2852 = vpop.f32.mrb[0].mxu0
    %v2853 = vadd.f32 %v2740, %v2852
    %v2854 = vpop.f32.mrb[0].mxu0
    %v2855 = vadd.f32 %v2742, %v2854
    %v2856 = vpop.f32.mrb[0].mxu0
    %v2857 = vadd.f32 %v2744, %v2856
    %v2858 = vpop.f32.mrb[0].mxu0
    %v2859 = vadd.f32 %v2746, %v2858
    %2860 = vdwg.mxu0
    %2861 = vmatprep.subr.bf16.mxu0 %v1612
    %2862 = vmatpush1.bf16.msra.mxu0 %v1611
    %2863 = vmatprep.subr.bf16.mxu0 %v1618
    %2864 = vmatpush1.bf16.msra.mxu0 %v1617
    %2865 = vmatprep.subr.bf16.mxu0 %v1624
    %2866 = vmatpush1.bf16.msra.mxu0 %v1623
    %2867 = vmatprep.subr.bf16.mxu0 %v1630
    %2868 = vmatpush1.bf16.msra.mxu0 %v1629
    %2869 = vmatprep.subr.bf16.mxu0 %v1636
    %2870 = vmatpush1.bf16.msra.mxu0 %v1635
    %2871 = vmatprep.subr.bf16.mxu0 %v1642
    %2872 = vmatpush1.bf16.msra.mxu0 %v1641
    %2873 = vmatprep.subr.bf16.mxu0 %v1648
    %2874 = vmatpush1.bf16.msra.mxu0 %v1647
    %2875 = vmatprep.subr.bf16.mxu0 %v1654
    %2876 = vmatpush1.bf16.msra.mxu0 %v1653
    %2877 = vmatprep.subr.bf16.mxu0 %v1660
    %2878 = vmatpush1.bf16.msra.mxu0 %v1659
    %2879 = vmatprep.subr.bf16.mxu0 %v1666
    %2880 = vmatpush1.bf16.msra.mxu0 %v1665
    %2881 = vmatprep.subr.bf16.mxu0 %v1672
    %2882 = vmatpush1.bf16.msra.mxu0 %v1671
    %2883 = vmatprep.subr.bf16.mxu0 %v1678
    %2884 = vmatpush1.bf16.msra.mxu0 %v1677
    %2885 = vmatprep.subr.bf16.mxu0 %v1684
    %2886 = vmatpush1.bf16.msra.mxu0 %v1683
    %2887 = vmatprep.subr.bf16.mxu0 %v1690
    %2888 = vmatpush1.bf16.msra.mxu0 %v1689
    %2889 = vmatprep.subr.bf16.mxu0 %v1696
    %2890 = vmatpush1.bf16.msra.mxu0 %v1695
    %2891 = vmatprep.subr.bf16.mxu0 %v1702
    %2892 = vmatpush1.bf16.msra.mxu0 %v1701
    %2893 = vmatprep.mubr.bf16.mxu0 %v648
    %2894 = vmatmul.mubr.bf16.gmra.mrb[0].mxu0 %v647
    %v2895 = vpop.f32.mrb[0].mxu0
    %v2896 = vadd.f32 %v492, %v2895
    %v2897 = vpop.f32.mrb[0].mxu0
    %v2898 = vadd.f32 %v496, %v2897
    %v2899 = vpop.f32.mrb[0].mxu0
    %v2900 = vadd.f32 %v492, %v2899
    %v2901 = vpop.f32.mrb[0].mxu0
    %v2902 = vadd.f32 %v496, %v2901
    %2903 = vmatprep.mubr.bf16.mxu0 %v654
    %2904 = vmatmul.mubr.bf16.gmra.mrb[0].mxu0 %v653
    %v2905 = vpop.f32.mrb[0].mxu0
    %v2906 = vadd.f32 %v492, %v2905
    %v2907 = vpop.f32.mrb[0].mxu0
    %v2908 = vadd.f32 %v496, %v2907
    %v2909 = vpop.f32.mrb[0].mxu0
    %v2910 = vadd.f32 %v492, %v2909
    %v2911 = vpop.f32.mrb[0].mxu0
    %v2912 = vadd.f32 %v496, %v2911
    %2913 = vmatprep.mubr.bf16.mxu0 %v660
    %2914 = vmatmul.mubr.bf16.gmra.mrb[0].mxu0 %v659
    %v2915 = vpop.f32.mrb[0].mxu0
    %v2916 = vadd.f32 %v492, %v2915
    %v2917 = vpop.f32.mrb[0].mxu0
    %v2918 = vadd.f32 %v496, %v2917
    %v2919 = vpop.f32.mrb[0].mxu0
    %v2920 = vadd.f32 %v492, %v2919
    %v2921 = vpop.f32.mrb[0].mxu0
    %v2922 = vadd.f32 %v496, %v2921
    %2923 = vmatprep.mubr.bf16.mxu0 %v666
    %2924 = vmatmul.mubr.bf16.gmra.mrb[0].mxu0 %v665
    %v2925 = vpop.f32.mrb[0].mxu0
    %v2926 = vadd.f32 %v492, %v2925
    %v2927 = vpop.f32.mrb[0].mxu0
    %v2928 = vadd.f32 %v496, %v2927
    %v2929 = vpop.f32.mrb[0].mxu0
    %v2930 = vadd.f32 %v492, %v2929
    %v2931 = vpop.f32.mrb[0].mxu0
    %v2932 = vadd.f32 %v496, %v2931
    %2933 = vmatprep.mubr.bf16.mxu0 %v672
    %2934 = vmatmul.mubr.bf16.gmra.mrb[0].mxu0 %v671
    %v2935 = vpop.f32.mrb[0].mxu0
    %v2936 = vadd.f32 %v492, %v2935
    %v2937 = vpop.f32.mrb[0].mxu0
    %v2938 = vadd.f32 %v496, %v2937
    %v2939 = vpop.f32.mrb[0].mxu0
    %v2940 = vadd.f32 %v492, %v2939
    %v2941 = vpop.f32.mrb[0].mxu0
    %v2942 = vadd.f32 %v496, %v2941
    %2943 = vmatprep.mubr.bf16.mxu0 %v678
    %2944 = vmatmul.mubr.bf16.gmra.mrb[0].mxu0 %v677
    %v2945 = vpop.f32.mrb[0].mxu0
    %v2946 = vadd.f32 %v492, %v2945
    %v2947 = vpop.f32.mrb[0].mxu0
    %v2948 = vadd.f32 %v496, %v2947
    %v2949 = vpop.f32.mrb[0].mxu0
    %v2950 = vadd.f32 %v492, %v2949
    %v2951 = vpop.f32.mrb[0].mxu0
    %v2952 = vadd.f32 %v496, %v2951
    %2953 = vmatprep.mubr.bf16.mxu0 %v684
    %2954 = vmatmul.mubr.bf16.gmra.mrb[0].mxu0 %v683
    %v2955 = vpop.f32.mrb[0].mxu0
    %v2956 = vadd.f32 %v492, %v2955
    %v2957 = vpop.f32.mrb[0].mxu0
    %v2958 = vadd.f32 %v496, %v2957
    %v2959 = vpop.f32.mrb[0].mxu0
    %v2960 = vadd.f32 %v492, %v2959
    %v2961 = vpop.f32.mrb[0].mxu0
    %v2962 = vadd.f32 %v496, %v2961
    %2963 = vmatprep.mubr.bf16.mxu0 %v690
    %2964 = vmatmul.mubr.bf16.gmra.mrb[0].mxu0 %v689
    %v2965 = vpop.f32.mrb[0].mxu0
    %v2966 = vadd.f32 %v492, %v2965
    %v2967 = vpop.f32.mrb[0].mxu0
    %v2968 = vadd.f32 %v496, %v2967
    %v2969 = vpop.f32.mrb[0].mxu0
    %v2970 = vadd.f32 %v492, %v2969
    %v2971 = vpop.f32.mrb[0].mxu0
    %v2972 = vadd.f32 %v496, %v2971
    %2973 = vdwg.mxu0
    %2974 = vmatprep.subr.bf16.mxu0 %v1708
    %2975 = vmatpush1.bf16.msra.mxu0 %v1707
    %2976 = vmatprep.subr.bf16.mxu0 %v1714
    %2977 = vmatpush1.bf16.msra.mxu0 %v1713
    %2978 = vmatprep.subr.bf16.mxu0 %v1720
    %2979 = vmatpush1.bf16.msra.mxu0 %v1719
    %2980 = vmatprep.subr.bf16.mxu0 %v1726
    %2981 = vmatpush1.bf16.msra.mxu0 %v1725
    %2982 = vmatprep.subr.bf16.mxu0 %v1732
    %2983 = vmatpush1.bf16.msra.mxu0 %v1731
    %2984 = vmatprep.subr.bf16.mxu0 %v1738
    %2985 = vmatpush1.bf16.msra.mxu0 %v1737
    %2986 = vmatprep.subr.bf16.mxu0 %v1744
    %2987 = vmatpush1.bf16.msra.mxu0 %v1743
    %2988 = vmatprep.subr.bf16.mxu0 %v1750
    %2989 = vmatpush1.bf16.msra.mxu0 %v1749
    %2990 = vmatprep.subr.bf16.mxu0 %v1756
    %2991 = vmatpush1.bf16.msra.mxu0 %v1755
    %2992 = vmatprep.subr.bf16.mxu0 %v1762
    %2993 = vmatpush1.bf16.msra.mxu0 %v1761
    %2994 = vmatprep.subr.bf16.mxu0 %v1768
    %2995 = vmatpush1.bf16.msra.mxu0 %v1767
    %2996 = vmatprep.subr.bf16.mxu0 %v1774
    %2997 = vmatpush1.bf16.msra.mxu0 %v1773
    %2998 = vmatprep.subr.bf16.mxu0 %v1780
    %2999 = vmatpush1.bf16.msra.mxu0 %v1779
    %3000 = vmatprep.subr.bf16.mxu0 %v1786
    %3001 = vmatpush1.bf16.msra.mxu0 %v1785
    %3002 = vmatprep.subr.bf16.mxu0 %v1792
    %3003 = vmatpush1.bf16.msra.mxu0 %v1791
    %3004 = vmatprep.subr.bf16.mxu0 %v1798
    %3005 = vmatpush1.bf16.msra.mxu0 %v1797
    %3006 = vmatprep.mubr.bf16.mxu0 %v650
    %3007 = vmatmul.mubr.bf16.gmra.mrb[0].mxu0 %v649
    %v3008 = vpop.f32.mrb[0].mxu0
    %v3009 = vadd.f32 %v2896, %v3008
    %v3010 = vpop.f32.mrb[0].mxu0
    %v3011 = vadd.f32 %v2898, %v3010
    %v3012 = vpop.f32.mrb[0].mxu0
    %v3013 = vadd.f32 %v2900, %v3012
    %v3014 = vpop.f32.mrb[0].mxu0
    %v3015 = vadd.f32 %v2902, %v3014
    %3016 = vmatprep.mubr.bf16.mxu0 %v656
    %3017 = vmatmul.mubr.bf16.gmra.mrb[0].mxu0 %v655
    %v3018 = vpop.f32.mrb[0].mxu0
    %v3019 = vadd.f32 %v2906, %v3018
    %v3020 = vpop.f32.mrb[0].mxu0
    %v3021 = vadd.f32 %v2908, %v3020
    %v3022 = vpop.f32.mrb[0].mxu0
    %v3023 = vadd.f32 %v2910, %v3022
    %v3024 = vpop.f32.mrb[0].mxu0
    %v3025 = vadd.f32 %v2912, %v3024
    %3026 = vmatprep.mubr.bf16.mxu0 %v662
    %3027 = vmatmul.mubr.bf16.gmra.mrb[0].mxu0 %v661
    %v3028 = vpop.f32.mrb[0].mxu0
    %v3029 = vadd.f32 %v2916, %v3028
    %v3030 = vpop.f32.mrb[0].mxu0
    %v3031 = vadd.f32 %v2918, %v3030
    %v3032 = vpop.f32.mrb[0].mxu0
    %v3033 = vadd.f32 %v2920, %v3032
    %v3034 = vpop.f32.mrb[0].mxu0
    %v3035 = vadd.f32 %v2922, %v3034
    %3036 = vmatprep.mubr.bf16.mxu0 %v668
    %3037 = vmatmul.mubr.bf16.gmra.mrb[0].mxu0 %v667
    %v3038 = vpop.f32.mrb[0].mxu0
    %v3039 = vadd.f32 %v2926, %v3038
    %v3040 = vpop.f32.mrb[0].mxu0
    %v3041 = vadd.f32 %v2928, %v3040
    %v3042 = vpop.f32.mrb[0].mxu0
    %v3043 = vadd.f32 %v2930, %v3042
    %v3044 = vpop.f32.mrb[0].mxu0
    %v3045 = vadd.f32 %v2932, %v3044
    %3046 = vmatprep.mubr.bf16.mxu0 %v674
    %3047 = vmatmul.mubr.bf16.gmra.mrb[0].mxu0 %v673
    %v3048 = vpop.f32.mrb[0].mxu0
    %v3049 = vadd.f32 %v2936, %v3048
    %v3050 = vpop.f32.mrb[0].mxu0
    %v3051 = vadd.f32 %v2938, %v3050
    %v3052 = vpop.f32.mrb[0].mxu0
    %v3053 = vadd.f32 %v2940, %v3052
    %v3054 = vpop.f32.mrb[0].mxu0
    %v3055 = vadd.f32 %v2942, %v3054
    %3056 = vmatprep.mubr.bf16.mxu0 %v680
    %3057 = vmatmul.mubr.bf16.gmra.mrb[0].mxu0 %v679
    %v3058 = vpop.f32.mrb[0].mxu0
    %v3059 = vadd.f32 %v2946, %v3058
    %v3060 = vpop.f32.mrb[0].mxu0
    %v3061 = vadd.f32 %v2948, %v3060
    %v3062 = vpop.f32.mrb[0].mxu0
    %v3063 = vadd.f32 %v2950, %v3062
    %v3064 = vpop.f32.mrb[0].mxu0
    %v3065 = vadd.f32 %v2952, %v3064
    %3066 = vmatprep.mubr.bf16.mxu0 %v686
    %3067 = vmatmul.mubr.bf16.gmra.mrb[0].mxu0 %v685
    %v3068 = vpop.f32.mrb[0].mxu0
    %v3069 = vadd.f32 %v2956, %v3068
    %v3070 = vpop.f32.mrb[0].mxu0
    %v3071 = vadd.f32 %v2958, %v3070
    %v3072 = vpop.f32.mrb[0].mxu0
    %v3073 = vadd.f32 %v2960, %v3072
    %v3074 = vpop.f32.mrb[0].mxu0
    %v3075 = vadd.f32 %v2962, %v3074
    %3076 = vmatprep.mubr.bf16.mxu0 %v692
    %3077 = vmatmul.mubr.bf16.gmra.mrb[0].mxu0 %v691
    %v3078 = vpop.f32.mrb[0].mxu0
    %v3079 = vadd.f32 %v2966, %v3078
    %v3080 = vpop.f32.mrb[0].mxu0
    %v3081 = vadd.f32 %v2968, %v3080
    %v3082 = vpop.f32.mrb[0].mxu0
    %v3083 = vadd.f32 %v2970, %v3082
    %v3084 = vpop.f32.mrb[0].mxu0
    %v3085 = vadd.f32 %v2972, %v3084
    %3086 = vdwg.mxu0
    %3087 = vmatprep.subr.bf16.mxu0 %v1804
    %3088 = vmatpush1.bf16.msra.mxu0 %v1803
    %3089 = vmatprep.subr.bf16.mxu0 %v1810
    %3090 = vmatpush1.bf16.msra.mxu0 %v1809
    %3091 = vmatprep.subr.bf16.mxu0 %v1816
    %3092 = vmatpush1.bf16.msra.mxu0 %v1815
    %3093 = vmatprep.subr.bf16.mxu0 %v1822
    %3094 = vmatpush1.bf16.msra.mxu0 %v1821
    %3095 = vmatprep.subr.bf16.mxu0 %v1828
    %3096 = vmatpush1.bf16.msra.mxu0 %v1827
    %3097 = vmatprep.subr.bf16.mxu0 %v1834
    %3098 = vmatpush1.bf16.msra.mxu0 %v1833
    %3099 = vmatprep.subr.bf16.mxu0 %v1840
    %3100 = vmatpush1.bf16.msra.mxu0 %v1839
    %3101 = vmatprep.subr.bf16.mxu0 %v1846
    %3102 = vmatpush1.bf16.msra.mxu0 %v1845
    %3103 = vmatprep.subr.bf16.mxu0 %v1852
    %3104 = vmatpush1.bf16.msra.mxu0 %v1851
    %3105 = vmatprep.subr.bf16.mxu0 %v1858
    %3106 = vmatpush1.bf16.msra.mxu0 %v1857
    %3107 = vmatprep.subr.bf16.mxu0 %v1864
    %3108 = vmatpush1.bf16.msra.mxu0 %v1863
    %3109 = vmatprep.subr.bf16.mxu0 %v1870
    %3110 = vmatpush1.bf16.msra.mxu0 %v1869
    %3111 = vmatprep.subr.bf16.mxu0 %v1876
    %3112 = vmatpush1.bf16.msra.mxu0 %v1875
    %3113 = vmatprep.subr.bf16.mxu0 %v1882
    %3114 = vmatpush1.bf16.msra.mxu0 %v1881
    %3115 = vmatprep.subr.bf16.mxu0 %v1888
    %3116 = vmatpush1.bf16.msra.mxu0 %v1887
    %3117 = vmatprep.subr.bf16.mxu0 %v1894
    %3118 = vmatpush1.bf16.msra.mxu0 %v1893
    %3119 = vmatprep.mubr.bf16.mxu0 %v652
    %3120 = vmatmul.mubr.bf16.gmra.mrb[0].mxu0 %v651
    %v3121 = vpop.f32.mrb[0].mxu0
    %v3122 = vadd.f32 %v3009, %v3121
    %v3123 = vpop.f32.mrb[0].mxu0
    %v3124 = vadd.f32 %v3011, %v3123
    %v3125 = vpop.f32.mrb[0].mxu0
    %v3126 = vadd.f32 %v3013, %v3125
    %v3127 = vpop.f32.mrb[0].mxu0
    %v3128 = vadd.f32 %v3015, %v3127
    %3129 = vmatprep.mubr.bf16.mxu0 %v658
    %3130 = vmatmul.mubr.bf16.gmra.mrb[0].mxu0 %v657
    %v3131 = vpop.f32.mrb[0].mxu0
    %v3132 = vadd.f32 %v3019, %v3131
    %v3133 = vpop.f32.mrb[0].mxu0
    %v3134 = vadd.f32 %v3021, %v3133
    %v3135 = vpop.f32.mrb[0].mxu0
    %v3136 = vadd.f32 %v3023, %v3135
    %v3137 = vpop.f32.mrb[0].mxu0
    %v3138 = vadd.f32 %v3025, %v3137
    %3139 = vmatprep.mubr.bf16.mxu0 %v664
    %3140 = vmatmul.mubr.bf16.gmra.mrb[0].mxu0 %v663
    %v3141 = vpop.f32.mrb[0].mxu0
    %v3142 = vadd.f32 %v3029, %v3141
    %v3143 = vpop.f32.mrb[0].mxu0
    %v3144 = vadd.f32 %v3031, %v3143
    %v3145 = vpop.f32.mrb[0].mxu0
    %v3146 = vadd.f32 %v3033, %v3145
    %v3147 = vpop.f32.mrb[0].mxu0
    %v3148 = vadd.f32 %v3035, %v3147
    %3149 = vmatprep.mubr.bf16.mxu0 %v670
    %3150 = vmatmul.mubr.bf16.gmra.mrb[0].mxu0 %v669
    %v3151 = vpop.f32.mrb[0].mxu0
    %v3152 = vadd.f32 %v3039, %v3151
    %v3153 = vpop.f32.mrb[0].mxu0
    %v3154 = vadd.f32 %v3041, %v3153
    %v3155 = vpop.f32.mrb[0].mxu0
    %v3156 = vadd.f32 %v3043, %v3155
    %v3157 = vpop.f32.mrb[0].mxu0
    %v3158 = vadd.f32 %v3045, %v3157
    %3159 = vmatprep.mubr.bf16.mxu0 %v676
    %3160 = vmatmul.mubr.bf16.gmra.mrb[0].mxu0 %v675
    %v3161 = vpop.f32.mrb[0].mxu0
    %v3162 = vadd.f32 %v3049, %v3161
    %v3163 = vpop.f32.mrb[0].mxu0
    %v3164 = vadd.f32 %v3051, %v3163
    %v3165 = vpop.f32.mrb[0].mxu0
    %v3166 = vadd.f32 %v3053, %v3165
    %v3167 = vpop.f32.mrb[0].mxu0
    %v3168 = vadd.f32 %v3055, %v3167
    %3169 = vmatprep.mubr.bf16.mxu0 %v682
    %3170 = vmatmul.mubr.bf16.gmra.mrb[0].mxu0 %v681
    %v3171 = vpop.f32.mrb[0].mxu0
    %v3172 = vadd.f32 %v3059, %v3171
    %v3173 = vpop.f32.mrb[0].mxu0
    %v3174 = vadd.f32 %v3061, %v3173
    %v3175 = vpop.f32.mrb[0].mxu0
    %v3176 = vadd.f32 %v3063, %v3175
    %v3177 = vpop.f32.mrb[0].mxu0
    %v3178 = vadd.f32 %v3065, %v3177
    %3179 = vmatprep.mubr.bf16.mxu0 %v688
    %3180 = vmatmul.mubr.bf16.gmra.mrb[0].mxu0 %v687
    %v3181 = vpop.f32.mrb[0].mxu0
    %v3182 = vadd.f32 %v3069, %v3181
    %v3183 = vpop.f32.mrb[0].mxu0
    %v3184 = vadd.f32 %v3071, %v3183
    %v3185 = vpop.f32.mrb[0].mxu0
    %v3186 = vadd.f32 %v3073, %v3185
    %v3187 = vpop.f32.mrb[0].mxu0
    %v3188 = vadd.f32 %v3075, %v3187
    %3189 = vmatprep.mubr.bf16.mxu0 %v694
    %3190 = vmatmul.mubr.bf16.gmra.mrb[0].mxu0 %v693
    %v3191 = vpop.f32.mrb[0].mxu0
    %v3192 = vadd.f32 %v3079, %v3191
    %v3193 = vpop.f32.mrb[0].mxu0
    %v3194 = vadd.f32 %v3081, %v3193
    %v3195 = vpop.f32.mrb[0].mxu0
    %v3196 = vadd.f32 %v3083, %v3195
    %v3197 = vpop.f32.mrb[0].mxu0
    %v3198 = vadd.f32 %v3085, %v3197
    %3199 = vdwg.mxu0
    %v3200 = vpack.c.bf16 %v2448, %v2444
    %v3201 = vpack.c.bf16 %v2450, %v2446
    %v3202 = vpack.c.bf16 %v2787, %v2783
    %v3203 = vpack.c.bf16 %v2789, %v2785
    %v3204 = vpack.c.bf16 %v3126, %v3122
    %v3205 = vpack.c.bf16 %v3128, %v3124
    %v3206 = vpack.c.bf16 %v2458, %v2454
    %v3207 = vpack.c.bf16 %v2460, %v2456
    %v3208 = vpack.c.bf16 %v2797, %v2793
    %v3209 = vpack.c.bf16 %v2799, %v2795
    %v3210 = vpack.c.bf16 %v3136, %v3132
    %v3211 = vpack.c.bf16 %v3138, %v3134
    %v3212 = vpack.c.bf16 %v2468, %v2464
    %v3213 = vpack.c.bf16 %v2470, %v2466
    %v3214 = vpack.c.bf16 %v2807, %v2803
    %v3215 = vpack.c.bf16 %v2809, %v2805
    %v3216 = vpack.c.bf16 %v3146, %v3142
    %v3217 = vpack.c.bf16 %v3148, %v3144
    %v3218 = vpack.c.bf16 %v2478, %v2474
    %v3219 = vpack.c.bf16 %v2480, %v2476
    %v3220 = vpack.c.bf16 %v2817, %v2813
    %v3221 = vpack.c.bf16 %v2819, %v2815
    %v3222 = vpack.c.bf16 %v3156, %v3152
    %v3223 = vpack.c.bf16 %v3158, %v3154
    %v3224 = vpack.c.bf16 %v2488, %v2484
    %v3225 = vpack.c.bf16 %v2490, %v2486
    %v3226 = vpack.c.bf16 %v2827, %v2823
    %v3227 = vpack.c.bf16 %v2829, %v2825
    %v3228 = vpack.c.bf16 %v3166, %v3162
    %v3229 = vpack.c.bf16 %v3168, %v3164
    %v3230 = vpack.c.bf16 %v2498, %v2494
    %v3231 = vpack.c.bf16 %v2500, %v2496
    %v3232 = vpack.c.bf16 %v2837, %v2833
    %v3233 = vpack.c.bf16 %v2839, %v2835
    %v3234 = vpack.c.bf16 %v3176, %v3172
    %v3235 = vpack.c.bf16 %v3178, %v3174
    %v3236 = vpack.c.bf16 %v2508, %v2504
    %v3237 = vpack.c.bf16 %v2510, %v2506
    %v3238 = vpack.c.bf16 %v2847, %v2843
    %v3239 = vpack.c.bf16 %v2849, %v2845
    %v3240 = vpack.c.bf16 %v3186, %v3182
    %v3241 = vpack.c.bf16 %v3188, %v3184
    %v3242 = vpack.c.bf16 %v2518, %v2514
    %v3243 = vpack.c.bf16 %v2520, %v2516
    %v3244 = vpack.c.bf16 %v2857, %v2853
    %v3245 = vpack.c.bf16 %v2859, %v2855
    %v3246 = vpack.c.bf16 %v3196, %v3192
    %v3247 = vpack.c.bf16 %v3198, %v3194
    %v3248 = vtanh.bf16.pop %v3200
    %v3249 = vtanh.bf16.pop %v3201
    %v3250 = vtanh.bf16.pop %v3202
    %v3251 = vtanh.bf16.pop %v3203
    %v3252 = vtanh.bf16.pop %v3204
    %v3253 = vtanh.bf16.pop %v3205
    %v3254 = vtanh.bf16.pop %v3206
    %v3255 = vtanh.bf16.pop %v3207
    %v3256 = vtanh.bf16.pop %v3208
    %v3257 = vtanh.bf16.pop %v3209
    %v3258 = vtanh.bf16.pop %v3210
    %v3259 = vtanh.bf16.pop %v3211
    %v3260 = vtanh.bf16.pop %v3212
    %v3261 = vtanh.bf16.pop %v3213
    %v3262 = vtanh.bf16.pop %v3214
    %v3263 = vtanh.bf16.pop %v3215
    %v3264 = vtanh.bf16.pop %v3216
    %v3265 = vtanh.bf16.pop %v3217
    %v3266 = vtanh.bf16.pop %v3218
    %v3267 = vtanh.bf16.pop %v3219
    %v3268 = vtanh.bf16.pop %v3220
    %v3269 = vtanh.bf16.pop %v3221
    %v3270 = vtanh.bf16.pop %v3222
    %v3271 = vtanh.bf16.pop %v3223
    %v3272 = vtanh.bf16.pop %v3224
    %v3273 = vtanh.bf16.pop %v3225
    %v3274 = vtanh.bf16.pop %v3226
    %v3275 = vtanh.bf16.pop %v3227
    %v3276 = vtanh.bf16.pop %v3228
    %v3277 = vtanh.bf16.pop %v3229
    %v3278 = vtanh.bf16.pop %v3230
    %v3279 = vtanh.bf16.pop %v3231
    %v3280 = vtanh.bf16.pop %v3232
    %v3281 = vtanh.bf16.pop %v3233
    %v3282 = vtanh.bf16.pop %v3234
    %v3283 = vtanh.bf16.pop %v3235
    %v3284 = vtanh.bf16.pop %v3236
    %v3285 = vtanh.bf16.pop %v3237
    %v3286 = vtanh.bf16.pop %v3238
    %v3287 = vtanh.bf16.pop %v3239
    %v3288 = vtanh.bf16.pop %v3240
    %v3289 = vtanh.bf16.pop %v3241
    %v3290 = vtanh.bf16.pop %v3242
    %v3291 = vtanh.bf16.pop %v3243
    %v3292 = vtanh.bf16.pop %v3244
    %v3293 = vtanh.bf16.pop %v3245
    %v3294 = vtanh.bf16.pop %v3246
    %v3295 = vtanh.bf16.pop %v3247
    %v3296 = vld [vmem:[#allocation8] sm:$0xf]
    %v3297 = vld [vmem:[#allocation8 + $0x4] sm:$0xf]
    %v3298 = vld [vmem:[#allocation8 + $0x8] sm:$0xf]
    %v3299 = vld [vmem:[#allocation8 + $0xc] sm:$0xf]
    %v3300 = vld [vmem:[#allocation8 + $0x10] sm:$0xf]
    %v3301 = vld [vmem:[#allocation8 + $0x14] sm:$0xf]
    %v3302 = vld [vmem:[#allocation8 + $0x18] sm:$0xf]
    %v3303 = vld [vmem:[#allocation8 + $0x1c] sm:$0xf]
    %v3304 = vld [vmem:[#allocation8 + $0x20] sm:$0xf]
    %v3305 = vld [vmem:[#allocation8 + $0x24] sm:$0xf]
    %v3306 = vld [vmem:[#allocation8 + $0x28] sm:$0xf]
    %v3307 = vld [vmem:[#allocation8 + $0x2c] sm:$0xf]
    %v3308 = vld [vmem:[#allocation8 + $0x30] sm:$0xf]
    %v3309 = vld [vmem:[#allocation8 + $0x34] sm:$0xf]
    %v3310 = vld [vmem:[#allocation8 + $0x38] sm:$0xf]
    %v3311 = vld [vmem:[#allocation8 + $0x3c] sm:$0xf]
    %v3312 = vld [vmem:[#allocation8 + $0x40] sm:$0xf]
    %v3313 = vld [vmem:[#allocation8 + $0x44] sm:$0xf]
    %v3314 = vld [vmem:[#allocation8 + $0x48] sm:$0xf]
    %v3315 = vld [vmem:[#allocation8 + $0x4c] sm:$0xf]
    %v3316 = vld [vmem:[#allocation8 + $0x50] sm:$0xf]
    %v3317 = vld [vmem:[#allocation8 + $0x54] sm:$0xf]
    %v3318 = vld [vmem:[#allocation8 + $0x58] sm:$0xf]
    %v3319 = vld [vmem:[#allocation8 + $0x5c] sm:$0xf]
    %v3320 = vld [vmem:[#allocation8 + $0x60] sm:$0xf]
    %v3321 = vld [vmem:[#allocation8 + $0x64] sm:$0xf]
    %v3322 = vld [vmem:[#allocation8 + $0x68] sm:$0xf]
    %v3323 = vld [vmem:[#allocation8 + $0x6c] sm:$0xf]
    %v3324 = vld [vmem:[#allocation8 + $0x70] sm:$0xf]
    %v3325 = vld [vmem:[#allocation8 + $0x74] sm:$0xf]
    %v3326 = vld [vmem:[#allocation8 + $0x78] sm:$0xf]
    %v3327 = vld [vmem:[#allocation8 + $0x7c] sm:$0xf]
    %v3328 = vld [vmem:[#allocation8 + $0x80] sm:$0xf]
    %v3329 = vld [vmem:[#allocation8 + $0x84] sm:$0xf]
    %v3330 = vld [vmem:[#allocation8 + $0x88] sm:$0xf]
    %v3331 = vld [vmem:[#allocation8 + $0x8c] sm:$0xf]
    %v3332 = vld [vmem:[#allocation8 + $0x90] sm:$0xf]
    %v3333 = vld [vmem:[#allocation8 + $0x94] sm:$0xf]
    %v3334 = vld [vmem:[#allocation8 + $0x98] sm:$0xf]
    %v3335 = vld [vmem:[#allocation8 + $0x9c] sm:$0xf]
    %v3336 = vld [vmem:[#allocation8 + $0xa0] sm:$0xf]
    %v3337 = vld [vmem:[#allocation8 + $0xa4] sm:$0xf]
    %v3338 = vld [vmem:[#allocation8 + $0xa8] sm:$0xf]
    %v3339 = vld [vmem:[#allocation8 + $0xac] sm:$0xf]
    %v3340 = vld [vmem:[#allocation8 + $0xb0] sm:$0xf]
    %v3341 = vld [vmem:[#allocation8 + $0xb4] sm:$0xf]
    %v3342 = vld [vmem:[#allocation8 + $0xb8] sm:$0xf]
    %v3343 = vld [vmem:[#allocation8 + $0xbc] sm:$0xf]
    %v3344 = vld [vmem:[#allocation8 + $0xc0] sm:$0xf]
    %v3345 = vld [vmem:[#allocation8 + $0xc4] sm:$0xf]
    %v3346 = vld [vmem:[#allocation8 + $0xc8] sm:$0xf]
    %v3347 = vld [vmem:[#allocation8 + $0xcc] sm:$0xf]
    %v3348 = vld [vmem:[#allocation8 + $0xd0] sm:$0xf]
    %v3349 = vld [vmem:[#allocation8 + $0xd4] sm:$0xf]
    %v3350 = vld [vmem:[#allocation8 + $0xd8] sm:$0xf]
    %v3351 = vld [vmem:[#allocation8 + $0xdc] sm:$0xf]
    %v3352 = vld [vmem:[#allocation8 + $0xe0] sm:$0xf]
    %v3353 = vld [vmem:[#allocation8 + $0xe4] sm:$0xf]
    %v3354 = vld [vmem:[#allocation8 + $0xe8] sm:$0xf]
    %v3355 = vld [vmem:[#allocation8 + $0xec] sm:$0xf]
    %v3356 = vld [vmem:[#allocation8 + $0xf0] sm:$0xf]
    %v3357 = vld [vmem:[#allocation8 + $0xf4] sm:$0xf]
    %v3358 = vld [vmem:[#allocation8 + $0xf8] sm:$0xf]
    %v3359 = vld [vmem:[#allocation8 + $0xfc] sm:$0xf]
    %v3360 = vld [vmem:[#allocation8 + $0x100] sm:$0xf]
    %v3361 = vld [vmem:[#allocation8 + $0x104] sm:$0xf]
    %v3362 = vld [vmem:[#allocation8 + $0x108] sm:$0xf]
    %v3363 = vld [vmem:[#allocation8 + $0x10c] sm:$0xf]
    %v3364 = vld [vmem:[#allocation8 + $0x110] sm:$0xf]
    %v3365 = vld [vmem:[#allocation8 + $0x114] sm:$0xf]
    %v3366 = vld [vmem:[#allocation8 + $0x118] sm:$0xf]
    %v3367 = vld [vmem:[#allocation8 + $0x11c] sm:$0xf]
    %v3368 = vld [vmem:[#allocation8 + $0x120] sm:$0xf]
    %v3369 = vld [vmem:[#allocation8 + $0x124] sm:$0xf]
    %v3370 = vld [vmem:[#allocation8 + $0x128] sm:$0xf]
    %v3371 = vld [vmem:[#allocation8 + $0x12c] sm:$0xf]
    %v3372 = vld [vmem:[#allocation8 + $0x130] sm:$0xf]
    %v3373 = vld [vmem:[#allocation8 + $0x134] sm:$0xf]
    %v3374 = vld [vmem:[#allocation8 + $0x138] sm:$0xf]
    %v3375 = vld [vmem:[#allocation8 + $0x13c] sm:$0xf]
    %v3376 = vld [vmem:[#allocation8 + $0x140] sm:$0xf]
    %v3377 = vld [vmem:[#allocation8 + $0x144] sm:$0xf]
    %v3378 = vld [vmem:[#allocation8 + $0x148] sm:$0xf]
    %v3379 = vld [vmem:[#allocation8 + $0x14c] sm:$0xf]
    %v3380 = vld [vmem:[#allocation8 + $0x150] sm:$0xf]
    %v3381 = vld [vmem:[#allocation8 + $0x154] sm:$0xf]
    %v3382 = vld [vmem:[#allocation8 + $0x158] sm:$0xf]
    %v3383 = vld [vmem:[#allocation8 + $0x15c] sm:$0xf]
    %v3384 = vld [vmem:[#allocation8 + $0x160] sm:$0xf]
    %v3385 = vld [vmem:[#allocation8 + $0x164] sm:$0xf]
    %v3386 = vld [vmem:[#allocation8 + $0x168] sm:$0xf]
    %v3387 = vld [vmem:[#allocation8 + $0x16c] sm:$0xf]
    %v3388 = vld [vmem:[#allocation8 + $0x170] sm:$0xf]
    %v3389 = vld [vmem:[#allocation8 + $0x174] sm:$0xf]
    %v3390 = vld [vmem:[#allocation8 + $0x178] sm:$0xf]
    %v3391 = vld [vmem:[#allocation8 + $0x17c] sm:$0xf]
    %v3392 = vld [vmem:[%s1] sm:$0xff]
    %v3393 = vld [vmem:[%s1 + $0x8] sm:$0xff]
    %v3394 = vld [vmem:[%s1 + $0x10] sm:$0xff]
    %v3395 = vld [vmem:[%s1 + $0x18] sm:$0xff]
    %v3396 = vld [vmem:[%s1 + $0x20] sm:$0xff]
    %v3397 = vld [vmem:[%s1 + $0x28] sm:$0xff]
    %v3398 = vld [vmem:[%s1 + $0x30] sm:$0xff]
    %v3399 = vld [vmem:[%s1 + $0x38] sm:$0xff]
    %v3400 = vld [vmem:[%s1 + $0x40] sm:$0xff]
    %v3401 = vld [vmem:[%s1 + $0x48] sm:$0xff]
    %v3402 = vld [vmem:[%s1 + $0x50] sm:$0xff]
    %v3403 = vld [vmem:[%s1 + $0x58] sm:$0xff]
    %v3404 = vld [vmem:[%s1 + $0x60] sm:$0xff]
    %v3405 = vld [vmem:[%s1 + $0x68] sm:$0xff]
    %v3406 = vld [vmem:[%s1 + $0x70] sm:$0xff]
    %v3407 = vld [vmem:[%s1 + $0x78] sm:$0xff]
    %v3408 = vld [vmem:[#allocation10] sm:$0x1]
    %3410 = vset.pattern.permute.xlu0 0
    %3411 = vperm.xlu0 %3410, %v3392
    %v3412 = vpop.permute.xlu0 %3411
    %3415 = vset.pattern.permute.xlu0 0
    %3416 = vperm.xlu0 %3415, %v3393
    %v3417 = vpop.permute.xlu0 %3416
    %3420 = vset.pattern.permute.xlu0 0
    %3421 = vperm.xlu0 %3420, %v3394
    %v3422 = vpop.permute.xlu0 %3421
    %3425 = vset.pattern.permute.xlu0 0
    %3426 = vperm.xlu0 %3425, %v3395
    %v3427 = vpop.permute.xlu0 %3426
    %3430 = vset.pattern.permute.xlu0 0
    %3431 = vperm.xlu0 %3430, %v3396
    %v3432 = vpop.permute.xlu0 %3431
    %3435 = vset.pattern.permute.xlu0 0
    %3436 = vperm.xlu0 %3435, %v3397
    %v3437 = vpop.permute.xlu0 %3436
    %3440 = vset.pattern.permute.xlu0 0
    %3441 = vperm.xlu0 %3440, %v3398
    %v3442 = vpop.permute.xlu0 %3441
    %3445 = vset.pattern.permute.xlu0 0
    %3446 = vperm.xlu0 %3445, %v3399
    %v3447 = vpop.permute.xlu0 %3446
    %3450 = vset.pattern.permute.xlu0 0
    %3451 = vperm.xlu0 %3450, %v3400
    %v3452 = vpop.permute.xlu0 %3451
    %3455 = vset.pattern.permute.xlu0 0
    %3456 = vperm.xlu0 %3455, %v3401
    %v3457 = vpop.permute.xlu0 %3456
    %3460 = vset.pattern.permute.xlu0 0
    %3461 = vperm.xlu0 %3460, %v3402
    %v3462 = vpop.permute.xlu0 %3461
    %3465 = vset.pattern.permute.xlu0 0
    %3466 = vperm.xlu0 %3465, %v3403
    %v3467 = vpop.permute.xlu0 %3466
    %3470 = vset.pattern.permute.xlu0 0
    %3471 = vperm.xlu0 %3470, %v3404
    %v3472 = vpop.permute.xlu0 %3471
    %3475 = vset.pattern.permute.xlu0 0
    %3476 = vperm.xlu0 %3475, %v3405
    %v3477 = vpop.permute.xlu0 %3476
    %3480 = vset.pattern.permute.xlu0 0
    %3481 = vperm.xlu0 %3480, %v3406
    %v3482 = vpop.permute.xlu0 %3481
    %3485 = vset.pattern.permute.xlu0 0
    %3486 = vperm.xlu0 %3485, %v3407
    %v3487 = vpop.permute.xlu0 %3486
    %v3490 = vlaneseq
    %v3491 = vshrl.u32 %v3490, 7
    %v3492 = vsub.s32 0, %v3491
    %v3493 = vrot.slane %v3408, %v3492
    %v3495 = vmul.f32 %v3412, %v3493
    %v3496 = vmul.f32 %v3417, %v3493
    %v3497 = vmul.f32 %v3422, %v3493
    %v3498 = vmul.f32 %v3427, %v3493
    %v3499 = vmul.f32 %v3432, %v3493
    %v3500 = vmul.f32 %v3437, %v3493
    %v3501 = vmul.f32 %v3442, %v3493
    %v3502 = vmul.f32 %v3447, %v3493
    %v3503 = vmul.f32 %v3452, %v3493
    %v3504 = vmul.f32 %v3457, %v3493
    %v3505 = vmul.f32 %v3462, %v3493
    %v3506 = vmul.f32 %v3467, %v3493
    %v3507 = vmul.f32 %v3472, %v3493
    %v3508 = vmul.f32 %v3477, %v3493
    %v3509 = vmul.f32 %v3482, %v3493
    %v3510 = vmul.f32 %v3487, %v3493
    %v3607 = vunpack.c.l.b16 %v3296
    %v3608 = vunpack.c.l.b16 %v3297
    %v3609 = vunpack.c.l.b16 %v3298
    %v3610 = vunpack.c.l.b16 %v3299
    %v3611 = vunpack.c.l.b16 %v3300
    %v3612 = vunpack.c.l.b16 %v3301
    %v3613 = vunpack.c.l.b16 %v3302
    %v3614 = vunpack.c.l.b16 %v3303
    %v3615 = vunpack.c.l.b16 %v3304
    %v3616 = vunpack.c.l.b16 %v3305
    %v3617 = vunpack.c.l.b16 %v3306
    %v3618 = vunpack.c.l.b16 %v3307
    %v3619 = vunpack.c.l.b16 %v3308
    %v3620 = vunpack.c.l.b16 %v3309
    %v3621 = vunpack.c.l.b16 %v3310
    %v3622 = vunpack.c.l.b16 %v3311
    %v3623 = vunpack.c.l.b16 %v3312
    %v3624 = vunpack.c.l.b16 %v3313
    %v3625 = vunpack.c.l.b16 %v3314
    %v3626 = vunpack.c.l.b16 %v3315
    %v3627 = vunpack.c.l.b16 %v3316
    %v3628 = vunpack.c.l.b16 %v3317
    %v3629 = vunpack.c.l.b16 %v3318
    %v3630 = vunpack.c.l.b16 %v3319
    %v3631 = vunpack.c.l.b16 %v3320
    %v3632 = vunpack.c.l.b16 %v3321
    %v3633 = vunpack.c.l.b16 %v3322
    %v3634 = vunpack.c.l.b16 %v3323
    %v3635 = vunpack.c.l.b16 %v3324
    %v3636 = vunpack.c.l.b16 %v3325
    %v3637 = vunpack.c.l.b16 %v3326
    %v3638 = vunpack.c.l.b16 %v3327
    %v3639 = vunpack.c.l.b16 %v3328
    %v3640 = vunpack.c.l.b16 %v3329
    %v3641 = vunpack.c.l.b16 %v3330
    %v3642 = vunpack.c.l.b16 %v3331
    %v3643 = vunpack.c.l.b16 %v3332
    %v3644 = vunpack.c.l.b16 %v3333
    %v3645 = vunpack.c.l.b16 %v3334
    %v3646 = vunpack.c.l.b16 %v3335
    %v3647 = vunpack.c.l.b16 %v3336
    %v3648 = vunpack.c.l.b16 %v3337
    %v3649 = vunpack.c.l.b16 %v3338
    %v3650 = vunpack.c.l.b16 %v3339
    %v3651 = vunpack.c.l.b16 %v3340
    %v3652 = vunpack.c.l.b16 %v3341
    %v3653 = vunpack.c.l.b16 %v3342
    %v3654 = vunpack.c.l.b16 %v3343
    %v3655 = vunpack.c.l.b16 %v3344
    %v3656 = vunpack.c.l.b16 %v3345
    %v3657 = vunpack.c.l.b16 %v3346
    %v3658 = vunpack.c.l.b16 %v3347
    %v3659 = vunpack.c.l.b16 %v3348
    %v3660 = vunpack.c.l.b16 %v3349
    %v3661 = vunpack.c.l.b16 %v3350
    %v3662 = vunpack.c.l.b16 %v3351
    %v3663 = vunpack.c.l.b16 %v3352
    %v3664 = vunpack.c.l.b16 %v3353
    %v3665 = vunpack.c.l.b16 %v3354
    %v3666 = vunpack.c.l.b16 %v3355
    %v3667 = vunpack.c.l.b16 %v3356
    %v3668 = vunpack.c.l.b16 %v3357
    %v3669 = vunpack.c.l.b16 %v3358
    %v3670 = vunpack.c.l.b16 %v3359
    %v3671 = vunpack.c.l.b16 %v3360
    %v3672 = vunpack.c.l.b16 %v3361
    %v3673 = vunpack.c.l.b16 %v3362
    %v3674 = vunpack.c.l.b16 %v3363
    %v3675 = vunpack.c.l.b16 %v3364
    %v3676 = vunpack.c.l.b16 %v3365
    %v3677 = vunpack.c.l.b16 %v3366
    %v3678 = vunpack.c.l.b16 %v3367
    %v3679 = vunpack.c.l.b16 %v3368
    %v3680 = vunpack.c.l.b16 %v3369
    %v3681 = vunpack.c.l.b16 %v3370
    %v3682 = vunpack.c.l.b16 %v3371
    %v3683 = vunpack.c.l.b16 %v3372
    %v3684 = vunpack.c.l.b16 %v3373
    %v3685 = vunpack.c.l.b16 %v3374
    %v3686 = vunpack.c.l.b16 %v3375
    %v3687 = vunpack.c.l.b16 %v3376
    %v3688 = vunpack.c.l.b16 %v3377
    %v3689 = vunpack.c.l.b16 %v3378
    %v3690 = vunpack.c.l.b16 %v3379
    %v3691 = vunpack.c.l.b16 %v3380
    %v3692 = vunpack.c.l.b16 %v3381
    %v3693 = vunpack.c.l.b16 %v3382
    %v3694 = vunpack.c.l.b16 %v3383
    %v3695 = vunpack.c.l.b16 %v3384
    %v3696 = vunpack.c.l.b16 %v3385
    %v3697 = vunpack.c.l.b16 %v3386
    %v3698 = vunpack.c.l.b16 %v3387
    %v3699 = vunpack.c.l.b16 %v3388
    %v3700 = vunpack.c.l.b16 %v3389
    %v3701 = vunpack.c.l.b16 %v3390
    %v3702 = vunpack.c.l.b16 %v3391
    %v3703 = vpack.c.b16 %v3608, %v3607
    %v3704 = vpack.c.b16 %v3610, %v3609
    %v3705 = vpack.c.b16 %v3612, %v3611
    %v3706 = vpack.c.b16 %v3614, %v3613
    %v3707 = vpack.c.b16 %v3616, %v3615
    %v3708 = vpack.c.b16 %v3618, %v3617
    %v3709 = vpack.c.b16 %v3620, %v3619
    %v3710 = vpack.c.b16 %v3622, %v3621
    %v3711 = vpack.c.b16 %v3624, %v3623
    %v3712 = vpack.c.b16 %v3626, %v3625
    %v3713 = vpack.c.b16 %v3628, %v3627
    %v3714 = vpack.c.b16 %v3630, %v3629
    %v3715 = vpack.c.b16 %v3632, %v3631
    %v3716 = vpack.c.b16 %v3634, %v3633
    %v3717 = vpack.c.b16 %v3636, %v3635
    %v3718 = vpack.c.b16 %v3638, %v3637
    %v3719 = vpack.c.b16 %v3640, %v3639
    %v3720 = vpack.c.b16 %v3642, %v3641
    %v3721 = vpack.c.b16 %v3644, %v3643
    %v3722 = vpack.c.b16 %v3646, %v3645
    %v3723 = vpack.c.b16 %v3648, %v3647
    %v3724 = vpack.c.b16 %v3650, %v3649
    %v3725 = vpack.c.b16 %v3652, %v3651
    %v3726 = vpack.c.b16 %v3654, %v3653
    %v3727 = vpack.c.b16 %v3656, %v3655
    %v3728 = vpack.c.b16 %v3658, %v3657
    %v3729 = vpack.c.b16 %v3660, %v3659
    %v3730 = vpack.c.b16 %v3662, %v3661
    %v3731 = vpack.c.b16 %v3664, %v3663
    %v3732 = vpack.c.b16 %v3666, %v3665
    %v3733 = vpack.c.b16 %v3668, %v3667
    %v3734 = vpack.c.b16 %v3670, %v3669
    %v3735 = vpack.c.b16 %v3672, %v3671
    %v3736 = vpack.c.b16 %v3674, %v3673
    %v3737 = vpack.c.b16 %v3676, %v3675
    %v3738 = vpack.c.b16 %v3678, %v3677
    %v3739 = vpack.c.b16 %v3680, %v3679
    %v3740 = vpack.c.b16 %v3682, %v3681
    %v3741 = vpack.c.b16 %v3684, %v3683
    %v3742 = vpack.c.b16 %v3686, %v3685
    %v3743 = vpack.c.b16 %v3688, %v3687
    %v3744 = vpack.c.b16 %v3690, %v3689
    %v3745 = vpack.c.b16 %v3692, %v3691
    %v3746 = vpack.c.b16 %v3694, %v3693
    %v3747 = vpack.c.b16 %v3696, %v3695
    %v3748 = vpack.c.b16 %v3698, %v3697
    %v3749 = vpack.c.b16 %v3700, %v3699
    %v3750 = vpack.c.b16 %v3702, %v3701
    %3799 = vmatprep.subr.bf16.mxu0 0
    %3800 = vmatpush1.bf16.msra.mxu0 %v3703
    %3801 = vmatprep.subr.bf16.mxu0 0
    %3802 = vmatpush1.bf16.msra.mxu0 %v3704
    %3803 = vmatprep.subr.bf16.mxu0 0
    %3804 = vmatpush1.bf16.msra.mxu0 %v3705
    %3805 = vmatprep.subr.bf16.mxu0 0
    %3806 = vmatpush1.bf16.msra.mxu0 %v3706
    %3807 = vmatprep.subr.bf16.mxu0 0
    %3808 = vmatpush1.bf16.msra.mxu0 %v3707
    %3809 = vmatprep.subr.bf16.mxu0 0
    %3810 = vmatpush1.bf16.msra.mxu0 %v3708
    %3811 = vmatprep.subr.bf16.mxu0 0
    %3812 = vmatpush1.bf16.msra.mxu0 %v3709
    %3813 = vmatprep.subr.bf16.mxu0 0
    %3814 = vmatpush1.bf16.msra.mxu0 %v3710
    %3815 = vmatprep.subr.bf16.mxu0 0
    %3816 = vmatpush1.bf16.msra.mxu0 %v3711
    %3817 = vmatprep.subr.bf16.mxu0 0
    %3818 = vmatpush1.bf16.msra.mxu0 %v3712
    %3819 = vmatprep.subr.bf16.mxu0 0
    %3820 = vmatpush1.bf16.msra.mxu0 %v3713
    %3821 = vmatprep.subr.bf16.mxu0 0
    %3822 = vmatpush1.bf16.msra.mxu0 %v3714
    %3823 = vmatprep.subr.bf16.mxu0 0
    %3824 = vmatpush1.bf16.msra.mxu0 %v3715
    %3825 = vmatprep.subr.bf16.mxu0 0
    %3826 = vmatpush1.bf16.msra.mxu0 %v3716
    %3827 = vmatprep.subr.bf16.mxu0 0
    %3828 = vmatpush1.bf16.msra.mxu0 %v3717
    %3829 = vmatprep.subr.bf16.mxu0 0
    %3830 = vmatpush1.bf16.msra.mxu0 %v3718
    %3831 = vmatprep.mubr.bf16.mxu0 %v3249
    %3832 = vmatmul.mubr.bf16.gmra.mrb[0].mxu0 %v3248
    %v3833 = vpop.f32.mrb[0].mxu0
    %v3834 = vadd.f32 %v3495, %v3833
    %v3835 = vpop.f32.mrb[0].mxu0
    %v3836 = vpop.f32.mrb[0].mxu0
    %v3837 = vadd.f32 %v3496, %v3836
    %v3838 = vpop.f32.mrb[0].mxu0
    %3839 = vmatprep.mubr.bf16.mxu0 %v3255
    %3840 = vmatmul.mubr.bf16.gmra.mrb[0].mxu0 %v3254
    %v3841 = vpop.f32.mrb[0].mxu0
    %v3842 = vadd.f32 %v3497, %v3841
    %v3843 = vpop.f32.mrb[0].mxu0
    %v3844 = vpop.f32.mrb[0].mxu0
    %v3845 = vadd.f32 %v3498, %v3844
    %v3846 = vpop.f32.mrb[0].mxu0
    %3847 = vmatprep.mubr.bf16.mxu0 %v3261
    %3848 = vmatmul.mubr.bf16.gmra.mrb[0].mxu0 %v3260
    %v3849 = vpop.f32.mrb[0].mxu0
    %v3850 = vadd.f32 %v3499, %v3849
    %v3851 = vpop.f32.mrb[0].mxu0
    %v3852 = vpop.f32.mrb[0].mxu0
    %v3853 = vadd.f32 %v3500, %v3852
    %v3854 = vpop.f32.mrb[0].mxu0
    %3855 = vmatprep.mubr.bf16.mxu0 %v3267
    %3856 = vmatmul.mubr.bf16.gmra.mrb[0].mxu0 %v3266
    %v3857 = vpop.f32.mrb[0].mxu0
    %v3858 = vadd.f32 %v3501, %v3857
    %v3859 = vpop.f32.mrb[0].mxu0
    %v3860 = vpop.f32.mrb[0].mxu0
    %v3861 = vadd.f32 %v3502, %v3860
    %v3862 = vpop.f32.mrb[0].mxu0
    %3863 = vmatprep.mubr.bf16.mxu0 %v3273
    %3864 = vmatmul.mubr.bf16.gmra.mrb[0].mxu0 %v3272
    %v3865 = vpop.f32.mrb[0].mxu0
    %v3866 = vadd.f32 %v3503, %v3865
    %v3867 = vpop.f32.mrb[0].mxu0
    %v3868 = vpop.f32.mrb[0].mxu0
    %v3869 = vadd.f32 %v3504, %v3868
    %v3870 = vpop.f32.mrb[0].mxu0
    %3871 = vmatprep.mubr.bf16.mxu0 %v3279
    %3872 = vmatmul.mubr.bf16.gmra.mrb[0].mxu0 %v3278
    %v3873 = vpop.f32.mrb[0].mxu0
    %v3874 = vadd.f32 %v3505, %v3873
    %v3875 = vpop.f32.mrb[0].mxu0
    %v3876 = vpop.f32.mrb[0].mxu0
    %v3877 = vadd.f32 %v3506, %v3876
    %v3878 = vpop.f32.mrb[0].mxu0
    %3879 = vmatprep.mubr.bf16.mxu0 %v3285
    %3880 = vmatmul.mubr.bf16.gmra.mrb[0].mxu0 %v3284
    %v3881 = vpop.f32.mrb[0].mxu0
    %v3882 = vadd.f32 %v3507, %v3881
    %v3883 = vpop.f32.mrb[0].mxu0
    %v3884 = vpop.f32.mrb[0].mxu0
    %v3885 = vadd.f32 %v3508, %v3884
    %v3886 = vpop.f32.mrb[0].mxu0
    %3887 = vmatprep.mubr.bf16.mxu0 %v3291
    %3888 = vmatmul.mubr.bf16.gmra.mrb[0].mxu0 %v3290
    %v3889 = vpop.f32.mrb[0].mxu0
    %v3890 = vadd.f32 %v3509, %v3889
    %v3891 = vpop.f32.mrb[0].mxu0
    %v3892 = vpop.f32.mrb[0].mxu0
    %v3893 = vadd.f32 %v3510, %v3892
    %v3894 = vpop.f32.mrb[0].mxu0
    %3895 = vdwg.mxu0
    %3896 = vmatprep.subr.bf16.mxu0 0
    %3897 = vmatpush1.bf16.msra.mxu0 %v3719
    %3898 = vmatprep.subr.bf16.mxu0 0
    %3899 = vmatpush1.bf16.msra.mxu0 %v3720
    %3900 = vmatprep.subr.bf16.mxu0 0
    %3901 = vmatpush1.bf16.msra.mxu0 %v3721
    %3902 = vmatprep.subr.bf16.mxu0 0
    %3903 = vmatpush1.bf16.msra.mxu0 %v3722
    %3904 = vmatprep.subr.bf16.mxu0 0
    %3905 = vmatpush1.bf16.msra.mxu0 %v3723
    %3906 = vmatprep.subr.bf16.mxu0 0
    %3907 = vmatpush1.bf16.msra.mxu0 %v3724
    %3908 = vmatprep.subr.bf16.mxu0 0
    %3909 = vmatpush1.bf16.msra.mxu0 %v3725
    %3910 = vmatprep.subr.bf16.mxu0 0
    %3911 = vmatpush1.bf16.msra.mxu0 %v3726
    %3912 = vmatprep.subr.bf16.mxu0 0
    %3913 = vmatpush1.bf16.msra.mxu0 %v3727
    %3914 = vmatprep.subr.bf16.mxu0 0
    %3915 = vmatpush1.bf16.msra.mxu0 %v3728
    %3916 = vmatprep.subr.bf16.mxu0 0
    %3917 = vmatpush1.bf16.msra.mxu0 %v3729
    %3918 = vmatprep.subr.bf16.mxu0 0
    %3919 = vmatpush1.bf16.msra.mxu0 %v3730
    %3920 = vmatprep.subr.bf16.mxu0 0
    %3921 = vmatpush1.bf16.msra.mxu0 %v3731
    %3922 = vmatprep.subr.bf16.mxu0 0
    %3923 = vmatpush1.bf16.msra.mxu0 %v3732
    %3924 = vmatprep.subr.bf16.mxu0 0
    %3925 = vmatpush1.bf16.msra.mxu0 %v3733
    %3926 = vmatprep.subr.bf16.mxu0 0
    %3927 = vmatpush1.bf16.msra.mxu0 %v3734
    %3928 = vmatprep.mubr.bf16.mxu0 %v3251
    %3929 = vmatmul.mubr.bf16.gmra.mrb[0].mxu0 %v3250
    %v3930 = vpop.f32.mrb[0].mxu0
    %v3931 = vadd.f32 %v3834, %v3930
    %v3932 = vpop.f32.mrb[0].mxu0
    %v3933 = vpop.f32.mrb[0].mxu0
    %v3934 = vadd.f32 %v3837, %v3933
    %v3935 = vpop.f32.mrb[0].mxu0
    %3936 = vmatprep.mubr.bf16.mxu0 %v3257
    %3937 = vmatmul.mubr.bf16.gmra.mrb[0].mxu0 %v3256
    %v3938 = vpop.f32.mrb[0].mxu0
    %v3939 = vadd.f32 %v3842, %v3938
    %v3940 = vpop.f32.mrb[0].mxu0
    %v3941 = vpop.f32.mrb[0].mxu0
    %v3942 = vadd.f32 %v3845, %v3941
    %v3943 = vpop.f32.mrb[0].mxu0
    %3944 = vmatprep.mubr.bf16.mxu0 %v3263
    %3945 = vmatmul.mubr.bf16.gmra.mrb[0].mxu0 %v3262
    %v3946 = vpop.f32.mrb[0].mxu0
    %v3947 = vadd.f32 %v3850, %v3946
    %v3948 = vpop.f32.mrb[0].mxu0
    %v3949 = vpop.f32.mrb[0].mxu0
    %v3950 = vadd.f32 %v3853, %v3949
    %v3951 = vpop.f32.mrb[0].mxu0
    %3952 = vmatprep.mubr.bf16.mxu0 %v3269
    %3953 = vmatmul.mubr.bf16.gmra.mrb[0].mxu0 %v3268
    %v3954 = vpop.f32.mrb[0].mxu0
    %v3955 = vadd.f32 %v3858, %v3954
    %v3956 = vpop.f32.mrb[0].mxu0
    %v3957 = vpop.f32.mrb[0].mxu0
    %v3958 = vadd.f32 %v3861, %v3957
    %v3959 = vpop.f32.mrb[0].mxu0
    %3960 = vmatprep.mubr.bf16.mxu0 %v3275
    %3961 = vmatmul.mubr.bf16.gmra.mrb[0].mxu0 %v3274
    %v3962 = vpop.f32.mrb[0].mxu0
    %v3963 = vadd.f32 %v3866, %v3962
    %v3964 = vpop.f32.mrb[0].mxu0
    %v3965 = vpop.f32.mrb[0].mxu0
    %v3966 = vadd.f32 %v3869, %v3965
    %v3967 = vpop.f32.mrb[0].mxu0
    %3968 = vmatprep.mubr.bf16.mxu0 %v3281
    %3969 = vmatmul.mubr.bf16.gmra.mrb[0].mxu0 %v3280
    %v3970 = vpop.f32.mrb[0].mxu0
    %v3971 = vadd.f32 %v3874, %v3970
    %v3972 = vpop.f32.mrb[0].mxu0
    %v3973 = vpop.f32.mrb[0].mxu0
    %v3974 = vadd.f32 %v3877, %v3973
    %v3975 = vpop.f32.mrb[0].mxu0
    %3976 = vmatprep.mubr.bf16.mxu0 %v3287
    %3977 = vmatmul.mubr.bf16.gmra.mrb[0].mxu0 %v3286
    %v3978 = vpop.f32.mrb[0].mxu0
    %v3979 = vadd.f32 %v3882, %v3978
    %v3980 = vpop.f32.mrb[0].mxu0
    %v3981 = vpop.f32.mrb[0].mxu0
    %v3982 = vadd.f32 %v3885, %v3981
    %v3983 = vpop.f32.mrb[0].mxu0
    %3984 = vmatprep.mubr.bf16.mxu0 %v3293
    %3985 = vmatmul.mubr.bf16.gmra.mrb[0].mxu0 %v3292
    %v3986 = vpop.f32.mrb[0].mxu0
    %v3987 = vadd.f32 %v3890, %v3986
    %v3988 = vpop.f32.mrb[0].mxu0
    %v3989 = vpop.f32.mrb[0].mxu0
    %v3990 = vadd.f32 %v3893, %v3989
    %v3991 = vpop.f32.mrb[0].mxu0
    %3992 = vdwg.mxu0
    %3993 = vmatprep.subr.bf16.mxu0 0
    %3994 = vmatpush1.bf16.msra.mxu0 %v3735
    %3995 = vmatprep.subr.bf16.mxu0 0
    %3996 = vmatpush1.bf16.msra.mxu0 %v3736
    %3997 = vmatprep.subr.bf16.mxu0 0
    %3998 = vmatpush1.bf16.msra.mxu0 %v3737
    %3999 = vmatprep.subr.bf16.mxu0 0
    %4000 = vmatpush1.bf16.msra.mxu0 %v3738
    %4001 = vmatprep.subr.bf16.mxu0 0
    %4002 = vmatpush1.bf16.msra.mxu0 %v3739
    %4003 = vmatprep.subr.bf16.mxu0 0
    %4004 = vmatpush1.bf16.msra.mxu0 %v3740
    %4005 = vmatprep.subr.bf16.mxu0 0
    %4006 = vmatpush1.bf16.msra.mxu0 %v3741
    %4007 = vmatprep.subr.bf16.mxu0 0
    %4008 = vmatpush1.bf16.msra.mxu0 %v3742
    %4009 = vmatprep.subr.bf16.mxu0 0
    %4010 = vmatpush1.bf16.msra.mxu0 %v3743
    %4011 = vmatprep.subr.bf16.mxu0 0
    %4012 = vmatpush1.bf16.msra.mxu0 %v3744
    %4013 = vmatprep.subr.bf16.mxu0 0
    %4014 = vmatpush1.bf16.msra.mxu0 %v3745
    %4015 = vmatprep.subr.bf16.mxu0 0
    %4016 = vmatpush1.bf16.msra.mxu0 %v3746
    %4017 = vmatprep.subr.bf16.mxu0 0
    %4018 = vmatpush1.bf16.msra.mxu0 %v3747
    %4019 = vmatprep.subr.bf16.mxu0 0
    %4020 = vmatpush1.bf16.msra.mxu0 %v3748
    %4021 = vmatprep.subr.bf16.mxu0 0
    %4022 = vmatpush1.bf16.msra.mxu0 %v3749
    %4023 = vmatprep.subr.bf16.mxu0 0
    %4024 = vmatpush1.bf16.msra.mxu0 %v3750
    %4025 = vmatprep.mubr.bf16.mxu0 %v3253
    %4026 = vmatmul.mubr.bf16.gmra.mrb[0].mxu0 %v3252
    %v4027 = vpop.f32.mrb[0].mxu0
    %v4028 = vadd.f32 %v3931, %v4027
    %v4029 = vpop.f32.mrb[0].mxu0
    %v4030 = vpop.f32.mrb[0].mxu0
    %v4031 = vadd.f32 %v3934, %v4030
    %v4032 = vpop.f32.mrb[0].mxu0
    %4033 = vmatprep.mubr.bf16.mxu0 %v3259
    %4034 = vmatmul.mubr.bf16.gmra.mrb[0].mxu0 %v3258
    %v4035 = vpop.f32.mrb[0].mxu0
    %v4036 = vadd.f32 %v3939, %v4035
    %v4037 = vpop.f32.mrb[0].mxu0
    %v4038 = vpop.f32.mrb[0].mxu0
    %v4039 = vadd.f32 %v3942, %v4038
    %v4040 = vpop.f32.mrb[0].mxu0
    %4041 = vmatprep.mubr.bf16.mxu0 %v3265
    %4042 = vmatmul.mubr.bf16.gmra.mrb[0].mxu0 %v3264
    %v4043 = vpop.f32.mrb[0].mxu0
    %v4044 = vadd.f32 %v3947, %v4043
    %v4045 = vpop.f32.mrb[0].mxu0
    %v4046 = vpop.f32.mrb[0].mxu0
    %v4047 = vadd.f32 %v3950, %v4046
    %v4048 = vpop.f32.mrb[0].mxu0
    %4049 = vmatprep.mubr.bf16.mxu0 %v3271
    %4050 = vmatmul.mubr.bf16.gmra.mrb[0].mxu0 %v3270
    %v4051 = vpop.f32.mrb[0].mxu0
    %v4052 = vadd.f32 %v3955, %v4051
    %v4053 = vpop.f32.mrb[0].mxu0
    %v4054 = vpop.f32.mrb[0].mxu0
    %v4055 = vadd.f32 %v3958, %v4054
    %v4056 = vpop.f32.mrb[0].mxu0
    %4057 = vmatprep.mubr.bf16.mxu0 %v3277
    %4058 = vmatmul.mubr.bf16.gmra.mrb[0].mxu0 %v3276
    %v4059 = vpop.f32.mrb[0].mxu0
    %v4060 = vadd.f32 %v3963, %v4059
    %v4061 = vpop.f32.mrb[0].mxu0
    %v4062 = vpop.f32.mrb[0].mxu0
    %v4063 = vadd.f32 %v3966, %v4062
    %v4064 = vpop.f32.mrb[0].mxu0
    %4065 = vmatprep.mubr.bf16.mxu0 %v3283
    %4066 = vmatmul.mubr.bf16.gmra.mrb[0].mxu0 %v3282
    %v4067 = vpop.f32.mrb[0].mxu0
    %v4068 = vadd.f32 %v3971, %v4067
    %v4069 = vpop.f32.mrb[0].mxu0
    %v4070 = vpop.f32.mrb[0].mxu0
    %v4071 = vadd.f32 %v3974, %v4070
    %v4072 = vpop.f32.mrb[0].mxu0
    %4073 = vmatprep.mubr.bf16.mxu0 %v3289
    %4074 = vmatmul.mubr.bf16.gmra.mrb[0].mxu0 %v3288
    %v4075 = vpop.f32.mrb[0].mxu0
    %v4076 = vadd.f32 %v3979, %v4075
    %v4077 = vpop.f32.mrb[0].mxu0
    %v4078 = vpop.f32.mrb[0].mxu0
    %v4079 = vadd.f32 %v3982, %v4078
    %v4080 = vpop.f32.mrb[0].mxu0
    %4081 = vmatprep.mubr.bf16.mxu0 %v3295
    %4082 = vmatmul.mubr.bf16.gmra.mrb[0].mxu0 %v3294
    %v4083 = vpop.f32.mrb[0].mxu0
    %v4084 = vadd.f32 %v3987, %v4083
    %v4085 = vpop.f32.mrb[0].mxu0
    %v4086 = vpop.f32.mrb[0].mxu0
    %v4087 = vadd.f32 %v3990, %v4086
    %v4088 = vpop.f32.mrb[0].mxu0
    %4089 = vdwg.mxu0
    %v4090 = vld [vmem:[#allocation11] sm:$0x1]
    %v4092 = vlaneseq
    %v4093 = vshrl.u32 %v4092, 7
    %v4094 = vsub.s32 0, %v4093
    %v4095 = vrot.slane %v4090, %v4094
    %v4097 = vadd.f32 %v4028, %v4095
    %v4098 = vadd.f32 %v4031, %v4095
    %v4099 = vadd.f32 %v4036, %v4095
    %v4100 = vadd.f32 %v4039, %v4095
    %v4101 = vadd.f32 %v4044, %v4095
    %v4102 = vadd.f32 %v4047, %v4095
    %v4103 = vadd.f32 %v4052, %v4095
    %v4104 = vadd.f32 %v4055, %v4095
    %v4105 = vadd.f32 %v4060, %v4095
    %v4106 = vadd.f32 %v4063, %v4095
    %v4107 = vadd.f32 %v4068, %v4095
    %v4108 = vadd.f32 %v4071, %v4095
    %v4109 = vadd.f32 %v4076, %v4095
    %v4110 = vadd.f32 %v4079, %v4095
    %v4111 = vadd.f32 %v4084, %v4095
    %v4112 = vadd.f32 %v4087, %v4095
    %v4113 = vmax.f32 %v4097, 0.0
    %v4114 = vmax.f32 %v4098, 0.0
    %v4115 = vmax.f32 %v4099, 0.0
    %v4116 = vmax.f32 %v4100, 0.0
    %v4117 = vmax.f32 %v4101, 0.0
    %v4118 = vmax.f32 %v4102, 0.0
    %v4119 = vmax.f32 %v4103, 0.0
    %v4120 = vmax.f32 %v4104, 0.0
    %v4121 = vmax.f32 %v4105, 0.0
    %v4122 = vmax.f32 %v4106, 0.0
    %v4123 = vmax.f32 %v4107, 0.0
    %v4124 = vmax.f32 %v4108, 0.0
    %v4125 = vmax.f32 %v4109, 0.0
    %v4126 = vmax.f32 %v4110, 0.0
    %v4127 = vmax.f32 %v4111, 0.0
    %v4128 = vmax.f32 %v4112, 0.0
    %v4129 = vpack.c.bf16 %v4114, %v4113
    %v4130 = vpack.c.bf16 %v4116, %v4115
    %v4131 = vpack.c.bf16 %v4118, %v4117
    %v4132 = vpack.c.bf16 %v4120, %v4119
    %v4133 = vpack.c.bf16 %v4122, %v4121
    %v4134 = vpack.c.bf16 %v4124, %v4123
    %v4135 = vpack.c.bf16 %v4126, %v4125
    %v4136 = vpack.c.bf16 %v4128, %v4127
    %v4137 = vld [vmem:[#allocation13] sm:$0xf]
    %v4138 = vld [vmem:[#allocation13 + $0x4] sm:$0xf]
    %v4139 = vld [vmem:[#allocation13 + $0x8] sm:$0xf]
    %v4140 = vld [vmem:[#allocation13 + $0xc] sm:$0xf]
    %v4141 = vld [vmem:[#allocation13 + $0x10] sm:$0xf]
    %v4142 = vld [vmem:[#allocation13 + $0x14] sm:$0xf]
    %v4143 = vld [vmem:[#allocation13 + $0x18] sm:$0xf]
    %v4144 = vld [vmem:[#allocation13 + $0x1c] sm:$0xf]
    %v4145 = vld [vmem:[#allocation13 + $0x20] sm:$0xf]
    %v4146 = vld [vmem:[#allocation13 + $0x24] sm:$0xf]
    %v4147 = vld [vmem:[#allocation13 + $0x28] sm:$0xf]
    %v4148 = vld [vmem:[#allocation13 + $0x2c] sm:$0xf]
    %v4149 = vld [vmem:[#allocation13 + $0x30] sm:$0xf]
    %v4150 = vld [vmem:[#allocation13 + $0x34] sm:$0xf]
    %v4151 = vld [vmem:[#allocation13 + $0x38] sm:$0xf]
    %v4152 = vld [vmem:[#allocation13 + $0x3c] sm:$0xf]
    %v4153 = vld [vmem:[#allocation14] sm:$0x1]
    %v4155 = vlaneseq
    %v4156 = vshrl.u32 %v4155, 7
    %v4157 = vsub.s32 0, %v4156
    %v4158 = vrot.slane %v4153, %v4157
    %v4176 = vunpack.c.l.b16 %v4137
    %v4177 = vunpack.c.l.b16 %v4138
    %v4178 = vunpack.c.l.b16 %v4139
    %v4179 = vunpack.c.l.b16 %v4140
    %v4180 = vunpack.c.l.b16 %v4141
    %v4181 = vunpack.c.l.b16 %v4142
    %v4182 = vunpack.c.l.b16 %v4143
    %v4183 = vunpack.c.l.b16 %v4144
    %v4184 = vunpack.c.l.b16 %v4145
    %v4185 = vunpack.c.l.b16 %v4146
    %v4186 = vunpack.c.l.b16 %v4147
    %v4187 = vunpack.c.l.b16 %v4148
    %v4188 = vunpack.c.l.b16 %v4149
    %v4189 = vunpack.c.l.b16 %v4150
    %v4190 = vunpack.c.l.b16 %v4151
    %v4191 = vunpack.c.l.b16 %v4152
    %v4192 = vpack.c.b16 %v4177, %v4176
    %v4193 = vpack.c.b16 %v4179, %v4178
    %v4194 = vpack.c.b16 %v4181, %v4180
    %v4195 = vpack.c.b16 %v4183, %v4182
    %v4196 = vpack.c.b16 %v4185, %v4184
    %v4197 = vpack.c.b16 %v4187, %v4186
    %v4198 = vpack.c.b16 %v4189, %v4188
    %v4199 = vpack.c.b16 %v4191, %v4190
    %4208 = vmatprep.subr.bf16.mxu0 0
    %4209 = vmatpush1.bf16.msra.mxu0 %v4192
    %4210 = vmatprep.subr.bf16.mxu0 0
    %4211 = vmatpush1.bf16.msra.mxu0 %v4193
    %4212 = vmatprep.subr.bf16.mxu0 0
    %4213 = vmatpush1.bf16.msra.mxu0 %v4194
    %4214 = vmatprep.subr.bf16.mxu0 0
    %4215 = vmatpush1.bf16.msra.mxu0 %v4195
    %4216 = vmatprep.subr.bf16.mxu0 0
    %4217 = vmatpush1.bf16.msra.mxu0 %v4196
    %4218 = vmatprep.subr.bf16.mxu0 0
    %4219 = vmatpush1.bf16.msra.mxu0 %v4197
    %4220 = vmatprep.subr.bf16.mxu0 0
    %4221 = vmatpush1.bf16.msra.mxu0 %v4198
    %4222 = vmatprep.subr.bf16.mxu0 0
    %4223 = vmatpush1.bf16.msra.mxu0 %v4199
    %4224 = vmatprep.subr.bf16.mxu0 0
    %4225 = vmatpush1.bf16.msra.mxu0 0
    %4226 = vmatprep.subr.bf16.mxu0 0
    %4227 = vmatpush1.bf16.msra.mxu0 0
    %4228 = vmatprep.subr.bf16.mxu0 0
    %4229 = vmatpush1.bf16.msra.mxu0 0
    %4230 = vmatprep.subr.bf16.mxu0 0
    %4231 = vmatpush1.bf16.msra.mxu0 0
    %4232 = vmatprep.subr.bf16.mxu0 0
    %4233 = vmatpush1.bf16.msra.mxu0 0
    %4234 = vmatprep.subr.bf16.mxu0 0
    %4235 = vmatpush1.bf16.msra.mxu0 0
    %4236 = vmatprep.subr.bf16.mxu0 0
    %4237 = vmatpush1.bf16.msra.mxu0 0
    %4238 = vmatprep.subr.bf16.mxu0 0
    %4239 = vmatpush1.bf16.msra.mxu0 0
    %4240 = vmatprep.mubr.bf16.mxu0 0
    %4241 = vmatmul.mubr.bf16.gmra.mrb[0].mxu0 %v4129
    %v4242 = vpop.f32.mrb[0].mxu0
    %v4243 = vadd.f32 %v4158, %v4242
    %v4244 = vpop.f32.mrb[0].mxu0
    %v4245 = vpop.f32.mrb[0].mxu0
    %v4246 = vadd.f32 %v4158, %v4245
    %v4247 = vpop.f32.mrb[0].mxu0
    %4248 = vmatprep.mubr.bf16.mxu0 0
    %4249 = vmatmul.mubr.bf16.gmra.mrb[0].mxu0 %v4130
    %v4250 = vpop.f32.mrb[0].mxu0
    %v4251 = vadd.f32 %v4158, %v4250
    %v4252 = vpop.f32.mrb[0].mxu0
    %v4253 = vpop.f32.mrb[0].mxu0
    %v4254 = vadd.f32 %v4158, %v4253
    %v4255 = vpop.f32.mrb[0].mxu0
    %4256 = vmatprep.mubr.bf16.mxu0 0
    %4257 = vmatmul.mubr.bf16.gmra.mrb[0].mxu0 %v4131
    %v4258 = vpop.f32.mrb[0].mxu0
    %v4259 = vadd.f32 %v4158, %v4258
    %v4260 = vpop.f32.mrb[0].mxu0
    %v4261 = vpop.f32.mrb[0].mxu0
    %v4262 = vadd.f32 %v4158, %v4261
    %v4263 = vpop.f32.mrb[0].mxu0
    %4264 = vmatprep.mubr.bf16.mxu0 0
    %4265 = vmatmul.mubr.bf16.gmra.mrb[0].mxu0 %v4132
    %v4266 = vpop.f32.mrb[0].mxu0
    %v4267 = vadd.f32 %v4158, %v4266
    %v4268 = vpop.f32.mrb[0].mxu0
    %v4269 = vpop.f32.mrb[0].mxu0
    %v4270 = vadd.f32 %v4158, %v4269
    %v4271 = vpop.f32.mrb[0].mxu0
    %4272 = vmatprep.mubr.bf16.mxu0 0
    %4273 = vmatmul.mubr.bf16.gmra.mrb[0].mxu0 %v4133
    %v4274 = vpop.f32.mrb[0].mxu0
    %v4275 = vadd.f32 %v4158, %v4274
    %v4276 = vpop.f32.mrb[0].mxu0
    %v4277 = vpop.f32.mrb[0].mxu0
    %v4278 = vadd.f32 %v4158, %v4277
    %v4279 = vpop.f32.mrb[0].mxu0
    %4280 = vmatprep.mubr.bf16.mxu0 0
    %4281 = vmatmul.mubr.bf16.gmra.mrb[0].mxu0 %v4134
    %v4282 = vpop.f32.mrb[0].mxu0
    %v4283 = vadd.f32 %v4158, %v4282
    %v4284 = vpop.f32.mrb[0].mxu0
    %v4285 = vpop.f32.mrb[0].mxu0
    %v4286 = vadd.f32 %v4158, %v4285
    %v4287 = vpop.f32.mrb[0].mxu0
    %4288 = vmatprep.mubr.bf16.mxu0 0
    %4289 = vmatmul.mubr.bf16.gmra.mrb[0].mxu0 %v4135
    %v4290 = vpop.f32.mrb[0].mxu0
    %v4291 = vadd.f32 %v4158, %v4290
    %v4292 = vpop.f32.mrb[0].mxu0
    %v4293 = vpop.f32.mrb[0].mxu0
    %v4294 = vadd.f32 %v4158, %v4293
    %v4295 = vpop.f32.mrb[0].mxu0
    %4296 = vmatprep.mubr.bf16.mxu0 0
    %4297 = vmatmul.mubr.bf16.gmra.mrb[0].mxu0 %v4136
    %v4298 = vpop.f32.mrb[0].mxu0
    %v4299 = vadd.f32 %v4158, %v4298
    %v4300 = vpop.f32.mrb[0].mxu0
    %v4301 = vpop.f32.mrb[0].mxu0
    %v4302 = vadd.f32 %v4158, %v4301
    %v4303 = vpop.f32.mrb[0].mxu0
    %4304 = vdwg.mxu0
    %v4305 = vxor.u32 %v4243, 2147483648
    %v4306 = vxor.u32 %v4246, 2147483648
    %v4307 = vxor.u32 %v4251, 2147483648
    %v4308 = vxor.u32 %v4254, 2147483648
    %v4309 = vxor.u32 %v4259, 2147483648
    %v4310 = vxor.u32 %v4262, 2147483648
    %v4311 = vxor.u32 %v4267, 2147483648
    %v4312 = vxor.u32 %v4270, 2147483648
    %v4313 = vxor.u32 %v4275, 2147483648
    %v4314 = vxor.u32 %v4278, 2147483648
    %v4315 = vxor.u32 %v4283, 2147483648
    %v4316 = vxor.u32 %v4286, 2147483648
    %v4317 = vxor.u32 %v4291, 2147483648
    %v4318 = vxor.u32 %v4294, 2147483648
    %v4319 = vxor.u32 %v4299, 2147483648
    %v4320 = vxor.u32 %v4302, 2147483648
    %v4321 = vmul.f32 %v4305, 1.442695
    %v4322 = vpow.pop %v4321
    %v4323 = vmul.f32 %v4306, 1.442695
    %v4324 = vpow.pop %v4323
    %v4325 = vmul.f32 %v4307, 1.442695
    %v4326 = vpow.pop %v4325
    %v4327 = vmul.f32 %v4308, 1.442695
    %v4328 = vpow.pop %v4327
    %v4329 = vmul.f32 %v4309, 1.442695
    %v4330 = vpow.pop %v4329
    %v4331 = vmul.f32 %v4310, 1.442695
    %v4332 = vpow.pop %v4331
    %v4333 = vmul.f32 %v4311, 1.442695
    %v4334 = vpow.pop %v4333
    %v4335 = vmul.f32 %v4312, 1.442695
    %v4336 = vpow.pop %v4335
    %v4337 = vmul.f32 %v4313, 1.442695
    %v4338 = vpow.pop %v4337
    %v4339 = vmul.f32 %v4314, 1.442695
    %v4340 = vpow.pop %v4339
    %v4341 = vmul.f32 %v4315, 1.442695
    %v4342 = vpow.pop %v4341
    %v4343 = vmul.f32 %v4316, 1.442695
    %v4344 = vpow.pop %v4343
    %v4345 = vmul.f32 %v4317, 1.442695
    %v4346 = vpow.pop %v4345
    %v4347 = vmul.f32 %v4318, 1.442695
    %v4348 = vpow.pop %v4347
    %v4349 = vmul.f32 %v4319, 1.442695
    %v4350 = vpow.pop %v4349
    %v4351 = vmul.f32 %v4320, 1.442695
    %v4352 = vpow.pop %v4351
    %v4353 = vadd.f32 %v4322, 1.0
    %v4354 = vadd.f32 %v4324, 1.0
    %v4355 = vadd.f32 %v4326, 1.0
    %v4356 = vadd.f32 %v4328, 1.0
    %v4357 = vadd.f32 %v4330, 1.0
    %v4358 = vadd.f32 %v4332, 1.0
    %v4359 = vadd.f32 %v4334, 1.0
    %v4360 = vadd.f32 %v4336, 1.0
    %v4361 = vadd.f32 %v4338, 1.0
    %v4362 = vadd.f32 %v4340, 1.0
    %v4363 = vadd.f32 %v4342, 1.0
    %v4364 = vadd.f32 %v4344, 1.0
    %v4365 = vadd.f32 %v4346, 1.0
    %v4366 = vadd.f32 %v4348, 1.0
    %v4367 = vadd.f32 %v4350, 1.0
    %v4368 = vadd.f32 %v4352, 1.0
    %v4369 = vrcp.pop %v4353
    %v4370 = vmul.f32 1.0, %v4369
    %v4371 = vrcp.pop %v4354
    %v4372 = vmul.f32 1.0, %v4371
    %v4373 = vrcp.pop %v4355
    %v4374 = vmul.f32 1.0, %v4373
    %v4375 = vrcp.pop %v4356
    %v4376 = vmul.f32 1.0, %v4375
    %v4377 = vrcp.pop %v4357
    %v4378 = vmul.f32 1.0, %v4377
    %v4379 = vrcp.pop %v4358
    %v4380 = vmul.f32 1.0, %v4379
    %v4381 = vrcp.pop %v4359
    %v4382 = vmul.f32 1.0, %v4381
    %v4383 = vrcp.pop %v4360
    %v4384 = vmul.f32 1.0, %v4383
    %v4385 = vrcp.pop %v4361
    %v4386 = vmul.f32 1.0, %v4385
    %v4387 = vrcp.pop %v4362
    %v4388 = vmul.f32 1.0, %v4387
    %v4389 = vrcp.pop %v4363
    %v4390 = vmul.f32 1.0, %v4389
    %v4391 = vrcp.pop %v4364
    %v4392 = vmul.f32 1.0, %v4391
    %v4393 = vrcp.pop %v4365
    %v4394 = vmul.f32 1.0, %v4393
    %v4395 = vrcp.pop %v4366
    %v4396 = vmul.f32 1.0, %v4395
    %v4397 = vrcp.pop %v4367
    %v4398 = vmul.f32 1.0, %v4397
    %v4399 = vrcp.pop %v4368
    %v4400 = vmul.f32 1.0, %v4399
    %4401 = vst [vmem:[#allocation16] sm:$0xff] %v4370
    %4402 = vst [vmem:[#allocation16 + $0x8] sm:$0xff] %v4372
    %4403 = vst [vmem:[#allocation16 + $0x10] sm:$0xff] %v4374
    %4404 = vst [vmem:[#allocation16 + $0x18] sm:$0xff] %v4376
    %4405 = vst [vmem:[#allocation16 + $0x20] sm:$0xff] %v4378
    %4406 = vst [vmem:[#allocation16 + $0x28] sm:$0xff] %v4380
    %4407 = vst [vmem:[#allocation16 + $0x30] sm:$0xff] %v4382
    %4408 = vst [vmem:[#allocation16 + $0x38] sm:$0xff] %v4384
    %4409 = vst [vmem:[#allocation16 + $0x40] sm:$0xff] %v4386
    %4410 = vst [vmem:[#allocation16 + $0x48] sm:$0xff] %v4388
    %4411 = vst [vmem:[#allocation16 + $0x50] sm:$0xff] %v4390
    %4412 = vst [vmem:[#allocation16 + $0x58] sm:$0xff] %v4392
    %4413 = vst [vmem:[#allocation16 + $0x60] sm:$0xff] %v4394
    %4414 = vst [vmem:[#allocation16 + $0x68] sm:$0xff] %v4396
    %4415 = vst [vmem:[#allocation16 + $0x70] sm:$0xff] %v4398
    %4416 = vst [vmem:[#allocation16 + $0x78] sm:$0xff] %v4400
    // Predicated region
    $region70: #{tpu_custom_call.1} parent=1 // pred_check
      _
    $region71: #{tpu_custom_call.1} parent=1 // pred_check_branch
      %4418 = sbr.rel (0) target = $region73
    $region72: #{tpu_custom_call.1} parent=1 // pred_region
      %s4420 = ssub.s32 2048, 2048
      %4421 = vsyncadd [#allocation4], %s4420
      %s4422 = sshll.u32 [#allocation16], 4
      %s4423 = int_to_ptr.vmem [resolvable:$true] %s4422
      %4428 = dma.vmem_to_hbm [thread:$0]  %s4423, 2048, %s9, [#allocation4], 128, 128, 8
    $region73: #{tpu_custom_call.1} parent=1 // pred_fallthru
      _
    // Predicated region
    $region74: #{tpu_custom_call.1} parent=1 // pred_check
      _
    $region75: #{tpu_custom_call.1} parent=1 // pred_check_branch
      %4430 = sbr.rel (0) target = $region77
    $region76: #{tpu_custom_call.1} parent=1 // pred_region
      %4431 = dma.done [#allocation4], 2048
    $region77: #{tpu_custom_call.1} parent=1 // pred_fallthru
      _
    %4432 = vsyncpa [#allocation3], 1
    %4433 = vsyncpa [#allocation6], 1
    %4434 = vsyncpa [#allocation9], 1
    %4435 = vsyncpa [#allocation12], 1
    %4436 = vsyncpa [#allocation15], 1
    %4437 = vsyncpa [#allocation4], 1

</llo_original>
